<compile_context>
chip_gen: v7x
topology: tpu7x:2x2x1
jax: 0.10.0
libtpu: 0.0.40
codegen_flags: <defaults>
</compile_context>

<pallas_src>
import functools
import math

import jax
import jax.numpy as jnp
from jax.experimental import pallas as pl
from jax.experimental.pallas import tpu as pltpu

BN_EPS = 1e-5


def _sigmoid(z):
    return 1.0 / (1.0 + jnp.exp(-z))


# ----------------------------------------------------------------------------
# Fused BasicBlock kernel.  One grid step = `bs` batch samples, all lane-dense.
# ----------------------------------------------------------------------------
def _basic_block_kernel(x_ref, m10_ref, m11_ref, m12_ref,
                        m20_ref, m21_ref, m22_ref, b1_ref, b2_ref,
                        gcw_ref, exp_ref, gh_ref, o_ref, pad_ref, *, C, W):
    bs, H, WC = x_ref.shape

    # Halo rows of the row-padded scratch.  Only these two rows need zeroing (the interior
    # is fully overwritten per conv); re-zeroed every step so this is megacore-safe.
    zrow = jnp.zeros((1, WC), jnp.float32)
    pad_ref[0:1, :] = zrow
    pad_ref[H + 1:H + 2, :] = zrow

    def conv3x3(src, m0_ref, m1_ref, m2_ref, bias_ref):
        # out[h] = xpad[h] @ M0 + xpad[h+1] @ M1 + xpad[h+2] @ M2 + bias
        # (kx taps + zero column padding live inside the band matrices).
        pad_ref[1:H + 1, :] = src
        return (jnp.dot(pad_ref[0:H, :], m0_ref[...],
                        preferred_element_type=jnp.float32)
                + jnp.dot(pad_ref[1:H + 1, :], m1_ref[...],
                          preferred_element_type=jnp.float32)
                + jnp.dot(pad_ref[2:H + 2, :], m2_ref[...],
                          preferred_element_type=jnp.float32)
                + bias_ref[...])

    inv_hw, inv_hw1 = 1.0 / (H * W), 1.0 / (H * W - 1)
    inv_hc, inv_hc1 = 1.0 / (H * C), 1.0 / (H * C - 1)
    inv_wc, inv_wc1 = 1.0 / (W * C), 1.0 / (W * C - 1)

    for s in range(bs):
        x = x_ref[s]                                                 # (H, W*C) lane-dense

        # ---- conv1 -> bn1 (scale folded into weights) -> relu ----
        a = jnp.maximum(conv3x3(x, m10_ref, m11_ref, m12_ref, b1_ref), 0.0)
        # ---- conv2 -> bn2 ----
        y = conv3x3(a, m20_ref, m21_ref, m22_ref, b2_ref)            # (H, W*C)
        ysq = y * y

        # ---- MCA pooling stats (per-sample avg + unbiased std along C / H / W) ----
        colsums = jnp.concatenate(
            [jnp.sum(y, axis=0, keepdims=True),
             jnp.sum(ysq, axis=0, keepdims=True)], axis=0)           # (2, W*C)
        col3 = colsums.reshape(2, W, C)
        c_s = jnp.sum(col3, axis=1)                                  # (2, C)  sum / sumsq
        w_s = jnp.sum(col3, axis=2)                                  # (2, W)  sum / sumsq
        c_mean = c_s[0:1] * inv_hw
        c_var = (c_s[1:2] - c_s[0:1] * c_mean) * inv_hw1
        w_mean = w_s[0:1] * inv_hc
        w_var = (w_s[1:2] - w_s[0:1] * w_mean) * inv_hc1
        mean_cw = jnp.concatenate([c_mean, w_mean], axis=1)          # (1, C+W)
        std_cw = jnp.sqrt(jnp.maximum(
            jnp.concatenate([c_var, w_var], axis=1), 0.0))

        rowsums = jnp.sum(jnp.concatenate([y, ysq], axis=0),
                          axis=1, keepdims=True)                     # (2H, 1)
        h_mean = rowsums[0:H] * inv_wc
        h_var = (rowsums[H:2 * H] - rowsums[0:H] * h_mean) * inv_wc1
        h_std = jnp.sqrt(jnp.maximum(h_var, 0.0))

        # ---- gates (pool mixing + 1D gate convs folded into fused matrices) ----
        stats_cw = jnp.concatenate([mean_cw, std_cw], axis=1)        # (1, 2C+2W)
        g_cw = _sigmoid(jnp.dot(stats_cw, gcw_ref[...],
                                preferred_element_type=jnp.float32))  # (1, C+W) = [gC | gW]
        g_row = jnp.dot(g_cw, exp_ref[...],
                        preferred_element_type=jnp.float32)           # (1, W*C): gC[c]+gW[w]
        stats_h = jnp.concatenate([h_mean, h_std], axis=0)            # (2H, 1)
        g_h = _sigmoid(jnp.dot(gh_ref[...], stats_h,
                               preferred_element_type=jnp.float32))   # (H, 1)
        gate = (g_row + g_h) * (1.0 / 3.0)                            # (H, W*C)

        # ---- apply gate, residual add, final relu; lane-dense store ----
        o_ref[s] = jnp.maximum(y * gate + x, 0.0)


# ----------------------------------------------------------------------------
# Host-side (params-only) preprocessing helpers.
# ----------------------------------------------------------------------------
def _mca_channel_kernel_size(c):
    lambd, gamma = 1.5, 1
    temp = round(abs((math.log2(c) - gamma) / lambd))
    k = temp if temp % 2 else temp - 1
    return max(k, 1)


def _conv1d_band(conv_w, length):
    # M[i, l] = conv_w[l - i + pad]  ('same' zero-padded 1D conv):  out_col = M @ s_col
    k = conv_w.shape[0]
    pad = (k - 1) // 2
    i = jnp.arange(length)[:, None]
    l = jnp.arange(length)[None, :]
    d = l - i + pad
    valid = (d >= 0) & (d < k)
    return jnp.where(valid, conv_w[jnp.clip(d, 0, k - 1)], 0.0).astype(jnp.float32)


def _gate_matrices(mix_w, conv_w, length, transpose):
    # fold  s = (0.5 + sigmoid(w0))*avg + (0.5 + sigmoid(w1))*std  and the 1D gate conv
    # into two (L, L) matrices so the gate is just matmul + sigmoid in-kernel.
    m = _conv1d_band(conv_w, length)
    if transpose:
        m = m.T      # row-vector form:  gate = sigmoid(s_row @ M.T)
    sw = jax.nn.sigmoid(mix_w)
    return (0.5 + sw[0]) * m, (0.5 + sw[1]) * m


def _conv_band_matrices(w_hwio, scale, W, C):
    """Fold a 3x3 'same' conv (+ per-output-channel BN scale) into three (W*C, W*C)
    banded matrices, one per ky row tap, acting on lane-dense (H, W*C) rows."""
    wf = (w_hwio * scale[None, None, None, :]).astype(jnp.float32)   # (3, 3, Ci, Co)
    lane = jnp.arange(W * C)
    wi = (lane // C)[:, None]
    ci = (lane % C)[:, None]
    wo = (lane // C)[None, :]
    co = (lane % C)[None, :]
    kx = wi - wo + 1                        # input col = output col + (kx - 1)
    valid = (kx >= 0) & (kx <= 2)
    kxc = jnp.clip(kx, 0, 2)
    return [jnp.where(valid, wf[ky, kxc, ci, co], 0.0) for ky in range(3)]


def _num_grid_steps(batch):
    """2-way parallel grid on v7x (2 TensorCores/chip); fold the whole batch into a single
    grid step on single-TC chips (v5e/v6e) to avoid per-step pipeline overhead."""
    try:
        kind = jax.devices()[0].device_kind.lower()
    except Exception:
        kind = ""
    cores = 2 if "v7" in kind else 1
    steps = max(1, min(batch, cores))
    while batch % steps:
        steps -= 1
    return steps


# ----------------------------------------------------------------------------
# Full BasicBlock forward (NHWC).
# ----------------------------------------------------------------------------
def basic_block_forward(x, params, num_steps=None):
    B, H, W, C = x.shape
    WC = W * C
    assert params['conv1_w'].shape[-1] == C   # stride=1 / downsample=None => in_c == out_c

    # fold BN (eval mode) scale into the conv band matrices; keep only the bias add
    s1 = params['bn1_gamma'] / jnp.sqrt(params['bn1_var'] + BN_EPS)
    b1 = params['bn1_beta'] - params['bn1_mean'] * s1
    s2 = params['bn2_gamma'] / jnp.sqrt(params['bn2_var'] + BN_EPS)
    b2 = params['bn2_beta'] - params['bn2_mean'] * s2
    m10, m11, m12 = _conv_band_matrices(params['conv1_w'], s1, W, C)
    m20, m21, m22 = _conv_band_matrices(params['conv2_w'], s2, W, C)
    b1_row = jnp.tile(b1, W).reshape(1, WC).astype(jnp.float32)
    b2_row = jnp.tile(b2, W).reshape(1, WC).astype(jnp.float32)

    # MCA gate matrices, fused:
    #   [c_mean|w_mean|c_std|w_std] (1,2C+2W) @ gcw (2C+2W, C+W) -> pre-sigmoid [gC | gW]
    #   [gC|gW] (1,C+W) @ expand (C+W, W*C)                       -> per-lane gC[c] + gW[w]
    #   gh_mat (H, 2H) @ [h_mean; h_std] (2H, 1)                   -> pre-sigmoid gH
    mca, mcb = _gate_matrices(params['mca_c_w'], params['mca_c_conv'], C, True)    # (C, C)
    mwa, mwb = _gate_matrices(params['mca_w_w'], params['mca_w_conv'], W, True)    # (W, W)
    mha, mhb = _gate_matrices(params['mca_h_w'], params['mca_h_conv'], H, False)   # (H, H)
    zcw = jnp.zeros((C, W), jnp.float32)
    zwc = jnp.zeros((W, C), jnp.float32)
    gcw_mat = jnp.concatenate([
        jnp.concatenate([mca, zcw], axis=1),
        jnp.concatenate([zwc, mwa], axis=1),
        jnp.concatenate([mcb, zcw], axis=1),
        jnp.concatenate([zwc, mwb], axis=1)], axis=0)                # (2C+2W, C+W)
    lane = jnp.arange(WC)
    exp_c = (jnp.arange(C)[:, None] == (lane % C)[None, :]).astype(jnp.float32)
    exp_w = (jnp.arange(W)[:, None] == (lane // C)[None, :]).astype(jnp.float32)
    expand = jnp.concatenate([exp_c, exp_w], axis=0)                 # (C+W, W*C)
    gh_mat = jnp.concatenate([mha, mhb], axis=1)                     # (H, 2H)

    if num_steps is None:
        num_steps = _num_grid_steps(B)
    bs = B // num_steps

    def full(shape):
        return pl.BlockSpec(shape, lambda i, _n=len(shape): (0,) * _n)

    out = pl.pallas_call(
        functools.partial(_basic_block_kernel, C=C, W=W),
        out_shape=jax.ShapeDtypeStruct((B, H, WC), jnp.float32),
        grid=(num_steps,),
        in_specs=[
            pl.BlockSpec((bs, H, WC), lambda i: (i, 0, 0)),    # x, lane-dense (also residual)
            full((WC, WC)), full((WC, WC)), full((WC, WC)),    # conv1 band matrices (BN1 folded)
            full((WC, WC)), full((WC, WC)), full((WC, WC)),    # conv2 band matrices (BN2 folded)
            full((1, WC)), full((1, WC)),                      # bn1 / bn2 bias rows
            full((2 * (C + W), C + W)),                        # fused C/W gate matrix
            full((C + W, WC)),                                 # gate expansion matrix
            full((H, 2 * H)),                                  # fused H gate matrix
        ],
        out_specs=pl.BlockSpec((bs, H, WC), lambda i: (i, 0, 0)),
        scratch_shapes=[pltpu.VMEM((H + 2, WC), jnp.float32)],     # row-padded activation
        compiler_params=pltpu.CompilerParams(dimension_semantics=("parallel",)),
    )(x.reshape(B, H, WC), m10, m11, m12, m20, m21, m22,
      b1_row, b2_row, gcw_mat, expand, gh_mat)
    return out.reshape(B, H, W, C)


# ----------------------------------------------------------------------------
# Deterministic parameter init (shapes from the module's __init__).
# ----------------------------------------------------------------------------
def init_params(key, c_in, c_out):
    ks = jax.random.split(key, 16)
    k_c = _mca_channel_kernel_size(c_out)
    return dict(
        conv1_w=jax.random.normal(ks[0], (3, 3, c_in, c_out), jnp.float32) * 0.1,
        bn1_gamma=jax.random.uniform(ks[1], (c_out,), jnp.float32, 0.8, 1.2),
        bn1_beta=jax.random.normal(ks[2], (c_out,), jnp.float32) * 0.05,
        bn1_mean=jax.random.normal(ks[3], (c_out,), jnp.float32) * 0.05,
        bn1_var=jax.random.uniform(ks[4], (c_out,), jnp.float32, 0.8, 1.2),
        conv2_w=jax.random.normal(ks[5], (3, 3, c_out, c_out), jnp.float32) * 0.1,
        bn2_gamma=jax.random.uniform(ks[6], (c_out,), jnp.float32, 0.8, 1.2),
        bn2_beta=jax.random.normal(ks[7], (c_out,), jnp.float32) * 0.05,
        bn2_mean=jax.random.normal(ks[8], (c_out,), jnp.float32) * 0.05,
        bn2_var=jax.random.uniform(ks[9], (c_out,), jnp.float32, 0.8, 1.2),
        mca_h_w=jax.random.uniform(ks[10], (2,), jnp.float32),
        mca_h_conv=jax.random.normal(ks[11], (3,), jnp.float32) * 0.5,
        mca_w_w=jax.random.uniform(ks[12], (2,), jnp.float32),
        mca_w_conv=jax.random.normal(ks[13], (3,), jnp.float32) * 0.5,
        mca_c_w=jax.random.uniform(ks[14], (2,), jnp.float32),
        mca_c_conv=jax.random.normal(ks[15], (k_c,), jnp.float32) * 0.5,
    )


# ----------------------------------------------------------------------------
# Pure-JAX reference (same semantics) for a sanity check.
# ----------------------------------------------------------------------------
def _mca_gate(avg, std, w2, conv_w):
    w = jax.nn.sigmoid(w2)
    s = 0.5 * (avg + std) + w[0] * avg + w[1] * std
    k = conv_w.shape[0]
    if k == 1:
        c = s * conv_w[0]
    else:
        pad = (k - 1) // 2
        sp = jnp.pad(s, ((0, 0), (pad, pad)))
        L = s.shape[1]
        c = sum(conv_w[j] * sp[:, j:j + L] for j in range(k))
    return jax.nn.sigmoid(c)


def reference_forward(x, params):
    def conv_bn(inp, w, gamma, beta, mean, var, relu):
        y = jax.lax.conv_general_dilated(
            inp, w, window_strides=(1, 1), padding='SAME',
            dimension_numbers=('NHWC', 'HWIO', 'NHWC'),
            precision=jax.lax.Precision.HIGHEST)
        scale = gamma / jnp.sqrt(var + BN_EPS)
        y = y * scale + (beta - mean * scale)
        return jnp.maximum(y, 0.0) if relu else y

    a = conv_bn(x, params['conv1_w'], params['bn1_gamma'], params['bn1_beta'],
                params['bn1_mean'], params['bn1_var'], True)
    y = conv_bn(a, params['conv2_w'], params['bn2_gamma'], params['bn2_beta'],
                params['bn2_mean'], params['bn2_var'], False)
    B, H, W, C = y.shape

    def stats(v, axes, n):
        m = jnp.mean(v, axis=axes)
        s = jnp.sqrt(jnp.sum((v - jnp.mean(v, axis=axes, keepdims=True)) ** 2,
                             axis=axes) / (n - 1))
        return m, s

    c_mean, c_std = stats(y, (1, 2), H * W)
    h_mean, h_std = stats(y, (2, 3), W * C)
    w_mean, w_std = stats(y, (1, 3), H * C)
    gc = _mca_gate(c_mean, c_std, params['mca_c_w'], params['mca_c_conv'])
    gh = _mca_gate(h_mean, h_std, params['mca_h_w'], params['mca_h_conv'])
    gw = _mca_gate(w_mean, w_std, params['mca_w_w'], params['mca_w_conv'])
    att = y * (gc[:, None, None, :] + gh[:, :, None, None] + gw[:, None, :, None]) / 3.0
    return jnp.maximum(att + x, 0.0)


if __name__ == "__main__":
    B, H, W, C = 2, 16, 16, 8          # NHWC (== NCHW [2, 8, 16, 16] in the PyTorch module)
    key = jax.random.PRNGKey(0)
    kx, kp = jax.random.split(key)
    x = jax.random.normal(kx, (B, H, W, C), jnp.float32)
    params = init_params(kp, C, C)

    out = jax.jit(basic_block_forward)(x, params)
    out = jax.block_until_ready(out)
    assert out.shape == (B, H, W, C)

    ref = reference_forward(x, params)
    max_err = float(jnp.max(jnp.abs(out - ref)))
    # DEFAULT matmul precision (bf16 MXU operands) vs HIGHEST-precision reference conv.
    assert jnp.allclose(out, ref, atol=2e-2, rtol=2e-2), max_err

    print("KERNEL_OK")
</pallas_src>

<mosaic_0001>
module attributes {stable_mosaic.version = 11 : i64} {
  func.func @_basic_block_kernel(%arg0: i32, %arg1: memref<2x16x128xf32, #tpu.memory_space<vmem>>, %arg2: memref<128x128xf32, #tpu.memory_space<vmem>>, %arg3: memref<128x128xf32, #tpu.memory_space<vmem>>, %arg4: memref<128x128xf32, #tpu.memory_space<vmem>>, %arg5: memref<128x128xf32, #tpu.memory_space<vmem>>, %arg6: memref<128x128xf32, #tpu.memory_space<vmem>>, %arg7: memref<128x128xf32, #tpu.memory_space<vmem>>, %arg8: memref<1x128xf32, #tpu.memory_space<vmem>>, %arg9: memref<1x128xf32, #tpu.memory_space<vmem>>, %arg10: memref<48x24xf32, #tpu.memory_space<vmem>>, %arg11: memref<24x128xf32, #tpu.memory_space<vmem>>, %arg12: memref<16x32xf32, #tpu.memory_space<vmem>>, %arg13: memref<2x16x128xf32, #tpu.memory_space<vmem>>, %arg14: memref<18x128xf32, #tpu.memory_space<vmem>>) attributes {dimension_semantics = [#tpu.dimension_semantics<parallel>], iteration_bounds = array<i64: 1>, scalar_prefetch = 0 : i64, scratch_operands = 1 : i64, tpu.core_type = #tpu.core_type<tc>, window_params = [{transform_indices = @transform_0, window_bounds = array<i64: 2, 16, 128>}, {pipeline_mode = #tpu.pipeline_mode<synchronous>, transform_indices = @transform_1, window_bounds = array<i64: 128, 128>}, {pipeline_mode = #tpu.pipeline_mode<synchronous>, transform_indices = @transform_2, window_bounds = array<i64: 128, 128>}, {pipeline_mode = #tpu.pipeline_mode<synchronous>, transform_indices = @transform_3, window_bounds = array<i64: 128, 128>}, {pipeline_mode = #tpu.pipeline_mode<synchronous>, transform_indices = @transform_4, window_bounds = array<i64: 128, 128>}, {pipeline_mode = #tpu.pipeline_mode<synchronous>, transform_indices = @transform_5, window_bounds = array<i64: 128, 128>}, {pipeline_mode = #tpu.pipeline_mode<synchronous>, transform_indices = @transform_6, window_bounds = array<i64: 128, 128>}, {pipeline_mode = #tpu.pipeline_mode<synchronous>, transform_indices = @transform_7, window_bounds = array<i64: 1, 128>}, {pipeline_mode = #tpu.pipeline_mode<synchronous>, transform_indices = @transform_8, window_bounds = array<i64: 1, 128>}, {pipeline_mode = #tpu.pipeline_mode<synchronous>, transform_indices = @transform_9, window_bounds = array<i64: 48, 24>}, {pipeline_mode = #tpu.pipeline_mode<synchronous>, transform_indices = @transform_10, window_bounds = array<i64: 24, 128>}, {pipeline_mode = #tpu.pipeline_mode<synchronous>, transform_indices = @transform_11, window_bounds = array<i64: 16, 32>}, {transform_indices = @transform_12, window_bounds = array<i64: 2, 16, 128>}]} {
    %cst = arith.constant 0.000000e+00 : f32
    %0 = vector.broadcast %cst : f32 to vector<1x128xf32>
    %c0 = arith.constant 0 : index
    %c0_0 = arith.constant 0 : index
    %1 = vector.load %arg14[%c0, %c0_0] : memref<18x128xf32, #tpu.memory_space<vmem>>, vector<1x128xf32>
    tpu.vector_store %arg14[%c0, %c0_0], %0 {strides = array<i32>} : memref<18x128xf32, #tpu.memory_space<vmem>>, vector<1x128xf32>,
    %c17 = arith.constant 17 : index
    %c0_1 = arith.constant 0 : index
    %2 = vector.load %arg14[%c17, %c0_1] : memref<18x128xf32, #tpu.memory_space<vmem>>, vector<1x128xf32>
    tpu.vector_store %arg14[%c17, %c0_1], %0 {strides = array<i32>} : memref<18x128xf32, #tpu.memory_space<vmem>>, vector<1x128xf32>,
    %c0_2 = arith.constant 0 : index
    %c0_3 = arith.constant 0 : index
    %c0_4 = arith.constant 0 : index
    %3 = vector.load %arg1[%c0_2, %c0_3, %c0_4] : memref<2x16x128xf32, #tpu.memory_space<vmem>>, vector<1x16x128xf32>
    %4 = vector.shape_cast %3 : vector<1x16x128xf32> to vector<16x128xf32>
    %c1 = arith.constant 1 : index
    %c0_5 = arith.constant 0 : index
    %5 = vector.load %arg14[%c1, %c0_5] : memref<18x128xf32, #tpu.memory_space<vmem>>, vector<16x128xf32>
    tpu.vector_store %arg14[%c1, %c0_5], %4 {strides = array<i32>} : memref<18x128xf32, #tpu.memory_space<vmem>>, vector<16x128xf32>,
    %c0_6 = arith.constant 0 : index
    %c0_7 = arith.constant 0 : index
    %6 = vector.load %arg14[%c0_6, %c0_7] : memref<18x128xf32, #tpu.memory_space<vmem>>, vector<16x128xf32>
    %c0_8 = arith.constant 0 : index
    %c0_9 = arith.constant 0 : index
    %7 = vector.load %arg2[%c0_8, %c0_9] : memref<128x128xf32, #tpu.memory_space<vmem>>, vector<128x128xf32>
    %cst_10 = arith.constant dense<0.000000e+00> : vector<16x128xf32>
    %8 = tpu.matmul %6, %7, %cst_10 {dimension_numbers = #tpu.dot_dimension_numbers<[1], [0], [0], [1], [0, 0, 1, 1], [], []>} : vector<16x128xf32>, vector<128x128xf32>, vector<16x128xf32> -> vector<16x128xf32>
    %c1_11 = arith.constant 1 : index
    %c0_12 = arith.constant 0 : index
    %9 = vector.load %arg14[%c1_11, %c0_12] : memref<18x128xf32, #tpu.memory_space<vmem>>, vector<16x128xf32>
    %c0_13 = arith.constant 0 : index
    %c0_14 = arith.constant 0 : index
    %10 = vector.load %arg3[%c0_13, %c0_14] : memref<128x128xf32, #tpu.memory_space<vmem>>, vector<128x128xf32>
    %cst_15 = arith.constant dense<0.000000e+00> : vector<16x128xf32>
    %11 = tpu.matmul %9, %10, %cst_15 {dimension_numbers = #tpu.dot_dimension_numbers<[1], [0], [0], [1], [0, 0, 1, 1], [], []>} : vector<16x128xf32>, vector<128x128xf32>, vector<16x128xf32> -> vector<16x128xf32>
    %12 = arith.addf %8, %11 : vector<16x128xf32>
    %c2 = arith.constant 2 : index
    %c0_16 = arith.constant 0 : index
    %13 = vector.load %arg14[%c2, %c0_16] : memref<18x128xf32, #tpu.memory_space<vmem>>, vector<16x128xf32>
    %c0_17 = arith.constant 0 : index
    %c0_18 = arith.constant 0 : index
    %14 = vector.load %arg4[%c0_17, %c0_18] : memref<128x128xf32, #tpu.memory_space<vmem>>, vector<128x128xf32>
    %cst_19 = arith.constant dense<0.000000e+00> : vector<16x128xf32>
    %15 = tpu.matmul %13, %14, %cst_19 {dimension_numbers = #tpu.dot_dimension_numbers<[1], [0], [0], [1], [0, 0, 1, 1], [], []>} : vector<16x128xf32>, vector<128x128xf32>, vector<16x128xf32> -> vector<16x128xf32>
    %16 = arith.addf %12, %15 : vector<16x128xf32>
    %c0_20 = arith.constant 0 : index
    %c0_21 = arith.constant 0 : index
    %17 = vector.load %arg8[%c0_20, %c0_21] : memref<1x128xf32, #tpu.memory_space<vmem>>, vector<1x128xf32>
    %18 = vector.broadcast %17 : vector<1x128xf32> to vector<16x128xf32>
    %19 = arith.addf %16, %18 : vector<16x128xf32>
    %cst_22 = arith.constant 0.000000e+00 : f32
    %20 = vector.broadcast %cst_22 : f32 to vector<16x128xf32>
    %21 = arith.maximumf %19, %20 : vector<16x128xf32>
    %c1_23 = arith.constant 1 : index
    %c0_24 = arith.constant 0 : index
    %22 = vector.load %arg14[%c1_23, %c0_24] : memref<18x128xf32, #tpu.memory_space<vmem>>, vector<16x128xf32>
    tpu.vector_store %arg14[%c1_23, %c0_24], %21 {strides = array<i32>} : memref<18x128xf32, #tpu.memory_space<vmem>>, vector<16x128xf32>,
    %c0_25 = arith.constant 0 : index
    %c0_26 = arith.constant 0 : index
    %23 = vector.load %arg14[%c0_25, %c0_26] : memref<18x128xf32, #tpu.memory_space<vmem>>, vector<16x128xf32>
    %c0_27 = arith.constant 0 : index
    %c0_28 = arith.constant 0 : index
    %24 = vector.load %arg5[%c0_27, %c0_28] : memref<128x128xf32, #tpu.memory_space<vmem>>, vector<128x128xf32>
    %cst_29 = arith.constant dense<0.000000e+00> : vector<16x128xf32>
    %25 = tpu.matmul %23, %24, %cst_29 {dimension_numbers = #tpu.dot_dimension_numbers<[1], [0], [0], [1], [0, 0, 1, 1], [], []>} : vector<16x128xf32>, vector<128x128xf32>, vector<16x128xf32> -> vector<16x128xf32>
    %c1_30 = arith.constant 1 : index
    %c0_31 = arith.constant 0 : index
    %26 = vector.load %arg14[%c1_30, %c0_31] : memref<18x128xf32, #tpu.memory_space<vmem>>, vector<16x128xf32>
    %c0_32 = arith.constant 0 : index
    %c0_33 = arith.constant 0 : index
    %27 = vector.load %arg6[%c0_32, %c0_33] : memref<128x128xf32, #tpu.memory_space<vmem>>, vector<128x128xf32>
    %cst_34 = arith.constant dense<0.000000e+00> : vector<16x128xf32>
    %28 = tpu.matmul %26, %27, %cst_34 {dimension_numbers = #tpu.dot_dimension_numbers<[1], [0], [0], [1], [0, 0, 1, 1], [], []>} : vector<16x128xf32>, vector<128x128xf32>, vector<16x128xf32> -> vector<16x128xf32>
    %29 = arith.addf %25, %28 : vector<16x128xf32>
    %c2_35 = arith.constant 2 : index
    %c0_36 = arith.constant 0 : index
    %30 = vector.load %arg14[%c2_35, %c0_36] : memref<18x128xf32, #tpu.memory_space<vmem>>, vector<16x128xf32>
    %c0_37 = arith.constant 0 : index
    %c0_38 = arith.constant 0 : index
    %31 = vector.load %arg7[%c0_37, %c0_38] : memref<128x128xf32, #tpu.memory_space<vmem>>, vector<128x128xf32>
    %cst_39 = arith.constant dense<0.000000e+00> : vector<16x128xf32>
    %32 = tpu.matmul %30, %31, %cst_39 {dimension_numbers = #tpu.dot_dimension_numbers<[1], [0], [0], [1], [0, 0, 1, 1], [], []>} : vector<16x128xf32>, vector<128x128xf32>, vector<16x128xf32> -> vector<16x128xf32>
    %33 = arith.addf %29, %32 : vector<16x128xf32>
    %c0_40 = arith.constant 0 : index
    %c0_41 = arith.constant 0 : index
    %34 = vector.load %arg9[%c0_40, %c0_41] : memref<1x128xf32, #tpu.memory_space<vmem>>, vector<1x128xf32>
    %35 = vector.broadcast %34 : vector<1x128xf32> to vector<16x128xf32>
    %36 = arith.addf %33, %35 : vector<16x128xf32>
    %37 = arith.mulf %36, %36 : vector<16x128xf32>
    %cst_42 = arith.constant dense<0.000000e+00> : vector<128xf32>
    %38 = vector.multi_reduction <add>, %36, %cst_42 [0] : vector<16x128xf32> to vector<128xf32>
    %39 = vector.shape_cast %38 : vector<128xf32> to vector<1x128xf32>
    %cst_43 = arith.constant dense<0.000000e+00> : vector<128xf32>
    %40 = vector.multi_reduction <add>, %37, %cst_43 [0] : vector<16x128xf32> to vector<128xf32>
    %41 = vector.shape_cast %40 : vector<128xf32> to vector<1x128xf32>
    %42 = tpu.concatenate %39, %41 in 0 : vector<1x128xf32>, vector<1x128xf32> -> vector<2x128xf32>
    %43 = vector.shape_cast %42 : vector<2x128xf32> to vector<2x16x8xf32>
    %cst_44 = arith.constant dense<0.000000e+00> : vector<2x8xf32>
    %44 = vector.multi_reduction <add>, %43, %cst_44 [1] : vector<2x16x8xf32> to vector<2x8xf32>
    %cst_45 = arith.constant dense<0.000000e+00> : vector<2x16xf32>
    %45 = vector.multi_reduction <add>, %43, %cst_45 [2] : vector<2x16x8xf32> to vector<2x16xf32>
    %46 = vector.extract_strided_slice %44 {offsets = [0, 0], sizes = [1, 8], strides = [1, 1]} : vector<2x8xf32> to vector<1x8xf32>
    %cst_46 = arith.constant 3.906250e-03 : f32
    %47 = vector.broadcast %cst_46 : f32 to vector<1x8xf32>
    %48 = arith.mulf %46, %47 : vector<1x8xf32>
    %49 = vector.extract_strided_slice %44 {offsets = [1, 0], sizes = [1, 8], strides = [1, 1]} : vector<2x8xf32> to vector<1x8xf32>
    %50 = vector.extract_strided_slice %44 {offsets = [0, 0], sizes = [1, 8], strides = [1, 1]} : vector<2x8xf32> to vector<1x8xf32>
    %51 = arith.mulf %50, %48 : vector<1x8xf32>
    %52 = arith.subf %49, %51 : vector<1x8xf32>
    %cst_47 = arith.constant 0.00392156886 : f32
    %53 = vector.broadcast %cst_47 : f32 to vector<1x8xf32>
    %54 = arith.mulf %52, %53 : vector<1x8xf32>
    %55 = vector.extract_strided_slice %45 {offsets = [0, 0], sizes = [1, 16], strides = [1, 1]} : vector<2x16xf32> to vector<1x16xf32>
    %cst_48 = arith.constant 7.812500e-03 : f32
    %56 = vector.broadcast %cst_48 : f32 to vector<1x16xf32>
    %57 = arith.mulf %55, %56 : vector<1x16xf32>
    %58 = vector.extract_strided_slice %45 {offsets = [1, 0], sizes = [1, 16], strides = [1, 1]} : vector<2x16xf32> to vector<1x16xf32>
    %59 = vector.extract_strided_slice %45 {offsets = [0, 0], sizes = [1, 16], strides = [1, 1]} : vector<2x16xf32> to vector<1x16xf32>
    %60 = arith.mulf %59, %57 : vector<1x16xf32>
    %61 = arith.subf %58, %60 : vector<1x16xf32>
    %cst_49 = arith.constant 0.00787401571 : f32
    %62 = vector.broadcast %cst_49 : f32 to vector<1x16xf32>
    %63 = arith.mulf %61, %62 : vector<1x16xf32>
    %64 = tpu.concatenate %48, %57 in 1 : vector<1x8xf32>, vector<1x16xf32> -> vector<1x24xf32>
    %65 = tpu.concatenate %54, %63 in 1 : vector<1x8xf32>, vector<1x16xf32> -> vector<1x24xf32>
    %cst_50 = arith.constant 0.000000e+00 : f32
    %66 = vector.broadcast %cst_50 : f32 to vector<1x24xf32>
    %67 = arith.maximumf %65, %66 : vector<1x24xf32>
    %68 = math.sqrt %67 : vector<1x24xf32>
    %69 = tpu.concatenate %36, %37 in 0 : vector<16x128xf32>, vector<16x128xf32> -> vector<32x128xf32>
    %cst_51 = arith.constant dense<0.000000e+00> : vector<32xf32>
    %70 = vector.multi_reduction <add>, %69, %cst_51 [1] : vector<32x128xf32> to vector<32xf32>
    %71 = vector.shape_cast %70 : vector<32xf32> to vector<32x1xf32>
    %72 = vector.extract_strided_slice %71 {offsets = [0, 0], sizes = [16, 1], strides = [1, 1]} : vector<32x1xf32> to vector<16x1xf32>
    %cst_52 = arith.constant 7.812500e-03 : f32
    %73 = vector.broadcast %cst_52 : f32 to vector<16x1xf32>
    %74 = arith.mulf %72, %73 : vector<16x1xf32>
    %75 = vector.extract_strided_slice %71 {offsets = [16, 0], sizes = [16, 1], strides = [1, 1]} : vector<32x1xf32> to vector<16x1xf32>
    %76 = vector.extract_strided_slice %71 {offsets = [0, 0], sizes = [16, 1], strides = [1, 1]} : vector<32x1xf32> to vector<16x1xf32>
    %77 = arith.mulf %76, %74 : vector<16x1xf32>
    %78 = arith.subf %75, %77 : vector<16x1xf32>
    %cst_53 = arith.constant 0.00787401571 : f32
    %79 = vector.broadcast %cst_53 : f32 to vector<16x1xf32>
    %80 = arith.mulf %78, %79 : vector<16x1xf32>
    %cst_54 = arith.constant 0.000000e+00 : f32
    %81 = vector.broadcast %cst_54 : f32 to vector<16x1xf32>
    %82 = arith.maximumf %80, %81 : vector<16x1xf32>
    %83 = math.sqrt %82 : vector<16x1xf32>
    %84 = tpu.concatenate %64, %68 in 1 : vector<1x24xf32>, vector<1x24xf32> -> vector<1x48xf32>
    %c0_55 = arith.constant 0 : index
    %c0_56 = arith.constant 0 : index
    %85 = vector.load %arg10[%c0_55, %c0_56] : memref<48x24xf32, #tpu.memory_space<vmem>>, vector<48x24xf32>
    %cst_57 = arith.constant dense<0.000000e+00> : vector<1x24xf32>
    %86 = tpu.matmul %84, %85, %cst_57 {dimension_numbers = #tpu.dot_dimension_numbers<[1], [0], [0], [1], [0, 0, 1, 1], [], []>} : vector<1x48xf32>, vector<48x24xf32>, vector<1x24xf32> -> vector<1x24xf32>
    %cst_58 = arith.constant 0.000000e+00 : f32
    %87 = vector.broadcast %cst_58 : f32 to vector<1x24xf32>
    %88 = arith.subf %87, %86 : vector<1x24xf32>
    %89 = math.exp %88 : vector<1x24xf32>
    %cst_59 = arith.constant 1.000000e+00 : f32
    %90 = vector.broadcast %cst_59 : f32 to vector<1x24xf32>
    %91 = arith.addf %90, %89 : vector<1x24xf32>
    %cst_60 = arith.constant 1.000000e+00 : f32
    %92 = vector.broadcast %cst_60 : f32 to vector<1x24xf32>
    %93 = arith.divf %92, %91 : vector<1x24xf32>
    %c0_61 = arith.constant 0 : index
    %c0_62 = arith.constant 0 : index
    %94 = vector.load %arg11[%c0_61, %c0_62] : memref<24x128xf32, #tpu.memory_space<vmem>>, vector<24x128xf32>
    %cst_63 = arith.constant dense<0.000000e+00> : vector<1x128xf32>
    %95 = tpu.matmul %93, %94, %cst_63 {dimension_numbers = #tpu.dot_dimension_numbers<[1], [0], [0], [1], [0, 0, 1, 1], [], []>} : vector<1x24xf32>, vector<24x128xf32>, vector<1x128xf32> -> vector<1x128xf32>
    %96 = tpu.concatenate %74, %83 in 0 : vector<16x1xf32>, vector<16x1xf32> -> vector<32x1xf32>
    %c0_64 = arith.constant 0 : index
    %c0_65 = arith.constant 0 : index
    %97 = vector.load %arg12[%c0_64, %c0_65] : memref<16x32xf32, #tpu.memory_space<vmem>>, vector<16x32xf32>
    %cst_66 = arith.constant dense<0.000000e+00> : vector<16x1xf32>
    %98 = tpu.matmul %97, %96, %cst_66 {dimension_numbers = #tpu.dot_dimension_numbers<[1], [0], [0], [1], [0, 0, 1, 1], [], []>} : vector<16x32xf32>, vector<32x1xf32>, vector<16x1xf32> -> vector<16x1xf32>
    %cst_67 = arith.constant 0.000000e+00 : f32
    %99 = vector.broadcast %cst_67 : f32 to vector<16x1xf32>
    %100 = arith.subf %99, %98 : vector<16x1xf32>
    %101 = math.exp %100 : vector<16x1xf32>
    %cst_68 = arith.constant 1.000000e+00 : f32
    %102 = vector.broadcast %cst_68 : f32 to vector<16x1xf32>
    %103 = arith.addf %102, %101 : vector<16x1xf32>
    %cst_69 = arith.constant 1.000000e+00 : f32
    %104 = vector.broadcast %cst_69 : f32 to vector<16x1xf32>
    %105 = arith.divf %104, %103 : vector<16x1xf32>
    %106 = vector.broadcast %95 : vector<1x128xf32> to vector<16x128xf32>
    %107 = vector.broadcast %105 : vector<16x1xf32> to vector<16x128xf32>
    %108 = arith.addf %106, %107 : vector<16x128xf32>
    %cst_70 = arith.constant 0.333333343 : f32
    %109 = vector.broadcast %cst_70 : f32 to vector<16x128xf32>
    %110 = arith.mulf %108, %109 : vector<16x128xf32>
    %111 = arith.mulf %36, %110 : vector<16x128xf32>
    %112 = arith.addf %111, %4 : vector<16x128xf32>
    %cst_71 = arith.constant 0.000000e+00 : f32
    %113 = vector.broadcast %cst_71 : f32 to vector<16x128xf32>
    %114 = arith.maximumf %112, %113 : vector<16x128xf32>
    %c0_72 = arith.constant 0 : index
    %c0_73 = arith.constant 0 : index
    %c0_74 = arith.constant 0 : index
    %115 = vector.load %arg13[%c0_72, %c0_73, %c0_74] : memref<2x16x128xf32, #tpu.memory_space<vmem>>, vector<1x16x128xf32>
    %116 = vector.shape_cast %115 : vector<1x16x128xf32> to vector<16x128xf32>
    %117 = vector.shape_cast %114 : vector<16x128xf32> to vector<1x16x128xf32>
    tpu.vector_store %arg13[%c0_72, %c0_73, %c0_74], %117 {strides = array<i32>} : memref<2x16x128xf32, #tpu.memory_space<vmem>>, vector<1x16x128xf32>,
    %c1_75 = arith.constant 1 : index
    %c0_76 = arith.constant 0 : index
    %c0_77 = arith.constant 0 : index
    %118 = vector.load %arg1[%c1_75, %c0_76, %c0_77] : memref<2x16x128xf32, #tpu.memory_space<vmem>>, vector<1x16x128xf32>
    %119 = vector.shape_cast %118 : vector<1x16x128xf32> to vector<16x128xf32>
    %c1_78 = arith.constant 1 : index
    %c0_79 = arith.constant 0 : index
    %120 = vector.load %arg14[%c1_78, %c0_79] : memref<18x128xf32, #tpu.memory_space<vmem>>, vector<16x128xf32>
    tpu.vector_store %arg14[%c1_78, %c0_79], %119 {strides = array<i32>} : memref<18x128xf32, #tpu.memory_space<vmem>>, vector<16x128xf32>,
    %c0_80 = arith.constant 0 : index
    %c0_81 = arith.constant 0 : index
    %121 = vector.load %arg14[%c0_80, %c0_81] : memref<18x128xf32, #tpu.memory_space<vmem>>, vector<16x128xf32>
    %c0_82 = arith.constant 0 : index
    %c0_83 = arith.constant 0 : index
    %122 = vector.load %arg2[%c0_82, %c0_83] : memref<128x128xf32, #tpu.memory_space<vmem>>, vector<128x128xf32>
    %cst_84 = arith.constant dense<0.000000e+00> : vector<16x128xf32>
    %123 = tpu.matmul %121, %122, %cst_84 {dimension_numbers = #tpu.dot_dimension_numbers<[1], [0], [0], [1], [0, 0, 1, 1], [], []>} : vector<16x128xf32>, vector<128x128xf32>, vector<16x128xf32> -> vector<16x128xf32>
    %c1_85 = arith.constant 1 : index
    %c0_86 = arith.constant 0 : index
    %124 = vector.load %arg14[%c1_85, %c0_86] : memref<18x128xf32, #tpu.memory_space<vmem>>, vector<16x128xf32>
    %c0_87 = arith.constant 0 : index
    %c0_88 = arith.constant 0 : index
    %125 = vector.load %arg3[%c0_87, %c0_88] : memref<128x128xf32, #tpu.memory_space<vmem>>, vector<128x128xf32>
    %cst_89 = arith.constant dense<0.000000e+00> : vector<16x128xf32>
    %126 = tpu.matmul %124, %125, %cst_89 {dimension_numbers = #tpu.dot_dimension_numbers<[1], [0], [0], [1], [0, 0, 1, 1], [], []>} : vector<16x128xf32>, vector<128x128xf32>, vector<16x128xf32> -> vector<16x128xf32>
    %127 = arith.addf %123, %126 : vector<16x128xf32>
    %c2_90 = arith.constant 2 : index
    %c0_91 = arith.constant 0 : index
    %128 = vector.load %arg14[%c2_90, %c0_91] : memref<18x128xf32, #tpu.memory_space<vmem>>, vector<16x128xf32>
    %c0_92 = arith.constant 0 : index
    %c0_93 = arith.constant 0 : index
    %129 = vector.load %arg4[%c0_92, %c0_93] : memref<128x128xf32, #tpu.memory_space<vmem>>, vector<128x128xf32>
    %cst_94 = arith.constant dense<0.000000e+00> : vector<16x128xf32>
    %130 = tpu.matmul %128, %129, %cst_94 {dimension_numbers = #tpu.dot_dimension_numbers<[1], [0], [0], [1], [0, 0, 1, 1], [], []>} : vector<16x128xf32>, vector<128x128xf32>, vector<16x128xf32> -> vector<16x128xf32>
    %131 = arith.addf %127, %130 : vector<16x128xf32>
    %c0_95 = arith.constant 0 : index
    %c0_96 = arith.constant 0 : index
    %132 = vector.load %arg8[%c0_95, %c0_96] : memref<1x128xf32, #tpu.memory_space<vmem>>, vector<1x128xf32>
    %133 = vector.broadcast %132 : vector<1x128xf32> to vector<16x128xf32>
    %134 = arith.addf %131, %133 : vector<16x128xf32>
    %cst_97 = arith.constant 0.000000e+00 : f32
    %135 = vector.broadcast %cst_97 : f32 to vector<16x128xf32>
    %136 = arith.maximumf %134, %135 : vector<16x128xf32>
    %c1_98 = arith.constant 1 : index
    %c0_99 = arith.constant 0 : index
    %137 = vector.load %arg14[%c1_98, %c0_99] : memref<18x128xf32, #tpu.memory_space<vmem>>, vector<16x128xf32>
    tpu.vector_store %arg14[%c1_98, %c0_99], %136 {strides = array<i32>} : memref<18x128xf32, #tpu.memory_space<vmem>>, vector<16x128xf32>,
    %c0_100 = arith.constant 0 : index
    %c0_101 = arith.constant 0 : index
    %138 = vector.load %arg14[%c0_100, %c0_101] : memref<18x128xf32, #tpu.memory_space<vmem>>, vector<16x128xf32>
    %c0_102 = arith.constant 0 : index
    %c0_103 = arith.constant 0 : index
    %139 = vector.load %arg5[%c0_102, %c0_103] : memref<128x128xf32, #tpu.memory_space<vmem>>, vector<128x128xf32>
    %cst_104 = arith.constant dense<0.000000e+00> : vector<16x128xf32>
    %140 = tpu.matmul %138, %139, %cst_104 {dimension_numbers = #tpu.dot_dimension_numbers<[1], [0], [0], [1], [0, 0, 1, 1], [], []>} : vector<16x128xf32>, vector<128x128xf32>, vector<16x128xf32> -> vector<16x128xf32>
    %c1_105 = arith.constant 1 : index
    %c0_106 = arith.constant 0 : index
    %141 = vector.load %arg14[%c1_105, %c0_106] : memref<18x128xf32, #tpu.memory_space<vmem>>, vector<16x128xf32>
    %c0_107 = arith.constant 0 : index
    %c0_108 = arith.constant 0 : index
    %142 = vector.load %arg6[%c0_107, %c0_108] : memref<128x128xf32, #tpu.memory_space<vmem>>, vector<128x128xf32>
    %cst_109 = arith.constant dense<0.000000e+00> : vector<16x128xf32>
    %143 = tpu.matmul %141, %142, %cst_109 {dimension_numbers = #tpu.dot_dimension_numbers<[1], [0], [0], [1], [0, 0, 1, 1], [], []>} : vector<16x128xf32>, vector<128x128xf32>, vector<16x128xf32> -> vector<16x128xf32>
    %144 = arith.addf %140, %143 : vector<16x128xf32>
    %c2_110 = arith.constant 2 : index
    %c0_111 = arith.constant 0 : index
    %145 = vector.load %arg14[%c2_110, %c0_111] : memref<18x128xf32, #tpu.memory_space<vmem>>, vector<16x128xf32>
    %c0_112 = arith.constant 0 : index
    %c0_113 = arith.constant 0 : index
    %146 = vector.load %arg7[%c0_112, %c0_113] : memref<128x128xf32, #tpu.memory_space<vmem>>, vector<128x128xf32>
    %cst_114 = arith.constant dense<0.000000e+00> : vector<16x128xf32>
    %147 = tpu.matmul %145, %146, %cst_114 {dimension_numbers = #tpu.dot_dimension_numbers<[1], [0], [0], [1], [0, 0, 1, 1], [], []>} : vector<16x128xf32>, vector<128x128xf32>, vector<16x128xf32> -> vector<16x128xf32>
    %148 = arith.addf %144, %147 : vector<16x128xf32>
    %c0_115 = arith.constant 0 : index
    %c0_116 = arith.constant 0 : index
    %149 = vector.load %arg9[%c0_115, %c0_116] : memref<1x128xf32, #tpu.memory_space<vmem>>, vector<1x128xf32>
    %150 = vector.broadcast %149 : vector<1x128xf32> to vector<16x128xf32>
    %151 = arith.addf %148, %150 : vector<16x128xf32>
    %152 = arith.mulf %151, %151 : vector<16x128xf32>
    %cst_117 = arith.constant dense<0.000000e+00> : vector<128xf32>
    %153 = vector.multi_reduction <add>, %151, %cst_117 [0] : vector<16x128xf32> to vector<128xf32>
    %154 = vector.shape_cast %153 : vector<128xf32> to vector<1x128xf32>
    %cst_118 = arith.constant dense<0.000000e+00> : vector<128xf32>
    %155 = vector.multi_reduction <add>, %152, %cst_118 [0] : vector<16x128xf32> to vector<128xf32>
    %156 = vector.shape_cast %155 : vector<128xf32> to vector<1x128xf32>
    %157 = tpu.concatenate %154, %156 in 0 : vector<1x128xf32>, vector<1x128xf32> -> vector<2x128xf32>
    %158 = vector.shape_cast %157 : vector<2x128xf32> to vector<2x16x8xf32>
    %cst_119 = arith.constant dense<0.000000e+00> : vector<2x8xf32>
    %159 = vector.multi_reduction <add>, %158, %cst_119 [1] : vector<2x16x8xf32> to vector<2x8xf32>
    %cst_120 = arith.constant dense<0.000000e+00> : vector<2x16xf32>
    %160 = vector.multi_reduction <add>, %158, %cst_120 [2] : vector<2x16x8xf32> to vector<2x16xf32>
    %161 = vector.extract_strided_slice %159 {offsets = [0, 0], sizes = [1, 8], strides = [1, 1]} : vector<2x8xf32> to vector<1x8xf32>
    %cst_121 = arith.constant 3.906250e-03 : f32
    %162 = vector.broadcast %cst_121 : f32 to vector<1x8xf32>
    %163 = arith.mulf %161, %162 : vector<1x8xf32>
    %164 = vector.extract_strided_slice %159 {offsets = [1, 0], sizes = [1, 8], strides = [1, 1]} : vector<2x8xf32> to vector<1x8xf32>
    %165 = vector.extract_strided_slice %159 {offsets = [0, 0], sizes = [1, 8], strides = [1, 1]} : vector<2x8xf32> to vector<1x8xf32>
    %166 = arith.mulf %165, %163 : vector<1x8xf32>
    %167 = arith.subf %164, %166 : vector<1x8xf32>
    %cst_122 = arith.constant 0.00392156886 : f32
    %168 = vector.broadcast %cst_122 : f32 to vector<1x8xf32>
    %169 = arith.mulf %167, %168 : vector<1x8xf32>
    %170 = vector.extract_strided_slice %160 {offsets = [0, 0], sizes = [1, 16], strides = [1, 1]} : vector<2x16xf32> to vector<1x16xf32>
    %cst_123 = arith.constant 7.812500e-03 : f32
    %171 = vector.broadcast %cst_123 : f32 to vector<1x16xf32>
    %172 = arith.mulf %170, %171 : vector<1x16xf32>
    %173 = vector.extract_strided_slice %160 {offsets = [1, 0], sizes = [1, 16], strides = [1, 1]} : vector<2x16xf32> to vector<1x16xf32>
    %174 = vector.extract_strided_slice %160 {offsets = [0, 0], sizes = [1, 16], strides = [1, 1]} : vector<2x16xf32> to vector<1x16xf32>
    %175 = arith.mulf %174, %172 : vector<1x16xf32>
    %176 = arith.subf %173, %175 : vector<1x16xf32>
    %cst_124 = arith.constant 0.00787401571 : f32
    %177 = vector.broadcast %cst_124 : f32 to vector<1x16xf32>
    %178 = arith.mulf %176, %177 : vector<1x16xf32>
    %179 = tpu.concatenate %163, %172 in 1 : vector<1x8xf32>, vector<1x16xf32> -> vector<1x24xf32>
    %180 = tpu.concatenate %169, %178 in 1 : vector<1x8xf32>, vector<1x16xf32> -> vector<1x24xf32>
    %cst_125 = arith.constant 0.000000e+00 : f32
    %181 = vector.broadcast %cst_125 : f32 to vector<1x24xf32>
    %182 = arith.maximumf %180, %181 : vector<1x24xf32>
    %183 = math.sqrt %182 : vector<1x24xf32>
    %184 = tpu.concatenate %151, %152 in 0 : vector<16x128xf32>, vector<16x128xf32> -> vector<32x128xf32>
    %cst_126 = arith.constant dense<0.000000e+00> : vector<32xf32>
    %185 = vector.multi_reduction <add>, %184, %cst_126 [1] : vector<32x128xf32> to vector<32xf32>
    %186 = vector.shape_cast %185 : vector<32xf32> to vector<32x1xf32>
    %187 = vector.extract_strided_slice %186 {offsets = [0, 0], sizes = [16, 1], strides = [1, 1]} : vector<32x1xf32> to vector<16x1xf32>
    %cst_127 = arith.constant 7.812500e-03 : f32
    %188 = vector.broadcast %cst_127 : f32 to vector<16x1xf32>
    %189 = arith.mulf %187, %188 : vector<16x1xf32>
    %190 = vector.extract_strided_slice %186 {offsets = [16, 0], sizes = [16, 1], strides = [1, 1]} : vector<32x1xf32> to vector<16x1xf32>
    %191 = vector.extract_strided_slice %186 {offsets = [0, 0], sizes = [16, 1], strides = [1, 1]} : vector<32x1xf32> to vector<16x1xf32>
    %192 = arith.mulf %191, %189 : vector<16x1xf32>
    %193 = arith.subf %190, %192 : vector<16x1xf32>
    %cst_128 = arith.constant 0.00787401571 : f32
    %194 = vector.broadcast %cst_128 : f32 to vector<16x1xf32>
    %195 = arith.mulf %193, %194 : vector<16x1xf32>
    %cst_129 = arith.constant 0.000000e+00 : f32
    %196 = vector.broadcast %cst_129 : f32 to vector<16x1xf32>
    %197 = arith.maximumf %195, %196 : vector<16x1xf32>
    %198 = math.sqrt %197 : vector<16x1xf32>
    %199 = tpu.concatenate %179, %183 in 1 : vector<1x24xf32>, vector<1x24xf32> -> vector<1x48xf32>
    %c0_130 = arith.constant 0 : index
    %c0_131 = arith.constant 0 : index
    %200 = vector.load %arg10[%c0_130, %c0_131] : memref<48x24xf32, #tpu.memory_space<vmem>>, vector<48x24xf32>
    %cst_132 = arith.constant dense<0.000000e+00> : vector<1x24xf32>
    %201 = tpu.matmul %199, %200, %cst_132 {dimension_numbers = #tpu.dot_dimension_numbers<[1], [0], [0], [1], [0, 0, 1, 1], [], []>} : vector<1x48xf32>, vector<48x24xf32>, vector<1x24xf32> -> vector<1x24xf32>
    %cst_133 = arith.constant 0.000000e+00 : f32
    %202 = vector.broadcast %cst_133 : f32 to vector<1x24xf32>
    %203 = arith.subf %202, %201 : vector<1x24xf32>
    %204 = math.exp %203 : vector<1x24xf32>
    %cst_134 = arith.constant 1.000000e+00 : f32
    %205 = vector.broadcast %cst_134 : f32 to vector<1x24xf32>
    %206 = arith.addf %205, %204 : vector<1x24xf32>
    %cst_135 = arith.constant 1.000000e+00 : f32
    %207 = vector.broadcast %cst_135 : f32 to vector<1x24xf32>
    %208 = arith.divf %207, %206 : vector<1x24xf32>
    %c0_136 = arith.constant 0 : index
    %c0_137 = arith.constant 0 : index
    %209 = vector.load %arg11[%c0_136, %c0_137] : memref<24x128xf32, #tpu.memory_space<vmem>>, vector<24x128xf32>
    %cst_138 = arith.constant dense<0.000000e+00> : vector<1x128xf32>
    %210 = tpu.matmul %208, %209, %cst_138 {dimension_numbers = #tpu.dot_dimension_numbers<[1], [0], [0], [1], [0, 0, 1, 1], [], []>} : vector<1x24xf32>, vector<24x128xf32>, vector<1x128xf32> -> vector<1x128xf32>
    %211 = tpu.concatenate %189, %198 in 0 : vector<16x1xf32>, vector<16x1xf32> -> vector<32x1xf32>
    %c0_139 = arith.constant 0 : index
    %c0_140 = arith.constant 0 : index
    %212 = vector.load %arg12[%c0_139, %c0_140] : memref<16x32xf32, #tpu.memory_space<vmem>>, vector<16x32xf32>
    %cst_141 = arith.constant dense<0.000000e+00> : vector<16x1xf32>
    %213 = tpu.matmul %212, %211, %cst_141 {dimension_numbers = #tpu.dot_dimension_numbers<[1], [0], [0], [1], [0, 0, 1, 1], [], []>} : vector<16x32xf32>, vector<32x1xf32>, vector<16x1xf32> -> vector<16x1xf32>
    %cst_142 = arith.constant 0.000000e+00 : f32
    %214 = vector.broadcast %cst_142 : f32 to vector<16x1xf32>
    %215 = arith.subf %214, %213 : vector<16x1xf32>
    %216 = math.exp %215 : vector<16x1xf32>
    %cst_143 = arith.constant 1.000000e+00 : f32
    %217 = vector.broadcast %cst_143 : f32 to vector<16x1xf32>
    %218 = arith.addf %217, %216 : vector<16x1xf32>
    %cst_144 = arith.constant 1.000000e+00 : f32
    %219 = vector.broadcast %cst_144 : f32 to vector<16x1xf32>
    %220 = arith.divf %219, %218 : vector<16x1xf32>
    %221 = vector.broadcast %210 : vector<1x128xf32> to vector<16x128xf32>
    %222 = vector.broadcast %220 : vector<16x1xf32> to vector<16x128xf32>
    %223 = arith.addf %221, %222 : vector<16x128xf32>
    %cst_145 = arith.constant 0.333333343 : f32
    %224 = vector.broadcast %cst_145 : f32 to vector<16x128xf32>
    %225 = arith.mulf %223, %224 : vector<16x128xf32>
    %226 = arith.mulf %151, %225 : vector<16x128xf32>
    %227 = arith.addf %226, %119 : vector<16x128xf32>
    %cst_146 = arith.constant 0.000000e+00 : f32
    %228 = vector.broadcast %cst_146 : f32 to vector<16x128xf32>
    %229 = arith.maximumf %227, %228 : vector<16x128xf32>
    %c1_147 = arith.constant 1 : index
    %c0_148 = arith.constant 0 : index
    %c0_149 = arith.constant 0 : index
    %230 = vector.load %arg13[%c1_147, %c0_148, %c0_149] : memref<2x16x128xf32, #tpu.memory_space<vmem>>, vector<1x16x128xf32>
    %231 = vector.shape_cast %230 : vector<1x16x128xf32> to vector<16x128xf32>
    %232 = vector.shape_cast %229 : vector<16x128xf32> to vector<1x16x128xf32>
    tpu.vector_store %arg13[%c1_147, %c0_148, %c0_149], %232 {strides = array<i32>} : memref<2x16x128xf32, #tpu.memory_space<vmem>>, vector<1x16x128xf32>,
    return
  }
  func.func @transform_0(%arg0: i32) -> (i32, i32, i32) {
    %c0_i32 = arith.constant 0 : i32
    %c0_i32_0 = arith.constant 0 : i32
    %c0_i32_1 = arith.constant 0 : i32
    return %arg0, %c0_i32, %c0_i32_0 : i32, i32, i32
  }
  func.func @transform_1(%arg0: i32) -> (i32, i32) {
    %c0_i32 = arith.constant 0 : i32
    %c0_i32_0 = arith.constant 0 : i32
    %c0_i32_1 = arith.constant 0 : i32
    return %c0_i32, %c0_i32_0 : i32, i32
  }
  func.func @transform_2(%arg0: i32) -> (i32, i32) {
    %c0_i32 = arith.constant 0 : i32
    %c0_i32_0 = arith.constant 0 : i32
    %c0_i32_1 = arith.constant 0 : i32
    return %c0_i32, %c0_i32_0 : i32, i32
  }
  func.func @transform_3(%arg0: i32) -> (i32, i32) {
    %c0_i32 = arith.constant 0 : i32
    %c0_i32_0 = arith.constant 0 : i32
    %c0_i32_1 = arith.constant 0 : i32
    return %c0_i32, %c0_i32_0 : i32, i32
  }
  func.func @transform_4(%arg0: i32) -> (i32, i32) {
    %c0_i32 = arith.constant 0 : i32
    %c0_i32_0 = arith.constant 0 : i32
    %c0_i32_1 = arith.constant 0 : i32
    return %c0_i32, %c0_i32_0 : i32, i32
  }
  func.func @transform_5(%arg0: i32) -> (i32, i32) {
    %c0_i32 = arith.constant 0 : i32
    %c0_i32_0 = arith.constant 0 : i32
    %c0_i32_1 = arith.constant 0 : i32
    return %c0_i32, %c0_i32_0 : i32, i32
  }
  func.func @transform_6(%arg0: i32) -> (i32, i32) {
    %c0_i32 = arith.constant 0 : i32
    %c0_i32_0 = arith.constant 0 : i32
    %c0_i32_1 = arith.constant 0 : i32
    return %c0_i32, %c0_i32_0 : i32, i32
  }
  func.func @transform_7(%arg0: i32) -> (i32, i32) {
    %c0_i32 = arith.constant 0 : i32
    %c0_i32_0 = arith.constant 0 : i32
    %c0_i32_1 = arith.constant 0 : i32
    return %c0_i32, %c0_i32_0 : i32, i32
  }
  func.func @transform_8(%arg0: i32) -> (i32, i32) {
    %c0_i32 = arith.constant 0 : i32
    %c0_i32_0 = arith.constant 0 : i32
    %c0_i32_1 = arith.constant 0 : i32
    return %c0_i32, %c0_i32_0 : i32, i32
  }
  func.func @transform_9(%arg0: i32) -> (i32, i32) {
    %c0_i32 = arith.constant 0 : i32
    %c0_i32_0 = arith.constant 0 : i32
    %c0_i32_1 = arith.constant 0 : i32
    return %c0_i32, %c0_i32_0 : i32, i32
  }
  func.func @transform_10(%arg0: i32) -> (i32, i32) {
    %c0_i32 = arith.constant 0 : i32
    %c0_i32_0 = arith.constant 0 : i32
    %c0_i32_1 = arith.constant 0 : i32
    return %c0_i32, %c0_i32_0 : i32, i32
  }
  func.func @transform_11(%arg0: i32) -> (i32, i32) {
    %c0_i32 = arith.constant 0 : i32
    %c0_i32_0 = arith.constant 0 : i32
    %c0_i32_1 = arith.constant 0 : i32
    return %c0_i32, %c0_i32_0 : i32, i32
  }
  func.func @transform_12(%arg0: i32) -> (i32, i32, i32) {
    %c0_i32 = arith.constant 0 : i32
    %c0_i32_0 = arith.constant 0 : i32
    %c0_i32_1 = arith.constant 0 : i32
    return %arg0, %c0_i32, %c0_i32_0 : i32, i32, i32
  }
}

</mosaic_0001>

<llo_original>
// kernel: tile.13
$region0: #{tile.13}
  #allocation0 [shape = 's32[1]{0}', space=sflag, size = 0x4, scoped, tag = 'scoped memory for tile.13']
  %s0 = inlined_call_operand.vmem [shape: f32[8], index: 0, kind: input, shape index: {}]
  %s1 = inlined_call_operand.vmem [shape: f32[16,8], index: 1, kind: output, shape index: {}]
  // Predicated region
  $region2: #{tile.13} parent=0 // pred_check
    _
  $region3: #{tile.13} parent=0 // pred_check_branch
    %3 = sbr.rel (0) target = $region5
  $region4: #{tile.13} parent=0 // pred_region
    _
  $region5: #{tile.13} parent=0 // pred_fallthru
    _
  %v4 = vld [vmem:[%s0] ss:$0 sm:$0xff]
  %5 = vst [vmem:[%s1] sm:$0xff] %v4
  %s6 = scalar_lea.vmem %s1, 8
  %7 = vst [vmem:[%s6] sm:$0xff] %v4

// kernel: tile.14
$region0: #{tile.14}
  %s0 = inlined_call_operand.vmem [shape: f32[16,8], index: 0, kind: input, shape index: {}]
  %s1 = inlined_call_operand.vmem [shape: f32[1,128], index: 1, kind: output, shape index: {}]
  $region1: #{tile.14} parent=0
    #allocation0 [shape = 'u8[4096]{0}', space=vmem, size = 0x1000, scoped, tag = 'scoped mem for output reshape']
    %v2 = vld [vmem:[%s0] sm:$0x1]
    %vm3 = vcmask 64512
    %4 = vst.msk [vmem:[#allocation0] sm:$0x1] %vm3, %v2
    %s5 = scalar_lea.vmem %s0, 15
    %v6 = vld [vmem:[%s5] sm:$0x1]
    %7 = vrot.lane.b32.xlu0 %v6, 120
    %v8 = vpop.permute.xlu0 %7
    %vm9 = vcmask 1048512
    %10 = vst.msk [vmem:[#allocation0] sm:$0x1] %vm9, %v8
    %s11 = scalar_lea.vmem %s0, 14
    %v12 = vld [vmem:[%s11] sm:$0x1]
    %13 = vrot.lane.b32.xlu0 %v12, 112
    %v14 = vpop.permute.xlu0 %13
    %vm15 = vcmask 982912
    %16 = vst.msk [vmem:[#allocation0] sm:$0x1] %vm15, %v14
    %s17 = scalar_lea.vmem %s0, 13
    %v18 = vld [vmem:[%s17] sm:$0x1]
    %19 = vrot.lane.b32.xlu0 %v18, 104
    %v20 = vpop.permute.xlu0 %19
    %vm21 = vcmask 917312
    %22 = vst.msk [vmem:[#allocation0] sm:$0x1] %vm21, %v20
    %s23 = scalar_lea.vmem %s0, 12
    %v24 = vld [vmem:[%s23] sm:$0x1]
    %25 = vrot.lane.b32.xlu0 %v24, 96
    %v26 = vpop.permute.xlu0 %25
    %vm27 = vcmask 851712
    %28 = vst.msk [vmem:[#allocation0] sm:$0x1] %vm27, %v26
    %s29 = scalar_lea.vmem %s0, 11
    %v30 = vld [vmem:[%s29] sm:$0x1]
    %31 = vrot.lane.b32.xlu0 %v30, 88
    %v32 = vpop.permute.xlu0 %31
    %vm33 = vcmask 786112
    %34 = vst.msk [vmem:[#allocation0] sm:$0x1] %vm33, %v32
    %s35 = scalar_lea.vmem %s0, 10
    %v36 = vld [vmem:[%s35] sm:$0x1]
    %37 = vrot.lane.b32.xlu0 %v36, 80
    %v38 = vpop.permute.xlu0 %37
    %vm39 = vcmask 720512
    %40 = vst.msk [vmem:[#allocation0] sm:$0x1] %vm39, %v38
    %s41 = scalar_lea.vmem %s0, 9
    %v42 = vld [vmem:[%s41] sm:$0x1]
    %43 = vrot.lane.b32.xlu0 %v42, 72
    %v44 = vpop.permute.xlu0 %43
    %vm45 = vcmask 654912
    %46 = vst.msk [vmem:[#allocation0] sm:$0x1] %vm45, %v44
    %s47 = scalar_lea.vmem %s0, 8
    %v48 = vld [vmem:[%s47] sm:$0x1]
    %49 = vrot.lane.b32.xlu0 %v48, 64
    %v50 = vpop.permute.xlu0 %49
    %vm51 = vcmask 589312
    %52 = vst.msk [vmem:[#allocation0] sm:$0x1] %vm51, %v50
    %s53 = scalar_lea.vmem %s0, 7
    %v54 = vld [vmem:[%s53] sm:$0x1]
    %55 = vrot.lane.b32.xlu0 %v54, 56
    %v56 = vpop.permute.xlu0 %55
    %vm57 = vcmask 523712
    %58 = vst.msk [vmem:[#allocation0] sm:$0x1] %vm57, %v56
    %s59 = scalar_lea.vmem %s0, 6
    %v60 = vld [vmem:[%s59] sm:$0x1]
    %61 = vrot.lane.b32.xlu0 %v60, 48
    %v62 = vpop.permute.xlu0 %61
    %vm63 = vcmask 458112
    %64 = vst.msk [vmem:[#allocation0] sm:$0x1] %vm63, %v62
    %s65 = scalar_lea.vmem %s0, 5
    %v66 = vld [vmem:[%s65] sm:$0x1]
    %67 = vrot.lane.b32.xlu0 %v66, 40
    %v68 = vpop.permute.xlu0 %67
    %vm69 = vcmask 392512
    %70 = vst.msk [vmem:[#allocation0] sm:$0x1] %vm69, %v68
    %s71 = scalar_lea.vmem %s0, 4
    %v72 = vld [vmem:[%s71] sm:$0x1]
    %73 = vrot.lane.b32.xlu0 %v72, 32
    %v74 = vpop.permute.xlu0 %73
    %vm75 = vcmask 326912
    %76 = vst.msk [vmem:[#allocation0] sm:$0x1] %vm75, %v74
    %s77 = scalar_lea.vmem %s0, 3
    %v78 = vld [vmem:[%s77] sm:$0x1]
    %79 = vrot.lane.b32.xlu0 %v78, 24
    %v80 = vpop.permute.xlu0 %79
    %vm81 = vcmask 261312
    %82 = vst.msk [vmem:[#allocation0] sm:$0x1] %vm81, %v80
    %s83 = scalar_lea.vmem %s0, 2
    %v84 = vld [vmem:[%s83] sm:$0x1]
    %85 = vrot.lane.b32.xlu0 %v84, 16
    %v86 = vpop.permute.xlu0 %85
    %vm87 = vcmask 195712
    %88 = vst.msk [vmem:[#allocation0] sm:$0x1] %vm87, %v86
    %s89 = scalar_lea.vmem %s0, 1
    %v90 = vld [vmem:[%s89] sm:$0x1]
    %91 = vrot.lane.b32.xlu0 %v90, 8
    %v92 = vpop.permute.xlu0 %91
    %vm93 = vcmask 130112
    %94 = vst.msk [vmem:[#allocation0] sm:$0x1] %vm93, %v92
    %s96 = sshllo.u32 0, 1
    %v98 = vld [vmem:[#allocation0] sm:%s96]
    %s99 = sshllo.u32 0, 1
    %100 = vst [vmem:[%s1] sm:%s99] %v98

// kernel: basic_block_forward.1
$region0: #{basic_block_forward.1}
  #allocation0 [shape = 'u32[]', space=smem, size = 0x4, offset = 0x4, fixed_abs, tag = 'smem constant byte address 0x4 - core index']
  #allocation1 [shape = 'u32[144,128]{1,0:T(1,128)}', space=vmem, size = 0x12000, scoped, tag = 'internal scratch']
  #allocation2 [shape = 'f32[18,128]{1,0:T(8,128)}', space=vmem, size = 0x3000, scoped, tag = 'scratch operand']
  %s0 = inlined_call_operand.vmem [shape: f32[2,16,128], index: 0, kind: input, shape index: {}]
  %s1 = inlined_call_operand.vmem [shape: f32[128,128], index: 1, kind: input, shape index: {}]
  %s2 = inlined_call_operand.vmem [shape: f32[128,128], index: 2, kind: input, shape index: {}]
  %s3 = inlined_call_operand.vmem [shape: f32[128,128], index: 3, kind: input, shape index: {}]
  %s4 = inlined_call_operand.vmem [shape: f32[128,128], index: 4, kind: input, shape index: {}]
  %s5 = inlined_call_operand.vmem [shape: f32[128,128], index: 5, kind: input, shape index: {}]
  %s6 = inlined_call_operand.vmem [shape: f32[128,128], index: 6, kind: input, shape index: {}]
  %s7 = inlined_call_operand.vmem [shape: f32[1,128], index: 7, kind: input, shape index: {}]
  %s8 = inlined_call_operand.vmem [shape: f32[1,128], index: 8, kind: input, shape index: {}]
  %s9 = inlined_call_operand.vmem [shape: f32[48,24], index: 9, kind: input, shape index: {}]
  %s10 = inlined_call_operand.vmem [shape: f32[24,128], index: 10, kind: input, shape index: {}]
  %s11 = inlined_call_operand.vmem [shape: f32[16,32], index: 11, kind: input, shape index: {}]
  %s12 = inlined_call_operand.vmem [shape: f32[2,16,128], index: 12, kind: output, shape index: {}]
  %s13 = sld [smem:[#allocation0]]
  $region58: #{basic_block_forward.1} parent=0
    _
  %s15 = ssub.s32 1, %s13
  %s16 = scalar_select 0, %s15, %s13
  // Predicated region
  $region2: #{basic_block_forward.1} parent=0 // pred_check
    _
  $region3: #{basic_block_forward.1} parent=0 // pred_check_branch
    %18 = sbr.rel (0) target = $region5
  $region4: #{basic_block_forward.1} parent=0 // pred_region
    _
  $region5: #{basic_block_forward.1} parent=0 // pred_fallthru
    _
  // Predicated region
  $region6: #{basic_block_forward.1} parent=0 // pred_check
    _
  $region7: #{basic_block_forward.1} parent=0 // pred_check_branch
    %20 = sbr.rel (0) target = $region9
  $region8: #{basic_block_forward.1} parent=0 // pred_region
    _
  $region9: #{basic_block_forward.1} parent=0 // pred_fallthru
    _
  // Predicated region
  $region10: #{basic_block_forward.1} parent=0 // pred_check
    _
  $region11: #{basic_block_forward.1} parent=0 // pred_check_branch
    %22 = sbr.rel (0) target = $region13
  $region12: #{basic_block_forward.1} parent=0 // pred_region
    _
  $region13: #{basic_block_forward.1} parent=0 // pred_fallthru
    _
  // Predicated region
  $region14: #{basic_block_forward.1} parent=0 // pred_check
    _
  $region15: #{basic_block_forward.1} parent=0 // pred_check_branch
    %24 = sbr.rel (0) target = $region17
  $region16: #{basic_block_forward.1} parent=0 // pred_region
    _
  $region17: #{basic_block_forward.1} parent=0 // pred_fallthru
    _
  // Predicated region
  $region18: #{basic_block_forward.1} parent=0 // pred_check
    _
  $region19: #{basic_block_forward.1} parent=0 // pred_check_branch
    %26 = sbr.rel (0) target = $region21
  $region20: #{basic_block_forward.1} parent=0 // pred_region
    _
  $region21: #{basic_block_forward.1} parent=0 // pred_fallthru
    _
  // Predicated region
  $region22: #{basic_block_forward.1} parent=0 // pred_check
    _
  $region23: #{basic_block_forward.1} parent=0 // pred_check_branch
    %28 = sbr.rel (0) target = $region25
  $region24: #{basic_block_forward.1} parent=0 // pred_region
    _
  $region25: #{basic_block_forward.1} parent=0 // pred_fallthru
    _
  // Predicated region
  $region26: #{basic_block_forward.1} parent=0 // pred_check
    _
  $region27: #{basic_block_forward.1} parent=0 // pred_check_branch
    %30 = sbr.rel (0) target = $region29
  $region28: #{basic_block_forward.1} parent=0 // pred_region
    _
  $region29: #{basic_block_forward.1} parent=0 // pred_fallthru
    _
  // Predicated region
  $region30: #{basic_block_forward.1} parent=0 // pred_check
    _
  $region31: #{basic_block_forward.1} parent=0 // pred_check_branch
    %32 = sbr.rel (0) target = $region33
  $region32: #{basic_block_forward.1} parent=0 // pred_region
    _
  $region33: #{basic_block_forward.1} parent=0 // pred_fallthru
    _
  // Predicated region
  $region34: #{basic_block_forward.1} parent=0 // pred_check
    _
  $region35: #{basic_block_forward.1} parent=0 // pred_check_branch
    %34 = sbr.rel (0) target = $region37
  $region36: #{basic_block_forward.1} parent=0 // pred_region
    _
  $region37: #{basic_block_forward.1} parent=0 // pred_fallthru
    _
  // Predicated region
  $region38: #{basic_block_forward.1} parent=0 // pred_check
    _
  $region39: #{basic_block_forward.1} parent=0 // pred_check_branch
    %36 = sbr.rel (0) target = $region41
  $region40: #{basic_block_forward.1} parent=0 // pred_region
    _
  $region41: #{basic_block_forward.1} parent=0 // pred_fallthru
    _
  // Predicated region
  $region42: #{basic_block_forward.1} parent=0 // pred_check
    _
  $region43: #{basic_block_forward.1} parent=0 // pred_check_branch
    %38 = sbr.rel (0) target = $region45
  $region44: #{basic_block_forward.1} parent=0 // pred_region
    _
  $region45: #{basic_block_forward.1} parent=0 // pred_fallthru
    _
  // Predicated region
  $region46: #{basic_block_forward.1} parent=0 // pred_check
    _
  $region47: #{basic_block_forward.1} parent=0 // pred_check_branch
    %40 = sbr.rel (0) target = $region49
  $region48: #{basic_block_forward.1} parent=0 // pred_region
    _
  $region49: #{basic_block_forward.1} parent=0 // pred_fallthru
    _
  %41 = vst [vmem:[#allocation2] sm:$0x1] 0.0
  %42 = vst [vmem:[#allocation2 + $0x11] sm:$0x1] 0.0
  %v43 = vld [vmem:[%s0] sm:$0xff]
  %v44 = vld [vmem:[%s0 + $0x8] sm:$0xff]
  %45 = vst [vmem:[#allocation2 + $0x1] sm:$0xff] %v43
  %46 = vst [vmem:[#allocation2 + $0x9] sm:$0xff] %v44
  %v47 = vld [vmem:[#allocation2] sm:$0xff]
  %v48 = vld [vmem:[#allocation2 + $0x8] sm:$0xff]
  %v49 = vld [vmem:[%s1] sm:$0xff]
  %v50 = vld [vmem:[%s1 + $0x8] sm:$0xff]
  %v51 = vld [vmem:[%s1 + $0x10] sm:$0xff]
  %v52 = vld [vmem:[%s1 + $0x18] sm:$0xff]
  %v53 = vld [vmem:[%s1 + $0x20] sm:$0xff]
  %v54 = vld [vmem:[%s1 + $0x28] sm:$0xff]
  %v55 = vld [vmem:[%s1 + $0x30] sm:$0xff]
  %v56 = vld [vmem:[%s1 + $0x38] sm:$0xff]
  %v57 = vld [vmem:[%s1 + $0x40] sm:$0xff]
  %v58 = vld [vmem:[%s1 + $0x48] sm:$0xff]
  %v59 = vld [vmem:[%s1 + $0x50] sm:$0xff]
  %v60 = vld [vmem:[%s1 + $0x58] sm:$0xff]
  %v61 = vld [vmem:[%s1 + $0x60] sm:$0xff]
  %v62 = vld [vmem:[%s1 + $0x68] sm:$0xff]
  %v63 = vld [vmem:[%s1 + $0x70] sm:$0xff]
  %v64 = vld [vmem:[%s1 + $0x78] sm:$0xff]
  %v65 = vld [vmem:[#allocation2 + $0x1] sm:$0xff]
  %v66 = vld [vmem:[#allocation2 + $0x9] sm:$0xff]
  %v67 = vld [vmem:[%s2] sm:$0xff]
  %v68 = vld [vmem:[%s2 + $0x8] sm:$0xff]
  %v69 = vld [vmem:[%s2 + $0x10] sm:$0xff]
  %v70 = vld [vmem:[%s2 + $0x18] sm:$0xff]
  %v71 = vld [vmem:[%s2 + $0x20] sm:$0xff]
  %v72 = vld [vmem:[%s2 + $0x28] sm:$0xff]
  %v73 = vld [vmem:[%s2 + $0x30] sm:$0xff]
  %v74 = vld [vmem:[%s2 + $0x38] sm:$0xff]
  %v75 = vld [vmem:[%s2 + $0x40] sm:$0xff]
  %v76 = vld [vmem:[%s2 + $0x48] sm:$0xff]
  %v77 = vld [vmem:[%s2 + $0x50] sm:$0xff]
  %v78 = vld [vmem:[%s2 + $0x58] sm:$0xff]
  %v79 = vld [vmem:[%s2 + $0x60] sm:$0xff]
  %v80 = vld [vmem:[%s2 + $0x68] sm:$0xff]
  %v81 = vld [vmem:[%s2 + $0x70] sm:$0xff]
  %v82 = vld [vmem:[%s2 + $0x78] sm:$0xff]
  %83 = vmatprep.subr.mxu0 0.0
  %84 = vmatpush1.msra.mxu0 %v67
  %85 = vmatprep.subr.mxu0 0.0
  %86 = vmatpush1.msra.mxu0 %v68
  %87 = vmatprep.subr.mxu0 0.0
  %88 = vmatpush1.msra.mxu0 %v69
  %89 = vmatprep.subr.mxu0 0.0
  %90 = vmatpush1.msra.mxu0 %v70
  %91 = vmatprep.subr.mxu0 0.0
  %92 = vmatpush1.msra.mxu0 %v71
  %93 = vmatprep.subr.mxu0 0.0
  %94 = vmatpush1.msra.mxu0 %v72
  %95 = vmatprep.subr.mxu0 0.0
  %96 = vmatpush1.msra.mxu0 %v73
  %97 = vmatprep.subr.mxu0 0.0
  %98 = vmatpush1.msra.mxu0 %v74
  %99 = vmatprep.subr.mxu0 0.0
  %100 = vmatpush1.msra.mxu0 %v75
  %101 = vmatprep.subr.mxu0 0.0
  %102 = vmatpush1.msra.mxu0 %v76
  %103 = vmatprep.subr.mxu0 0.0
  %104 = vmatpush1.msra.mxu0 %v77
  %105 = vmatprep.subr.mxu0 0.0
  %106 = vmatpush1.msra.mxu0 %v78
  %107 = vmatprep.subr.mxu0 0.0
  %108 = vmatpush1.msra.mxu0 %v79
  %109 = vmatprep.subr.mxu0 0.0
  %110 = vmatpush1.msra.mxu0 %v80
  %111 = vmatprep.subr.mxu0 0.0
  %112 = vmatpush1.msra.mxu0 %v81
  %113 = vmatprep.subr.mxu0 0.0
  %114 = vmatpush1.msra.mxu0 %v82
  %115 = vmatprep.subr.mxu0 0.0
  %116 = vmatpush1.msra.mxu0 0.0
  %117 = vmatprep.subr.mxu0 0.0
  %118 = vmatpush1.msra.mxu0 0.0
  %119 = vmatprep.subr.mxu0 0.0
  %120 = vmatpush1.msra.mxu0 0.0
  %121 = vmatprep.subr.mxu0 0.0
  %122 = vmatpush1.msra.mxu0 0.0
  %123 = vmatprep.subr.mxu0 0.0
  %124 = vmatpush1.msra.mxu0 0.0
  %125 = vmatprep.subr.mxu0 0.0
  %126 = vmatpush1.msra.mxu0 0.0
  %127 = vmatprep.subr.mxu0 0.0
  %128 = vmatpush1.msra.mxu0 0.0
  %129 = vmatprep.subr.mxu0 0.0
  %130 = vmatpush1.msra.mxu0 0.0
  %131 = vmatprep.subr.mxu0 0.0
  %132 = vmatpush1.msra.mxu0 0.0
  %133 = vmatprep.subr.mxu0 0.0
  %134 = vmatpush1.msra.mxu0 0.0
  %135 = vmatprep.subr.mxu0 0.0
  %136 = vmatpush1.msra.mxu0 0.0
  %137 = vmatprep.subr.mxu0 0.0
  %138 = vmatpush1.msra.mxu0 0.0
  %139 = vmatprep.subr.mxu0 0.0
  %140 = vmatpush1.msra.mxu0 0.0
  %141 = vmatprep.subr.mxu0 0.0
  %142 = vmatpush1.msra.mxu0 0.0
  %143 = vmatprep.subr.mxu0 0.0
  %144 = vmatpush1.msra.mxu0 0.0
  %145 = vmatprep.subr.mxu0 0.0
  %146 = vmatpush1.msra.mxu0 0.0
  %147 = vmatprep.mubr.f32.mxu0 0.0
  %148 = vmatmul.mubr.f32.gmra.mrb[0].mxu0 %v65
  %v149 = vpop.f32.mrb[0].mxu0
  %v150 = vadd.f32 0.0, %v149
  %v151 = vpop.f32.mrb[0].mxu0
  %152 = vmatprep.mubr.f32.mxu0 0.0
  %153 = vmatmul.mubr.f32.gmra.mrb[0].mxu0 %v66
  %v154 = vpop.f32.mrb[0].mxu0
  %v155 = vadd.f32 0.0, %v154
  %v156 = vpop.f32.mrb[0].mxu0
  %157 = vdwg.mxu0
  %158 = vmatprep.subr.mxu0 0.0
  %159 = vmatpush1.msra.mxu0 %v49
  %160 = vmatprep.subr.mxu0 0.0
  %161 = vmatpush1.msra.mxu0 %v50
  %162 = vmatprep.subr.mxu0 0.0
  %163 = vmatpush1.msra.mxu0 %v51
  %164 = vmatprep.subr.mxu0 0.0
  %165 = vmatpush1.msra.mxu0 %v52
  %166 = vmatprep.subr.mxu0 0.0
  %167 = vmatpush1.msra.mxu0 %v53
  %168 = vmatprep.subr.mxu0 0.0
  %169 = vmatpush1.msra.mxu0 %v54
  %170 = vmatprep.subr.mxu0 0.0
  %171 = vmatpush1.msra.mxu0 %v55
  %172 = vmatprep.subr.mxu0 0.0
  %173 = vmatpush1.msra.mxu0 %v56
  %174 = vmatprep.subr.mxu0 0.0
  %175 = vmatpush1.msra.mxu0 %v57
  %176 = vmatprep.subr.mxu0 0.0
  %177 = vmatpush1.msra.mxu0 %v58
  %178 = vmatprep.subr.mxu0 0.0
  %179 = vmatpush1.msra.mxu0 %v59
  %180 = vmatprep.subr.mxu0 0.0
  %181 = vmatpush1.msra.mxu0 %v60
  %182 = vmatprep.subr.mxu0 0.0
  %183 = vmatpush1.msra.mxu0 %v61
  %184 = vmatprep.subr.mxu0 0.0
  %185 = vmatpush1.msra.mxu0 %v62
  %186 = vmatprep.subr.mxu0 0.0
  %187 = vmatpush1.msra.mxu0 %v63
  %188 = vmatprep.subr.mxu0 0.0
  %189 = vmatpush1.msra.mxu0 %v64
  %190 = vmatprep.subr.mxu0 0.0
  %191 = vmatpush1.msra.mxu0 0.0
  %192 = vmatprep.subr.mxu0 0.0
  %193 = vmatpush1.msra.mxu0 0.0
  %194 = vmatprep.subr.mxu0 0.0
  %195 = vmatpush1.msra.mxu0 0.0
  %196 = vmatprep.subr.mxu0 0.0
  %197 = vmatpush1.msra.mxu0 0.0
  %198 = vmatprep.subr.mxu0 0.0
  %199 = vmatpush1.msra.mxu0 0.0
  %200 = vmatprep.subr.mxu0 0.0
  %201 = vmatpush1.msra.mxu0 0.0
  %202 = vmatprep.subr.mxu0 0.0
  %203 = vmatpush1.msra.mxu0 0.0
  %204 = vmatprep.subr.mxu0 0.0
  %205 = vmatpush1.msra.mxu0 0.0
  %206 = vmatprep.subr.mxu0 0.0
  %207 = vmatpush1.msra.mxu0 0.0
  %208 = vmatprep.subr.mxu0 0.0
  %209 = vmatpush1.msra.mxu0 0.0
  %210 = vmatprep.subr.mxu0 0.0
  %211 = vmatpush1.msra.mxu0 0.0
  %212 = vmatprep.subr.mxu0 0.0
  %213 = vmatpush1.msra.mxu0 0.0
  %214 = vmatprep.subr.mxu0 0.0
  %215 = vmatpush1.msra.mxu0 0.0
  %216 = vmatprep.subr.mxu0 0.0
  %217 = vmatpush1.msra.mxu0 0.0
  %218 = vmatprep.subr.mxu0 0.0
  %219 = vmatpush1.msra.mxu0 0.0
  %220 = vmatprep.subr.mxu0 0.0
  %221 = vmatpush1.msra.mxu0 0.0
  %222 = vmatprep.mubr.f32.mxu0 0.0
  %223 = vmatmul.mubr.f32.gmra.mrb[0].mxu0 %v47
  %v224 = vpop.f32.mrb[0].mxu0
  %v225 = vadd.f32 %v150, %v224
  %v226 = vpop.f32.mrb[0].mxu0
  %227 = vmatprep.mubr.f32.mxu0 0.0
  %228 = vmatmul.mubr.f32.gmra.mrb[0].mxu0 %v48
  %v229 = vpop.f32.mrb[0].mxu0
  %v230 = vadd.f32 %v155, %v229
  %v231 = vpop.f32.mrb[0].mxu0
  %232 = vdwg.mxu0
  %v233 = vld [vmem:[#allocation2 + $0x2] sm:$0xff]
  %v234 = vld [vmem:[#allocation2 + $0xa] sm:$0xff]
  %v235 = vld [vmem:[%s3] sm:$0xff]
  %v236 = vld [vmem:[%s3 + $0x8] sm:$0xff]
  %v237 = vld [vmem:[%s3 + $0x10] sm:$0xff]
  %v238 = vld [vmem:[%s3 + $0x18] sm:$0xff]
  %v239 = vld [vmem:[%s3 + $0x20] sm:$0xff]
  %v240 = vld [vmem:[%s3 + $0x28] sm:$0xff]
  %v241 = vld [vmem:[%s3 + $0x30] sm:$0xff]
  %v242 = vld [vmem:[%s3 + $0x38] sm:$0xff]
  %v243 = vld [vmem:[%s3 + $0x40] sm:$0xff]
  %v244 = vld [vmem:[%s3 + $0x48] sm:$0xff]
  %v245 = vld [vmem:[%s3 + $0x50] sm:$0xff]
  %v246 = vld [vmem:[%s3 + $0x58] sm:$0xff]
  %v247 = vld [vmem:[%s3 + $0x60] sm:$0xff]
  %v248 = vld [vmem:[%s3 + $0x68] sm:$0xff]
  %v249 = vld [vmem:[%s3 + $0x70] sm:$0xff]
  %v250 = vld [vmem:[%s3 + $0x78] sm:$0xff]
  %251 = vmatprep.subr.mxu0 0.0
  %252 = vmatpush1.msra.mxu0 %v235
  %253 = vmatprep.subr.mxu0 0.0
  %254 = vmatpush1.msra.mxu0 %v236
  %255 = vmatprep.subr.mxu0 0.0
  %256 = vmatpush1.msra.mxu0 %v237
  %257 = vmatprep.subr.mxu0 0.0
  %258 = vmatpush1.msra.mxu0 %v238
  %259 = vmatprep.subr.mxu0 0.0
  %260 = vmatpush1.msra.mxu0 %v239
  %261 = vmatprep.subr.mxu0 0.0
  %262 = vmatpush1.msra.mxu0 %v240
  %263 = vmatprep.subr.mxu0 0.0
  %264 = vmatpush1.msra.mxu0 %v241
  %265 = vmatprep.subr.mxu0 0.0
  %266 = vmatpush1.msra.mxu0 %v242
  %267 = vmatprep.subr.mxu0 0.0
  %268 = vmatpush1.msra.mxu0 %v243
  %269 = vmatprep.subr.mxu0 0.0
  %270 = vmatpush1.msra.mxu0 %v244
  %271 = vmatprep.subr.mxu0 0.0
  %272 = vmatpush1.msra.mxu0 %v245
  %273 = vmatprep.subr.mxu0 0.0
  %274 = vmatpush1.msra.mxu0 %v246
  %275 = vmatprep.subr.mxu0 0.0
  %276 = vmatpush1.msra.mxu0 %v247
  %277 = vmatprep.subr.mxu0 0.0
  %278 = vmatpush1.msra.mxu0 %v248
  %279 = vmatprep.subr.mxu0 0.0
  %280 = vmatpush1.msra.mxu0 %v249
  %281 = vmatprep.subr.mxu0 0.0
  %282 = vmatpush1.msra.mxu0 %v250
  %283 = vmatprep.subr.mxu0 0.0
  %284 = vmatpush1.msra.mxu0 0.0
  %285 = vmatprep.subr.mxu0 0.0
  %286 = vmatpush1.msra.mxu0 0.0
  %287 = vmatprep.subr.mxu0 0.0
  %288 = vmatpush1.msra.mxu0 0.0
  %289 = vmatprep.subr.mxu0 0.0
  %290 = vmatpush1.msra.mxu0 0.0
  %291 = vmatprep.subr.mxu0 0.0
  %292 = vmatpush1.msra.mxu0 0.0
  %293 = vmatprep.subr.mxu0 0.0
  %294 = vmatpush1.msra.mxu0 0.0
  %295 = vmatprep.subr.mxu0 0.0
  %296 = vmatpush1.msra.mxu0 0.0
  %297 = vmatprep.subr.mxu0 0.0
  %298 = vmatpush1.msra.mxu0 0.0
  %299 = vmatprep.subr.mxu0 0.0
  %300 = vmatpush1.msra.mxu0 0.0
  %301 = vmatprep.subr.mxu0 0.0
  %302 = vmatpush1.msra.mxu0 0.0
  %303 = vmatprep.subr.mxu0 0.0
  %304 = vmatpush1.msra.mxu0 0.0
  %305 = vmatprep.subr.mxu0 0.0
  %306 = vmatpush1.msra.mxu0 0.0
  %307 = vmatprep.subr.mxu0 0.0
  %308 = vmatpush1.msra.mxu0 0.0
  %309 = vmatprep.subr.mxu0 0.0
  %310 = vmatpush1.msra.mxu0 0.0
  %311 = vmatprep.subr.mxu0 0.0
  %312 = vmatpush1.msra.mxu0 0.0
  %313 = vmatprep.subr.mxu0 0.0
  %314 = vmatpush1.msra.mxu0 0.0
  %315 = vmatprep.mubr.f32.mxu0 0.0
  %316 = vmatmul.mubr.f32.gmra.mrb[0].mxu0 %v233
  %v317 = vpop.f32.mrb[0].mxu0
  %v318 = vadd.f32 0.0, %v317
  %v319 = vpop.f32.mrb[0].mxu0
  %320 = vmatprep.mubr.f32.mxu0 0.0
  %321 = vmatmul.mubr.f32.gmra.mrb[0].mxu0 %v234
  %v322 = vpop.f32.mrb[0].mxu0
  %v323 = vadd.f32 0.0, %v322
  %v324 = vpop.f32.mrb[0].mxu0
  %325 = vdwg.mxu0
  %v326 = vadd.f32 %v225, %v318
  %v327 = vadd.f32 %v230, %v323
  %v328 = vld [vmem:[%s7] sm:$0x1]
  %v330 = vlaneseq
  %v331 = vshrl.u32 %v330, 7
  %v332 = vsub.s32 0, %v331
  %v333 = vrot.slane %v328, %v332
  %v335 = vadd.f32 %v326, %v333
  %v336 = vadd.f32 %v327, %v333
  %v337 = vmax.f32 %v335, 0.0
  %v338 = vmax.f32 %v336, 0.0
  %339 = vst [vmem:[#allocation2 + $0x1] sm:$0xff] %v337
  %340 = vst [vmem:[#allocation2 + $0x9] sm:$0xff] %v338
  %v341 = vld [vmem:[#allocation2] sm:$0xff]
  %v342 = vld [vmem:[#allocation2 + $0x8] sm:$0xff]
  %v343 = vld [vmem:[%s4] sm:$0xff]
  %v344 = vld [vmem:[%s4 + $0x8] sm:$0xff]
  %v345 = vld [vmem:[%s4 + $0x10] sm:$0xff]
  %v346 = vld [vmem:[%s4 + $0x18] sm:$0xff]
  %v347 = vld [vmem:[%s4 + $0x20] sm:$0xff]
  %v348 = vld [vmem:[%s4 + $0x28] sm:$0xff]
  %v349 = vld [vmem:[%s4 + $0x30] sm:$0xff]
  %v350 = vld [vmem:[%s4 + $0x38] sm:$0xff]
  %v351 = vld [vmem:[%s4 + $0x40] sm:$0xff]
  %v352 = vld [vmem:[%s4 + $0x48] sm:$0xff]
  %v353 = vld [vmem:[%s4 + $0x50] sm:$0xff]
  %v354 = vld [vmem:[%s4 + $0x58] sm:$0xff]
  %v355 = vld [vmem:[%s4 + $0x60] sm:$0xff]
  %v356 = vld [vmem:[%s4 + $0x68] sm:$0xff]
  %v357 = vld [vmem:[%s4 + $0x70] sm:$0xff]
  %v358 = vld [vmem:[%s4 + $0x78] sm:$0xff]
  %v359 = vld [vmem:[#allocation2 + $0x1] sm:$0xff]
  %v360 = vld [vmem:[#allocation2 + $0x9] sm:$0xff]
  %v361 = vld [vmem:[%s5] sm:$0xff]
  %v362 = vld [vmem:[%s5 + $0x8] sm:$0xff]
  %v363 = vld [vmem:[%s5 + $0x10] sm:$0xff]
  %v364 = vld [vmem:[%s5 + $0x18] sm:$0xff]
  %v365 = vld [vmem:[%s5 + $0x20] sm:$0xff]
  %v366 = vld [vmem:[%s5 + $0x28] sm:$0xff]
  %v367 = vld [vmem:[%s5 + $0x30] sm:$0xff]
  %v368 = vld [vmem:[%s5 + $0x38] sm:$0xff]
  %v369 = vld [vmem:[%s5 + $0x40] sm:$0xff]
  %v370 = vld [vmem:[%s5 + $0x48] sm:$0xff]
  %v371 = vld [vmem:[%s5 + $0x50] sm:$0xff]
  %v372 = vld [vmem:[%s5 + $0x58] sm:$0xff]
  %v373 = vld [vmem:[%s5 + $0x60] sm:$0xff]
  %v374 = vld [vmem:[%s5 + $0x68] sm:$0xff]
  %v375 = vld [vmem:[%s5 + $0x70] sm:$0xff]
  %v376 = vld [vmem:[%s5 + $0x78] sm:$0xff]
  %377 = vmatprep.subr.mxu0 0.0
  %378 = vmatpush1.msra.mxu0 %v361
  %379 = vmatprep.subr.mxu0 0.0
  %380 = vmatpush1.msra.mxu0 %v362
  %381 = vmatprep.subr.mxu0 0.0
  %382 = vmatpush1.msra.mxu0 %v363
  %383 = vmatprep.subr.mxu0 0.0
  %384 = vmatpush1.msra.mxu0 %v364
  %385 = vmatprep.subr.mxu0 0.0
  %386 = vmatpush1.msra.mxu0 %v365
  %387 = vmatprep.subr.mxu0 0.0
  %388 = vmatpush1.msra.mxu0 %v366
  %389 = vmatprep.subr.mxu0 0.0
  %390 = vmatpush1.msra.mxu0 %v367
  %391 = vmatprep.subr.mxu0 0.0
  %392 = vmatpush1.msra.mxu0 %v368
  %393 = vmatprep.subr.mxu0 0.0
  %394 = vmatpush1.msra.mxu0 %v369
  %395 = vmatprep.subr.mxu0 0.0
  %396 = vmatpush1.msra.mxu0 %v370
  %397 = vmatprep.subr.mxu0 0.0
  %398 = vmatpush1.msra.mxu0 %v371
  %399 = vmatprep.subr.mxu0 0.0
  %400 = vmatpush1.msra.mxu0 %v372
  %401 = vmatprep.subr.mxu0 0.0
  %402 = vmatpush1.msra.mxu0 %v373
  %403 = vmatprep.subr.mxu0 0.0
  %404 = vmatpush1.msra.mxu0 %v374
  %405 = vmatprep.subr.mxu0 0.0
  %406 = vmatpush1.msra.mxu0 %v375
  %407 = vmatprep.subr.mxu0 0.0
  %408 = vmatpush1.msra.mxu0 %v376
  %409 = vmatprep.subr.mxu0 0.0
  %410 = vmatpush1.msra.mxu0 0.0
  %411 = vmatprep.subr.mxu0 0.0
  %412 = vmatpush1.msra.mxu0 0.0
  %413 = vmatprep.subr.mxu0 0.0
  %414 = vmatpush1.msra.mxu0 0.0
  %415 = vmatprep.subr.mxu0 0.0
  %416 = vmatpush1.msra.mxu0 0.0
  %417 = vmatprep.subr.mxu0 0.0
  %418 = vmatpush1.msra.mxu0 0.0
  %419 = vmatprep.subr.mxu0 0.0
  %420 = vmatpush1.msra.mxu0 0.0
  %421 = vmatprep.subr.mxu0 0.0
  %422 = vmatpush1.msra.mxu0 0.0
  %423 = vmatprep.subr.mxu0 0.0
  %424 = vmatpush1.msra.mxu0 0.0
  %425 = vmatprep.subr.mxu0 0.0
  %426 = vmatpush1.msra.mxu0 0.0
  %427 = vmatprep.subr.mxu0 0.0
  %428 = vmatpush1.msra.mxu0 0.0
  %429 = vmatprep.subr.mxu0 0.0
  %430 = vmatpush1.msra.mxu0 0.0
  %431 = vmatprep.subr.mxu0 0.0
  %432 = vmatpush1.msra.mxu0 0.0
  %433 = vmatprep.subr.mxu0 0.0
  %434 = vmatpush1.msra.mxu0 0.0
  %435 = vmatprep.subr.mxu0 0.0
  %436 = vmatpush1.msra.mxu0 0.0
  %437 = vmatprep.subr.mxu0 0.0
  %438 = vmatpush1.msra.mxu0 0.0
  %439 = vmatprep.subr.mxu0 0.0
  %440 = vmatpush1.msra.mxu0 0.0
  %441 = vmatprep.mubr.f32.mxu0 0.0
  %442 = vmatmul.mubr.f32.gmra.mrb[0].mxu0 %v359
  %v443 = vpop.f32.mrb[0].mxu0
  %v444 = vadd.f32 0.0, %v443
  %v445 = vpop.f32.mrb[0].mxu0
  %446 = vmatprep.mubr.f32.mxu0 0.0
  %447 = vmatmul.mubr.f32.gmra.mrb[0].mxu0 %v360
  %v448 = vpop.f32.mrb[0].mxu0
  %v449 = vadd.f32 0.0, %v448
  %v450 = vpop.f32.mrb[0].mxu0
  %451 = vdwg.mxu0
  %452 = vmatprep.subr.mxu0 0.0
  %453 = vmatpush1.msra.mxu0 %v343
  %454 = vmatprep.subr.mxu0 0.0
  %455 = vmatpush1.msra.mxu0 %v344
  %456 = vmatprep.subr.mxu0 0.0
  %457 = vmatpush1.msra.mxu0 %v345
  %458 = vmatprep.subr.mxu0 0.0
  %459 = vmatpush1.msra.mxu0 %v346
  %460 = vmatprep.subr.mxu0 0.0
  %461 = vmatpush1.msra.mxu0 %v347
  %462 = vmatprep.subr.mxu0 0.0
  %463 = vmatpush1.msra.mxu0 %v348
  %464 = vmatprep.subr.mxu0 0.0
  %465 = vmatpush1.msra.mxu0 %v349
  %466 = vmatprep.subr.mxu0 0.0
  %467 = vmatpush1.msra.mxu0 %v350
  %468 = vmatprep.subr.mxu0 0.0
  %469 = vmatpush1.msra.mxu0 %v351
  %470 = vmatprep.subr.mxu0 0.0
  %471 = vmatpush1.msra.mxu0 %v352
  %472 = vmatprep.subr.mxu0 0.0
  %473 = vmatpush1.msra.mxu0 %v353
  %474 = vmatprep.subr.mxu0 0.0
  %475 = vmatpush1.msra.mxu0 %v354
  %476 = vmatprep.subr.mxu0 0.0
  %477 = vmatpush1.msra.mxu0 %v355
  %478 = vmatprep.subr.mxu0 0.0
  %479 = vmatpush1.msra.mxu0 %v356
  %480 = vmatprep.subr.mxu0 0.0
  %481 = vmatpush1.msra.mxu0 %v357
  %482 = vmatprep.subr.mxu0 0.0
  %483 = vmatpush1.msra.mxu0 %v358
  %484 = vmatprep.subr.mxu0 0.0
  %485 = vmatpush1.msra.mxu0 0.0
  %486 = vmatprep.subr.mxu0 0.0
  %487 = vmatpush1.msra.mxu0 0.0
  %488 = vmatprep.subr.mxu0 0.0
  %489 = vmatpush1.msra.mxu0 0.0
  %490 = vmatprep.subr.mxu0 0.0
  %491 = vmatpush1.msra.mxu0 0.0
  %492 = vmatprep.subr.mxu0 0.0
  %493 = vmatpush1.msra.mxu0 0.0
  %494 = vmatprep.subr.mxu0 0.0
  %495 = vmatpush1.msra.mxu0 0.0
  %496 = vmatprep.subr.mxu0 0.0
  %497 = vmatpush1.msra.mxu0 0.0
  %498 = vmatprep.subr.mxu0 0.0
  %499 = vmatpush1.msra.mxu0 0.0
  %500 = vmatprep.subr.mxu0 0.0
  %501 = vmatpush1.msra.mxu0 0.0
  %502 = vmatprep.subr.mxu0 0.0
  %503 = vmatpush1.msra.mxu0 0.0
  %504 = vmatprep.subr.mxu0 0.0
  %505 = vmatpush1.msra.mxu0 0.0
  %506 = vmatprep.subr.mxu0 0.0
  %507 = vmatpush1.msra.mxu0 0.0
  %508 = vmatprep.subr.mxu0 0.0
  %509 = vmatpush1.msra.mxu0 0.0
  %510 = vmatprep.subr.mxu0 0.0
  %511 = vmatpush1.msra.mxu0 0.0
  %512 = vmatprep.subr.mxu0 0.0
  %513 = vmatpush1.msra.mxu0 0.0
  %514 = vmatprep.subr.mxu0 0.0
  %515 = vmatpush1.msra.mxu0 0.0
  %516 = vmatprep.mubr.f32.mxu0 0.0
  %517 = vmatmul.mubr.f32.gmra.mrb[0].mxu0 %v341
  %v518 = vpop.f32.mrb[0].mxu0
  %v519 = vadd.f32 %v444, %v518
  %v520 = vpop.f32.mrb[0].mxu0
  %521 = vmatprep.mubr.f32.mxu0 0.0
  %522 = vmatmul.mubr.f32.gmra.mrb[0].mxu0 %v342
  %v523 = vpop.f32.mrb[0].mxu0
  %v524 = vadd.f32 %v449, %v523
  %v525 = vpop.f32.mrb[0].mxu0
  %526 = vdwg.mxu0
  %v527 = vld [vmem:[#allocation2 + $0x2] sm:$0xff]
  %v528 = vld [vmem:[#allocation2 + $0xa] sm:$0xff]
  %v529 = vld [vmem:[%s6] sm:$0xff]
  %v530 = vld [vmem:[%s6 + $0x8] sm:$0xff]
  %v531 = vld [vmem:[%s6 + $0x10] sm:$0xff]
  %v532 = vld [vmem:[%s6 + $0x18] sm:$0xff]
  %v533 = vld [vmem:[%s6 + $0x20] sm:$0xff]
  %v534 = vld [vmem:[%s6 + $0x28] sm:$0xff]
  %v535 = vld [vmem:[%s6 + $0x30] sm:$0xff]
  %v536 = vld [vmem:[%s6 + $0x38] sm:$0xff]
  %v537 = vld [vmem:[%s6 + $0x40] sm:$0xff]
  %v538 = vld [vmem:[%s6 + $0x48] sm:$0xff]
  %v539 = vld [vmem:[%s6 + $0x50] sm:$0xff]
  %v540 = vld [vmem:[%s6 + $0x58] sm:$0xff]
  %v541 = vld [vmem:[%s6 + $0x60] sm:$0xff]
  %v542 = vld [vmem:[%s6 + $0x68] sm:$0xff]
  %v543 = vld [vmem:[%s6 + $0x70] sm:$0xff]
  %v544 = vld [vmem:[%s6 + $0x78] sm:$0xff]
  %545 = vmatprep.subr.mxu0 0.0
  %546 = vmatpush1.msra.mxu0 %v529
  %547 = vmatprep.subr.mxu0 0.0
  %548 = vmatpush1.msra.mxu0 %v530
  %549 = vmatprep.subr.mxu0 0.0
  %550 = vmatpush1.msra.mxu0 %v531
  %551 = vmatprep.subr.mxu0 0.0
  %552 = vmatpush1.msra.mxu0 %v532
  %553 = vmatprep.subr.mxu0 0.0
  %554 = vmatpush1.msra.mxu0 %v533
  %555 = vmatprep.subr.mxu0 0.0
  %556 = vmatpush1.msra.mxu0 %v534
  %557 = vmatprep.subr.mxu0 0.0
  %558 = vmatpush1.msra.mxu0 %v535
  %559 = vmatprep.subr.mxu0 0.0
  %560 = vmatpush1.msra.mxu0 %v536
  %561 = vmatprep.subr.mxu0 0.0
  %562 = vmatpush1.msra.mxu0 %v537
  %563 = vmatprep.subr.mxu0 0.0
  %564 = vmatpush1.msra.mxu0 %v538
  %565 = vmatprep.subr.mxu0 0.0
  %566 = vmatpush1.msra.mxu0 %v539
  %567 = vmatprep.subr.mxu0 0.0
  %568 = vmatpush1.msra.mxu0 %v540
  %569 = vmatprep.subr.mxu0 0.0
  %570 = vmatpush1.msra.mxu0 %v541
  %571 = vmatprep.subr.mxu0 0.0
  %572 = vmatpush1.msra.mxu0 %v542
  %573 = vmatprep.subr.mxu0 0.0
  %574 = vmatpush1.msra.mxu0 %v543
  %575 = vmatprep.subr.mxu0 0.0
  %576 = vmatpush1.msra.mxu0 %v544
  %577 = vmatprep.subr.mxu0 0.0
  %578 = vmatpush1.msra.mxu0 0.0
  %579 = vmatprep.subr.mxu0 0.0
  %580 = vmatpush1.msra.mxu0 0.0
  %581 = vmatprep.subr.mxu0 0.0
  %582 = vmatpush1.msra.mxu0 0.0
  %583 = vmatprep.subr.mxu0 0.0
  %584 = vmatpush1.msra.mxu0 0.0
  %585 = vmatprep.subr.mxu0 0.0
  %586 = vmatpush1.msra.mxu0 0.0
  %587 = vmatprep.subr.mxu0 0.0
  %588 = vmatpush1.msra.mxu0 0.0
  %589 = vmatprep.subr.mxu0 0.0
  %590 = vmatpush1.msra.mxu0 0.0
  %591 = vmatprep.subr.mxu0 0.0
  %592 = vmatpush1.msra.mxu0 0.0
  %593 = vmatprep.subr.mxu0 0.0
  %594 = vmatpush1.msra.mxu0 0.0
  %595 = vmatprep.subr.mxu0 0.0
  %596 = vmatpush1.msra.mxu0 0.0
  %597 = vmatprep.subr.mxu0 0.0
  %598 = vmatpush1.msra.mxu0 0.0
  %599 = vmatprep.subr.mxu0 0.0
  %600 = vmatpush1.msra.mxu0 0.0
  %601 = vmatprep.subr.mxu0 0.0
  %602 = vmatpush1.msra.mxu0 0.0
  %603 = vmatprep.subr.mxu0 0.0
  %604 = vmatpush1.msra.mxu0 0.0
  %605 = vmatprep.subr.mxu0 0.0
  %606 = vmatpush1.msra.mxu0 0.0
  %607 = vmatprep.subr.mxu0 0.0
  %608 = vmatpush1.msra.mxu0 0.0
  %609 = vmatprep.mubr.f32.mxu0 0.0
  %610 = vmatmul.mubr.f32.gmra.mrb[0].mxu0 %v527
  %v611 = vpop.f32.mrb[0].mxu0
  %v612 = vadd.f32 0.0, %v611
  %v613 = vpop.f32.mrb[0].mxu0
  %614 = vmatprep.mubr.f32.mxu0 0.0
  %615 = vmatmul.mubr.f32.gmra.mrb[0].mxu0 %v528
  %v616 = vpop.f32.mrb[0].mxu0
  %v617 = vadd.f32 0.0, %v616
  %v618 = vpop.f32.mrb[0].mxu0
  %619 = vdwg.mxu0
  %v620 = vadd.f32 %v519, %v612
  %v621 = vadd.f32 %v524, %v617
  %v622 = vld [vmem:[%s8] sm:$0x1]
  %v624 = vlaneseq
  %v625 = vshrl.u32 %v624, 7
  %v626 = vsub.s32 0, %v625
  %v627 = vrot.slane %v622, %v626
  %v629 = vadd.f32 %v620, %v627
  %v630 = vadd.f32 %v621, %v627
  %v631 = vmul.f32 %v629, %v629
  %v632 = vmul.f32 %v630, %v630
  %v633 = vadd.f32 %v629, %v630
  %v634 = vrot.slane %v633, 4
  %v635 = vadd.f32 %v633, %v634
  %v636 = vrot.slane %v635, 2
  %v637 = vadd.f32 %v635, %v636
  %v638 = vrot.slane %v637, 1
  %v639 = vadd.f32 %v637, %v638
  %v640 = vadd.f32 %v631, %v632
  %v641 = vrot.slane %v640, 4
  %v642 = vadd.f32 %v640, %v641
  %v643 = vrot.slane %v642, 2
  %v644 = vadd.f32 %v642, %v643
  %v645 = vrot.slane %v644, 1
  %v646 = vadd.f32 %v644, %v645
  %vm647 = vcmask 1040384
  %v648 = vsel %vm647, %v639, %v646
  %650 = vrot.lane.b32.xlu0 %v648, 120
  %v651 = vpop.permute.xlu0 %650
  %653 = vrot.lane.b32.xlu0 %v648, 112
  %v654 = vpop.permute.xlu0 %653
  %656 = vrot.lane.b32.xlu0 %v648, 104
  %v657 = vpop.permute.xlu0 %656
  %659 = vrot.lane.b32.xlu0 %v648, 96
  %v660 = vpop.permute.xlu0 %659
  %662 = vrot.lane.b32.xlu0 %v648, 88
  %v663 = vpop.permute.xlu0 %662
  %665 = vrot.lane.b32.xlu0 %v648, 80
  %v666 = vpop.permute.xlu0 %665
  %668 = vrot.lane.b32.xlu0 %v648, 72
  %v669 = vpop.permute.xlu0 %668
  %671 = vrot.lane.b32.xlu0 %v648, 64
  %v672 = vpop.permute.xlu0 %671
  %674 = vrot.lane.b32.xlu0 %v648, 56
  %v675 = vpop.permute.xlu0 %674
  %677 = vrot.lane.b32.xlu0 %v648, 48
  %v678 = vpop.permute.xlu0 %677
  %680 = vrot.lane.b32.xlu0 %v648, 40
  %v681 = vpop.permute.xlu0 %680
  %683 = vrot.lane.b32.xlu0 %v648, 32
  %v684 = vpop.permute.xlu0 %683
  %686 = vrot.lane.b32.xlu0 %v648, 24
  %v687 = vpop.permute.xlu0 %686
  %689 = vrot.lane.b32.xlu0 %v648, 16
  %v690 = vpop.permute.xlu0 %689
  %692 = vrot.lane.b32.xlu0 %v648, 8
  %v693 = vpop.permute.xlu0 %692
  %v695 = vcombine.low %v648, %v654
  %v697 = vunpack.c.l.s4 1983009808
  %v698 = vunpack.c.0.s8 %v697
  %v699 = vlaneseq
  %v700 = vshrl.u32 %v699, 7
  %v701 = vsub.s32 %v698, %v700
  %v702 = vrot.slane %v695, %v701
  %v703 = vcombine.low %v651, %v657
  %v705 = vunpack.c.l.s4 1983009808
  %v706 = vunpack.c.0.s8 %v705
  %v707 = vlaneseq
  %v708 = vshrl.u32 %v707, 7
  %v709 = vsub.s32 %v706, %v708
  %v710 = vrot.slane %v703, %v709
  %v711 = vcombine.low %v660, %v666
  %v713 = vunpack.c.l.s4 1983009808
  %v714 = vunpack.c.0.s8 %v713
  %v715 = vlaneseq
  %v716 = vshrl.u32 %v715, 7
  %v717 = vsub.s32 %v714, %v716
  %v718 = vrot.slane %v711, %v717
  %v719 = vcombine.low %v663, %v669
  %v721 = vunpack.c.l.s4 1983009808
  %v722 = vunpack.c.0.s8 %v721
  %v723 = vlaneseq
  %v724 = vshrl.u32 %v723, 7
  %v725 = vsub.s32 %v722, %v724
  %v726 = vrot.slane %v719, %v725
  %v727 = vcombine.low %v702, %v710
  %v729 = vunpack.c.l.s4 1934713408
  %v730 = vunpack.c.0.s8 %v729
  %v731 = vlaneseq
  %v732 = vshrl.u32 %v731, 7
  %v733 = vsub.s32 %v730, %v732
  %v734 = vrot.slane %v727, %v733
  %v735 = vcombine.low %v718, %v726
  %v737 = vunpack.c.l.s4 1934713408
  %v738 = vunpack.c.0.s8 %v737
  %v739 = vlaneseq
  %v740 = vshrl.u32 %v739, 7
  %v741 = vsub.s32 %v738, %v740
  %v742 = vrot.slane %v735, %v741
  %v743 = vcombine.low %v734, %v742
  %v744 = vcombine.high %v734, %v742
  %v745 = vcombine.low %v672, %v678
  %v747 = vunpack.c.l.s4 1983009808
  %v748 = vunpack.c.0.s8 %v747
  %v749 = vlaneseq
  %v750 = vshrl.u32 %v749, 7
  %v751 = vsub.s32 %v748, %v750
  %v752 = vrot.slane %v745, %v751
  %v753 = vcombine.low %v675, %v681
  %v755 = vunpack.c.l.s4 1983009808
  %v756 = vunpack.c.0.s8 %v755
  %v757 = vlaneseq
  %v758 = vshrl.u32 %v757, 7
  %v759 = vsub.s32 %v756, %v758
  %v760 = vrot.slane %v753, %v759
  %v761 = vcombine.low %v684, %v690
  %v763 = vunpack.c.l.s4 1983009808
  %v764 = vunpack.c.0.s8 %v763
  %v765 = vlaneseq
  %v766 = vshrl.u32 %v765, 7
  %v767 = vsub.s32 %v764, %v766
  %v768 = vrot.slane %v761, %v767
  %v769 = vcombine.low %v687, %v693
  %v771 = vunpack.c.l.s4 1983009808
  %v772 = vunpack.c.0.s8 %v771
  %v773 = vlaneseq
  %v774 = vshrl.u32 %v773, 7
  %v775 = vsub.s32 %v772, %v774
  %v776 = vrot.slane %v769, %v775
  %v777 = vcombine.low %v752, %v760
  %v779 = vunpack.c.l.s4 1934713408
  %v780 = vunpack.c.0.s8 %v779
  %v781 = vlaneseq
  %v782 = vshrl.u32 %v781, 7
  %v783 = vsub.s32 %v780, %v782
  %v784 = vrot.slane %v777, %v783
  %v785 = vcombine.low %v768, %v776
  %v787 = vunpack.c.l.s4 1934713408
  %v788 = vunpack.c.0.s8 %v787
  %v789 = vlaneseq
  %v790 = vshrl.u32 %v789, 7
  %v791 = vsub.s32 %v788, %v790
  %v792 = vrot.slane %v785, %v791
  %v793 = vcombine.low %v784, %v792
  %v794 = vcombine.high %v784, %v792
  %vm795 = vcmask 64512
  %v796 = vsel %vm795, %v743, 0.0
  %v797 = vsel %vm795, %v793, 0.0
  %v798 = vadd.f32 %v796, %v797
  %v799 = vrot.slane %v798, 4
  %v800 = vadd.f32 %v798, %v799
  %v801 = vrot.slane %v800, 2
  %v802 = vadd.f32 %v800, %v801
  %v803 = vrot.slane %v802, 1
  %v804 = vadd.f32 %v802, %v803
  %v805 = vsel %vm795, %v744, 0.0
  %v806 = vsel %vm795, %v794, 0.0
  %v807 = vadd.f32 %v805, %v806
  %v808 = vrot.slane %v807, 4
  %v809 = vadd.f32 %v807, %v808
  %v810 = vrot.slane %v809, 2
  %v811 = vadd.f32 %v809, %v810
  %v812 = vrot.slane %v811, 1
  %v813 = vadd.f32 %v811, %v812
  %814 = vadd.xlane.f32.xlu0 %v796
  %v815 = vpop.xlane.xlu0 %814
  %816 = vadd.xlane.f32.xlu0 %v797
  %v817 = vpop.xlane.xlu0 %816
  %818 = vadd.xlane.f32.xlu0 %v805
  %v819 = vpop.xlane.xlu0 %818
  %820 = vadd.xlane.f32.xlu0 %v806
  %v821 = vpop.xlane.xlu0 %820
  %v822 = vmul.f32 %v804, 0.00390625
  %v823 = vmul.f32 %v804, %v822
  %v824 = vsub.f32 %v813, %v823
  %v825 = vmul.f32 %v824, 0.003921569
  %v826 = vmul.f32 %v815, 0.0078125
  %v827 = vmul.f32 %v817, 0.0078125
  %v828 = vmul.f32 %v815, %v826
  %v829 = vmul.f32 %v817, %v827
  %v830 = vsub.f32 %v819, %v828
  %v831 = vsub.f32 %v821, %v829
  %v832 = vmul.f32 %v830, 0.007874016
  %v833 = vmul.f32 %v831, 0.007874016
  %v836 = vlaneseq
  %v837 = vand.u32 %v836, 127
  %v838 = vadd.s32 %v837, 4294967288
  %v839 = vlaneseq
  %v840 = vshrl.u32 %v839, 7
  %v841 = vsub.s32 %v838, %v840
  %v842 = vrot.slane %v826, %v841
  %v843 = vadd.s32 %v837, 4294967280
  %v844 = vlaneseq
  %v845 = vshrl.u32 %v844, 7
  %v846 = vsub.s32 %v843, %v845
  %v847 = vrot.slane %v827, %v846
  %vm848 = vcmask 195712
  %v849 = vsel %vm848, %v847, %v842
  %v851 = vsel %vm795, %v822, %v849
  %v854 = vlaneseq
  %v855 = vshrl.u32 %v854, 7
  %v856 = vsub.s32 %v838, %v855
  %v857 = vrot.slane %v832, %v856
  %v858 = vlaneseq
  %v859 = vshrl.u32 %v858, 7
  %v860 = vsub.s32 %v843, %v859
  %v861 = vrot.slane %v833, %v860
  %v862 = vsel %vm848, %v861, %v857
  %v864 = vsel %vm795, %v825, %v862
  %v865 = vmax.f32 %v864, 0.0
  %v866 = vrsqrt.pop %v865
  %v867 = vmul.f32 %v865, %v866
  %vm868 = vcmp.eq.f32.partialorder %v865, inf
  %v869 = vsel %vm868, %v865, %v867
  %vm870 = vcmp.eq.f32.partialorder %v865, 0.0
  %v871 = vand.u32 %v865, 2147483648
  %v872 = vsel %vm870, %v871, %v869
  %873 = vadd.xlane.f32.xlu0 %v629
  %v874 = vpop.xlane.xlu0 %873
  %875 = vadd.xlane.f32.xlu0 %v630
  %v876 = vpop.xlane.xlu0 %875
  %877 = vadd.xlane.f32.xlu0 %v631
  %v878 = vpop.xlane.xlu0 %877
  %879 = vadd.xlane.f32.xlu0 %v632
  %v880 = vpop.xlane.xlu0 %879
  %v881 = vmul.f32 %v874, 0.0078125
  %v882 = vmul.f32 %v876, 0.0078125
  %v883 = vmul.f32 %v874, %v881
  %v884 = vmul.f32 %v876, %v882
  %v885 = vsub.f32 %v878, %v883
  %v886 = vsub.f32 %v880, %v884
  %v887 = vmul.f32 %v885, 0.007874016
  %v888 = vmul.f32 %v886, 0.007874016
  %v889 = vmax.f32 %v887, 0.0
  %v890 = vmax.f32 %v888, 0.0
  %v891 = vrsqrt.pop %v889
  %v892 = vmul.f32 %v889, %v891
  %vm893 = vcmp.eq.f32.partialorder %v889, inf
  %v894 = vsel %vm893, %v889, %v892
  %vm895 = vcmp.eq.f32.partialorder %v889, 0.0
  %v896 = vand.u32 %v889, 2147483648
  %v897 = vsel %vm895, %v896, %v894
  %v898 = vrsqrt.pop %v890
  %v899 = vmul.f32 %v890, %v898
  %vm900 = vcmp.eq.f32.partialorder %v890, inf
  %v901 = vsel %vm900, %v890, %v899
  %vm902 = vcmp.eq.f32.partialorder %v890, 0.0
  %v903 = vand.u32 %v890, 2147483648
  %v904 = vsel %vm902, %v903, %v901
  %906 = vrot.lane.b32.xlu0 %v872, 24
  %v907 = vpop.permute.xlu0 %906
  %vm909 = vcmask 195584
  %v910 = vsel %vm909, %v851, %v907
  %v911 = vld [vmem:[%s9] sm:$0xff]
  %v912 = vld [vmem:[%s9 + $0x8] sm:$0xff]
  %v913 = vld [vmem:[%s9 + $0x10] sm:$0xff]
  %v914 = vld [vmem:[%s9 + $0x18] sm:$0xff]
  %v915 = vld [vmem:[%s9 + $0x20] sm:$0xff]
  %v916 = vld [vmem:[%s9 + $0x28] sm:$0xff]
  %vm917 = vcmask 392192
  %v919 = vsel %vm917, %v910, 0
  %921 = vmatprep.subr.mxu0 0.0
  %922 = vmatpush1.msra.mxu0 %v911
  %923 = vmatprep.subr.mxu0 0.0
  %924 = vmatpush1.msra.mxu0 %v912
  %925 = vmatprep.subr.mxu0 0.0
  %926 = vmatpush1.msra.mxu0 %v913
  %927 = vmatprep.subr.mxu0 0.0
  %928 = vmatpush1.msra.mxu0 %v914
  %929 = vmatprep.subr.mxu0 0.0
  %930 = vmatpush1.msra.mxu0 %v915
  %931 = vmatprep.subr.mxu0 0.0
  %932 = vmatpush1.msra.mxu0 %v916
  %933 = vmatprep.subr.mxu0 0.0
  %934 = vmatpush1.msra.mxu0 0.0
  %935 = vmatprep.subr.mxu0 0.0
  %936 = vmatpush1.msra.mxu0 0.0
  %937 = vmatprep.subr.mxu0 0.0
  %938 = vmatpush1.msra.mxu0 0.0
  %939 = vmatprep.subr.mxu0 0.0
  %940 = vmatpush1.msra.mxu0 0.0
  %941 = vmatprep.subr.mxu0 0.0
  %942 = vmatpush1.msra.mxu0 0.0
  %943 = vmatprep.subr.mxu0 0.0
  %944 = vmatpush1.msra.mxu0 0.0
  %945 = vmatprep.subr.mxu0 0.0
  %946 = vmatpush1.msra.mxu0 0.0
  %947 = vmatprep.subr.mxu0 0.0
  %948 = vmatpush1.msra.mxu0 0.0
  %949 = vmatprep.subr.mxu0 0.0
  %950 = vmatpush1.msra.mxu0 0.0
  %951 = vmatprep.subr.mxu0 0.0
  %952 = vmatpush1.msra.mxu0 0.0
  %953 = vmatprep.subr.mxu0 0.0
  %954 = vmatpush1.msra.mxu0 0.0
  %955 = vmatprep.subr.mxu0 0.0
  %956 = vmatpush1.msra.mxu0 0.0
  %957 = vmatprep.subr.mxu0 0.0
  %958 = vmatpush1.msra.mxu0 0.0
  %959 = vmatprep.subr.mxu0 0.0
  %960 = vmatpush1.msra.mxu0 0.0
  %961 = vmatprep.subr.mxu0 0.0
  %962 = vmatpush1.msra.mxu0 0.0
  %963 = vmatprep.subr.mxu0 0.0
  %964 = vmatpush1.msra.mxu0 0.0
  %965 = vmatprep.subr.mxu0 0.0
  %966 = vmatpush1.msra.mxu0 0.0
  %967 = vmatprep.subr.mxu0 0.0
  %968 = vmatpush1.msra.mxu0 0.0
  %969 = vmatprep.subr.mxu0 0.0
  %970 = vmatpush1.msra.mxu0 0.0
  %971 = vmatprep.subr.mxu0 0.0
  %972 = vmatpush1.msra.mxu0 0.0
  %973 = vmatprep.subr.mxu0 0.0
  %974 = vmatpush1.msra.mxu0 0.0
  %975 = vmatprep.subr.mxu0 0.0
  %976 = vmatpush1.msra.mxu0 0.0
  %977 = vmatprep.subr.mxu0 0.0
  %978 = vmatpush1.msra.mxu0 0.0
  %979 = vmatprep.subr.mxu0 0.0
  %980 = vmatpush1.msra.mxu0 0.0
  %981 = vmatprep.subr.mxu0 0.0
  %982 = vmatpush1.msra.mxu0 0.0
  %983 = vmatprep.subr.mxu0 0.0
  %984 = vmatpush1.msra.mxu0 0.0
  %985 = vmatprep.mubr.f32.mxu0 0.0
  %986 = vmatmul.mubr.f32.gmra.mrb[0].mxu0 %v919
  %v987 = vpop.f32.mrb[0].mxu0
  %v988 = vadd.f32 0.0, %v987
  %v989 = vpop.f32.mrb[0].mxu0
  %990 = vdwg.mxu0
  %v991 = vsub.f32 0.0, %v988
  %v992 = vmul.f32 %v991, 1.442695
  %v993 = vpow.pop %v992
  %v994 = vadd.f32 %v993, 1.0
  %v995 = vrcp.pop %v994
  %v996 = vmul.f32 1.0, %v995
  %v997 = vld [vmem:[%s10] sm:$0xff]
  %v998 = vld [vmem:[%s10 + $0x8] sm:$0xff]
  %v999 = vld [vmem:[%s10 + $0x10] sm:$0xff]
  %v1001 = vsel %vm909, %v996, 0
  %1003 = vmatprep.subr.mxu0 0.0
  %1004 = vmatpush1.msra.mxu0 %v997
  %1005 = vmatprep.subr.mxu0 0.0
  %1006 = vmatpush1.msra.mxu0 %v998
  %1007 = vmatprep.subr.mxu0 0.0
  %1008 = vmatpush1.msra.mxu0 %v999
  %1009 = vmatprep.subr.mxu0 0.0
  %1010 = vmatpush1.msra.mxu0 0.0
  %1011 = vmatprep.subr.mxu0 0.0
  %1012 = vmatpush1.msra.mxu0 0.0
  %1013 = vmatprep.subr.mxu0 0.0
  %1014 = vmatpush1.msra.mxu0 0.0
  %1015 = vmatprep.subr.mxu0 0.0
  %1016 = vmatpush1.msra.mxu0 0.0
  %1017 = vmatprep.subr.mxu0 0.0
  %1018 = vmatpush1.msra.mxu0 0.0
  %1019 = vmatprep.subr.mxu0 0.0
  %1020 = vmatpush1.msra.mxu0 0.0
  %1021 = vmatprep.subr.mxu0 0.0
  %1022 = vmatpush1.msra.mxu0 0.0
  %1023 = vmatprep.subr.mxu0 0.0
  %1024 = vmatpush1.msra.mxu0 0.0
  %1025 = vmatprep.subr.mxu0 0.0
  %1026 = vmatpush1.msra.mxu0 0.0
  %1027 = vmatprep.subr.mxu0 0.0
  %1028 = vmatpush1.msra.mxu0 0.0
  %1029 = vmatprep.subr.mxu0 0.0
  %1030 = vmatpush1.msra.mxu0 0.0
  %1031 = vmatprep.subr.mxu0 0.0
  %1032 = vmatpush1.msra.mxu0 0.0
  %1033 = vmatprep.subr.mxu0 0.0
  %1034 = vmatpush1.msra.mxu0 0.0
  %1035 = vmatprep.subr.mxu0 0.0
  %1036 = vmatpush1.msra.mxu0 0.0
  %1037 = vmatprep.subr.mxu0 0.0
  %1038 = vmatpush1.msra.mxu0 0.0
  %1039 = vmatprep.subr.mxu0 0.0
  %1040 = vmatpush1.msra.mxu0 0.0
  %1041 = vmatprep.subr.mxu0 0.0
  %1042 = vmatpush1.msra.mxu0 0.0
  %1043 = vmatprep.subr.mxu0 0.0
  %1044 = vmatpush1.msra.mxu0 0.0
  %1045 = vmatprep.subr.mxu0 0.0
  %1046 = vmatpush1.msra.mxu0 0.0
  %1047 = vmatprep.subr.mxu0 0.0
  %1048 = vmatpush1.msra.mxu0 0.0
  %1049 = vmatprep.subr.mxu0 0.0
  %1050 = vmatpush1.msra.mxu0 0.0
  %1051 = vmatprep.subr.mxu0 0.0
  %1052 = vmatpush1.msra.mxu0 0.0
  %1053 = vmatprep.subr.mxu0 0.0
  %1054 = vmatpush1.msra.mxu0 0.0
  %1055 = vmatprep.subr.mxu0 0.0
  %1056 = vmatpush1.msra.mxu0 0.0
  %1057 = vmatprep.subr.mxu0 0.0
  %1058 = vmatpush1.msra.mxu0 0.0
  %1059 = vmatprep.subr.mxu0 0.0
  %1060 = vmatpush1.msra.mxu0 0.0
  %1061 = vmatprep.subr.mxu0 0.0
  %1062 = vmatpush1.msra.mxu0 0.0
  %1063 = vmatprep.subr.mxu0 0.0
  %1064 = vmatpush1.msra.mxu0 0.0
  %1065 = vmatprep.subr.mxu0 0.0
  %1066 = vmatpush1.msra.mxu0 0.0
  %1067 = vmatprep.mubr.f32.mxu0 0.0
  %1068 = vmatmul.mubr.f32.gmra.mrb[0].mxu0 %v1001
  %v1069 = vpop.f32.mrb[0].mxu0
  %v1070 = vadd.f32 0.0, %v1069
  %v1071 = vpop.f32.mrb[0].mxu0
  %1072 = vdwg.mxu0
  %v1073 = vld [vmem:[%s11] sm:$0xff]
  %v1074 = vld [vmem:[%s11 + $0x8] sm:$0xff]
  %vm1075 = vcmask 261120
  %v1077 = vsel %vm1075, %v1073, 0
  %v1080 = vsel %vm1075, %v1074, 0
  %1082 = vmatprep.subr.mxu0 0.0
  %1083 = vmatpush1.msra.mxu0 %v881
  %1084 = vmatprep.subr.mxu0 0.0
  %1085 = vmatpush1.msra.mxu0 %v882
  %1086 = vmatprep.subr.mxu0 0.0
  %1087 = vmatpush1.msra.mxu0 %v897
  %1088 = vmatprep.subr.mxu0 0.0
  %1089 = vmatpush1.msra.mxu0 %v904
  %1090 = vmatprep.subr.mxu0 0.0
  %1091 = vmatpush1.msra.mxu0 0.0
  %1092 = vmatprep.subr.mxu0 0.0
  %1093 = vmatpush1.msra.mxu0 0.0
  %1094 = vmatprep.subr.mxu0 0.0
  %1095 = vmatpush1.msra.mxu0 0.0
  %1096 = vmatprep.subr.mxu0 0.0
  %1097 = vmatpush1.msra.mxu0 0.0
  %1098 = vmatprep.subr.mxu0 0.0
  %1099 = vmatpush1.msra.mxu0 0.0
  %1100 = vmatprep.subr.mxu0 0.0
  %1101 = vmatpush1.msra.mxu0 0.0
  %1102 = vmatprep.subr.mxu0 0.0
  %1103 = vmatpush1.msra.mxu0 0.0
  %1104 = vmatprep.subr.mxu0 0.0
  %1105 = vmatpush1.msra.mxu0 0.0
  %1106 = vmatprep.subr.mxu0 0.0
  %1107 = vmatpush1.msra.mxu0 0.0
  %1108 = vmatprep.subr.mxu0 0.0
  %1109 = vmatpush1.msra.mxu0 0.0
  %1110 = vmatprep.subr.mxu0 0.0
  %1111 = vmatpush1.msra.mxu0 0.0
  %1112 = vmatprep.subr.mxu0 0.0
  %1113 = vmatpush1.msra.mxu0 0.0
  %1114 = vmatprep.subr.mxu0 0.0
  %1115 = vmatpush1.msra.mxu0 0.0
  %1116 = vmatprep.subr.mxu0 0.0
  %1117 = vmatpush1.msra.mxu0 0.0
  %1118 = vmatprep.subr.mxu0 0.0
  %1119 = vmatpush1.msra.mxu0 0.0
  %1120 = vmatprep.subr.mxu0 0.0
  %1121 = vmatpush1.msra.mxu0 0.0
  %1122 = vmatprep.subr.mxu0 0.0
  %1123 = vmatpush1.msra.mxu0 0.0
  %1124 = vmatprep.subr.mxu0 0.0
  %1125 = vmatpush1.msra.mxu0 0.0
  %1126 = vmatprep.subr.mxu0 0.0
  %1127 = vmatpush1.msra.mxu0 0.0
  %1128 = vmatprep.subr.mxu0 0.0
  %1129 = vmatpush1.msra.mxu0 0.0
  %1130 = vmatprep.subr.mxu0 0.0
  %1131 = vmatpush1.msra.mxu0 0.0
  %1132 = vmatprep.subr.mxu0 0.0
  %1133 = vmatpush1.msra.mxu0 0.0
  %1134 = vmatprep.subr.mxu0 0.0
  %1135 = vmatpush1.msra.mxu0 0.0
  %1136 = vmatprep.subr.mxu0 0.0
  %1137 = vmatpush1.msra.mxu0 0.0
  %1138 = vmatprep.subr.mxu0 0.0
  %1139 = vmatpush1.msra.mxu0 0.0
  %1140 = vmatprep.subr.mxu0 0.0
  %1141 = vmatpush1.msra.mxu0 0.0
  %1142 = vmatprep.subr.mxu0 0.0
  %1143 = vmatpush1.msra.mxu0 0.0
  %1144 = vmatprep.subr.mxu0 0.0
  %1145 = vmatpush1.msra.mxu0 0.0
  %1146 = vmatprep.mubr.f32.mxu0 0.0
  %1147 = vmatmul.mubr.f32.gmra.mrb[0].mxu0 %v1077
  %v1148 = vpop.f32.mrb[0].mxu0
  %v1149 = vadd.f32 0.0, %v1148
  %v1150 = vpop.f32.mrb[0].mxu0
  %1151 = vmatprep.mubr.f32.mxu0 0.0
  %1152 = vmatmul.mubr.f32.gmra.mrb[0].mxu0 %v1080
  %v1153 = vpop.f32.mrb[0].mxu0
  %v1154 = vadd.f32 0.0, %v1153
  %v1155 = vpop.f32.mrb[0].mxu0
  %1156 = vdwg.mxu0
  %v1157 = vsub.f32 0.0, %v1149
  %v1158 = vsub.f32 0.0, %v1154
  %v1159 = vmul.f32 %v1157, 1.442695
  %v1160 = vpow.pop %v1159
  %v1161 = vmul.f32 %v1158, 1.442695
  %v1162 = vpow.pop %v1161
  %v1163 = vadd.f32 %v1160, 1.0
  %v1164 = vadd.f32 %v1162, 1.0
  %v1165 = vrcp.pop %v1163
  %v1166 = vmul.f32 1.0, %v1165
  %v1167 = vrcp.pop %v1164
  %v1168 = vmul.f32 1.0, %v1167
  %v1169 = vlaneseq
  %v1170 = vshrl.u32 %v1169, 7
  %v1171 = vsub.s32 0, %v1170
  %v1172 = vrot.slane %v1070, %v1171
  %1174 = vset.pattern.permute.xlu0 0
  %1175 = vperm.xlu0 %1174, %v1166
  %v1176 = vpop.permute.xlu0 %1175
  %1179 = vset.pattern.permute.xlu0 0
  %1180 = vperm.xlu0 %1179, %v1168
  %v1181 = vpop.permute.xlu0 %1180
  %v1183 = vadd.f32 %v1172, %v1176
  %v1184 = vadd.f32 %v1172, %v1181
  %v1185 = vmul.f32 %v1183, 0.33333334
  %v1186 = vmul.f32 %v1184, 0.33333334
  %v1187 = vmul.f32 %v629, %v1185
  %v1188 = vmul.f32 %v630, %v1186
  %v1189 = vadd.f32 %v1187, %v43
  %v1190 = vadd.f32 %v1188, %v44
  %v1191 = vmax.f32 %v1189, 0.0
  %v1192 = vmax.f32 %v1190, 0.0
  %1193 = vst [vmem:[%s12] sm:$0xff] %v1191
  %1194 = vst [vmem:[%s12 + $0x8] sm:$0xff] %v1192
  %s1195 = scalar_lea.vmem %s0, 16
  %v1196 = vld [vmem:[%s1195] sm:$0xff]
  %v1197 = vld [vmem:[%s1195 + $0x8] sm:$0xff]
  %1198 = vst [vmem:[#allocation2 + $0x1] sm:$0xff] %v1196
  %1199 = vst [vmem:[#allocation2 + $0x9] sm:$0xff] %v1197
  %v1200 = vld [vmem:[#allocation2] sm:$0xff]
  %v1201 = vld [vmem:[#allocation2 + $0x8] sm:$0xff]
  %v1202 = vld [vmem:[%s1] sm:$0xff]
  %v1203 = vld [vmem:[%s1 + $0x8] sm:$0xff]
  %v1204 = vld [vmem:[%s1 + $0x10] sm:$0xff]
  %v1205 = vld [vmem:[%s1 + $0x18] sm:$0xff]
  %v1206 = vld [vmem:[%s1 + $0x20] sm:$0xff]
  %v1207 = vld [vmem:[%s1 + $0x28] sm:$0xff]
  %v1208 = vld [vmem:[%s1 + $0x30] sm:$0xff]
  %v1209 = vld [vmem:[%s1 + $0x38] sm:$0xff]
  %v1210 = vld [vmem:[%s1 + $0x40] sm:$0xff]
  %v1211 = vld [vmem:[%s1 + $0x48] sm:$0xff]
  %v1212 = vld [vmem:[%s1 + $0x50] sm:$0xff]
  %v1213 = vld [vmem:[%s1 + $0x58] sm:$0xff]
  %v1214 = vld [vmem:[%s1 + $0x60] sm:$0xff]
  %v1215 = vld [vmem:[%s1 + $0x68] sm:$0xff]
  %v1216 = vld [vmem:[%s1 + $0x70] sm:$0xff]
  %v1217 = vld [vmem:[%s1 + $0x78] sm:$0xff]
  %v1218 = vld [vmem:[#allocation2 + $0x1] sm:$0xff]
  %v1219 = vld [vmem:[#allocation2 + $0x9] sm:$0xff]
  %v1220 = vld [vmem:[%s2] sm:$0xff]
  %v1221 = vld [vmem:[%s2 + $0x8] sm:$0xff]
  %v1222 = vld [vmem:[%s2 + $0x10] sm:$0xff]
  %v1223 = vld [vmem:[%s2 + $0x18] sm:$0xff]
  %v1224 = vld [vmem:[%s2 + $0x20] sm:$0xff]
  %v1225 = vld [vmem:[%s2 + $0x28] sm:$0xff]
  %v1226 = vld [vmem:[%s2 + $0x30] sm:$0xff]
  %v1227 = vld [vmem:[%s2 + $0x38] sm:$0xff]
  %v1228 = vld [vmem:[%s2 + $0x40] sm:$0xff]
  %v1229 = vld [vmem:[%s2 + $0x48] sm:$0xff]
  %v1230 = vld [vmem:[%s2 + $0x50] sm:$0xff]
  %v1231 = vld [vmem:[%s2 + $0x58] sm:$0xff]
  %v1232 = vld [vmem:[%s2 + $0x60] sm:$0xff]
  %v1233 = vld [vmem:[%s2 + $0x68] sm:$0xff]
  %v1234 = vld [vmem:[%s2 + $0x70] sm:$0xff]
  %v1235 = vld [vmem:[%s2 + $0x78] sm:$0xff]
  %1236 = vmatprep.subr.mxu0 0.0
  %1237 = vmatpush1.msra.mxu0 %v1220
  %1238 = vmatprep.subr.mxu0 0.0
  %1239 = vmatpush1.msra.mxu0 %v1221
  %1240 = vmatprep.subr.mxu0 0.0
  %1241 = vmatpush1.msra.mxu0 %v1222
  %1242 = vmatprep.subr.mxu0 0.0
  %1243 = vmatpush1.msra.mxu0 %v1223
  %1244 = vmatprep.subr.mxu0 0.0
  %1245 = vmatpush1.msra.mxu0 %v1224
  %1246 = vmatprep.subr.mxu0 0.0
  %1247 = vmatpush1.msra.mxu0 %v1225
  %1248 = vmatprep.subr.mxu0 0.0
  %1249 = vmatpush1.msra.mxu0 %v1226
  %1250 = vmatprep.subr.mxu0 0.0
  %1251 = vmatpush1.msra.mxu0 %v1227
  %1252 = vmatprep.subr.mxu0 0.0
  %1253 = vmatpush1.msra.mxu0 %v1228
  %1254 = vmatprep.subr.mxu0 0.0
  %1255 = vmatpush1.msra.mxu0 %v1229
  %1256 = vmatprep.subr.mxu0 0.0
  %1257 = vmatpush1.msra.mxu0 %v1230
  %1258 = vmatprep.subr.mxu0 0.0
  %1259 = vmatpush1.msra.mxu0 %v1231
  %1260 = vmatprep.subr.mxu0 0.0
  %1261 = vmatpush1.msra.mxu0 %v1232
  %1262 = vmatprep.subr.mxu0 0.0
  %1263 = vmatpush1.msra.mxu0 %v1233
  %1264 = vmatprep.subr.mxu0 0.0
  %1265 = vmatpush1.msra.mxu0 %v1234
  %1266 = vmatprep.subr.mxu0 0.0
  %1267 = vmatpush1.msra.mxu0 %v1235
  %1268 = vmatprep.subr.mxu0 0.0
  %1269 = vmatpush1.msra.mxu0 0.0
  %1270 = vmatprep.subr.mxu0 0.0
  %1271 = vmatpush1.msra.mxu0 0.0
  %1272 = vmatprep.subr.mxu0 0.0
  %1273 = vmatpush1.msra.mxu0 0.0
  %1274 = vmatprep.subr.mxu0 0.0
  %1275 = vmatpush1.msra.mxu0 0.0
  %1276 = vmatprep.subr.mxu0 0.0
  %1277 = vmatpush1.msra.mxu0 0.0
  %1278 = vmatprep.subr.mxu0 0.0
  %1279 = vmatpush1.msra.mxu0 0.0
  %1280 = vmatprep.subr.mxu0 0.0
  %1281 = vmatpush1.msra.mxu0 0.0
  %1282 = vmatprep.subr.mxu0 0.0
  %1283 = vmatpush1.msra.mxu0 0.0
  %1284 = vmatprep.subr.mxu0 0.0
  %1285 = vmatpush1.msra.mxu0 0.0
  %1286 = vmatprep.subr.mxu0 0.0
  %1287 = vmatpush1.msra.mxu0 0.0
  %1288 = vmatprep.subr.mxu0 0.0
  %1289 = vmatpush1.msra.mxu0 0.0
  %1290 = vmatprep.subr.mxu0 0.0
  %1291 = vmatpush1.msra.mxu0 0.0
  %1292 = vmatprep.subr.mxu0 0.0
  %1293 = vmatpush1.msra.mxu0 0.0
  %1294 = vmatprep.subr.mxu0 0.0
  %1295 = vmatpush1.msra.mxu0 0.0
  %1296 = vmatprep.subr.mxu0 0.0
  %1297 = vmatpush1.msra.mxu0 0.0
  %1298 = vmatprep.subr.mxu0 0.0
  %1299 = vmatpush1.msra.mxu0 0.0
  %1300 = vmatprep.mubr.f32.mxu0 0.0
  %1301 = vmatmul.mubr.f32.gmra.mrb[0].mxu0 %v1218
  %v1302 = vpop.f32.mrb[0].mxu0
  %v1303 = vadd.f32 0.0, %v1302
  %v1304 = vpop.f32.mrb[0].mxu0
  %1305 = vmatprep.mubr.f32.mxu0 0.0
  %1306 = vmatmul.mubr.f32.gmra.mrb[0].mxu0 %v1219
  %v1307 = vpop.f32.mrb[0].mxu0
  %v1308 = vadd.f32 0.0, %v1307
  %v1309 = vpop.f32.mrb[0].mxu0
  %1310 = vdwg.mxu0
  %1311 = vmatprep.subr.mxu0 0.0
  %1312 = vmatpush1.msra.mxu0 %v1202
  %1313 = vmatprep.subr.mxu0 0.0
  %1314 = vmatpush1.msra.mxu0 %v1203
  %1315 = vmatprep.subr.mxu0 0.0
  %1316 = vmatpush1.msra.mxu0 %v1204
  %1317 = vmatprep.subr.mxu0 0.0
  %1318 = vmatpush1.msra.mxu0 %v1205
  %1319 = vmatprep.subr.mxu0 0.0
  %1320 = vmatpush1.msra.mxu0 %v1206
  %1321 = vmatprep.subr.mxu0 0.0
  %1322 = vmatpush1.msra.mxu0 %v1207
  %1323 = vmatprep.subr.mxu0 0.0
  %1324 = vmatpush1.msra.mxu0 %v1208
  %1325 = vmatprep.subr.mxu0 0.0
  %1326 = vmatpush1.msra.mxu0 %v1209
  %1327 = vmatprep.subr.mxu0 0.0
  %1328 = vmatpush1.msra.mxu0 %v1210
  %1329 = vmatprep.subr.mxu0 0.0
  %1330 = vmatpush1.msra.mxu0 %v1211
  %1331 = vmatprep.subr.mxu0 0.0
  %1332 = vmatpush1.msra.mxu0 %v1212
  %1333 = vmatprep.subr.mxu0 0.0
  %1334 = vmatpush1.msra.mxu0 %v1213
  %1335 = vmatprep.subr.mxu0 0.0
  %1336 = vmatpush1.msra.mxu0 %v1214
  %1337 = vmatprep.subr.mxu0 0.0
  %1338 = vmatpush1.msra.mxu0 %v1215
  %1339 = vmatprep.subr.mxu0 0.0
  %1340 = vmatpush1.msra.mxu0 %v1216
  %1341 = vmatprep.subr.mxu0 0.0
  %1342 = vmatpush1.msra.mxu0 %v1217
  %1343 = vmatprep.subr.mxu0 0.0
  %1344 = vmatpush1.msra.mxu0 0.0
  %1345 = vmatprep.subr.mxu0 0.0
  %1346 = vmatpush1.msra.mxu0 0.0
  %1347 = vmatprep.subr.mxu0 0.0
  %1348 = vmatpush1.msra.mxu0 0.0
  %1349 = vmatprep.subr.mxu0 0.0
  %1350 = vmatpush1.msra.mxu0 0.0
  %1351 = vmatprep.subr.mxu0 0.0
  %1352 = vmatpush1.msra.mxu0 0.0
  %1353 = vmatprep.subr.mxu0 0.0
  %1354 = vmatpush1.msra.mxu0 0.0
  %1355 = vmatprep.subr.mxu0 0.0
  %1356 = vmatpush1.msra.mxu0 0.0
  %1357 = vmatprep.subr.mxu0 0.0
  %1358 = vmatpush1.msra.mxu0 0.0
  %1359 = vmatprep.subr.mxu0 0.0
  %1360 = vmatpush1.msra.mxu0 0.0
  %1361 = vmatprep.subr.mxu0 0.0
  %1362 = vmatpush1.msra.mxu0 0.0
  %1363 = vmatprep.subr.mxu0 0.0
  %1364 = vmatpush1.msra.mxu0 0.0
  %1365 = vmatprep.subr.mxu0 0.0
  %1366 = vmatpush1.msra.mxu0 0.0
  %1367 = vmatprep.subr.mxu0 0.0
  %1368 = vmatpush1.msra.mxu0 0.0
  %1369 = vmatprep.subr.mxu0 0.0
  %1370 = vmatpush1.msra.mxu0 0.0
  %1371 = vmatprep.subr.mxu0 0.0
  %1372 = vmatpush1.msra.mxu0 0.0
  %1373 = vmatprep.subr.mxu0 0.0
  %1374 = vmatpush1.msra.mxu0 0.0
  %1375 = vmatprep.mubr.f32.mxu0 0.0
  %1376 = vmatmul.mubr.f32.gmra.mrb[0].mxu0 %v1200
  %v1377 = vpop.f32.mrb[0].mxu0
  %v1378 = vadd.f32 %v1303, %v1377
  %v1379 = vpop.f32.mrb[0].mxu0
  %1380 = vmatprep.mubr.f32.mxu0 0.0
  %1381 = vmatmul.mubr.f32.gmra.mrb[0].mxu0 %v1201
  %v1382 = vpop.f32.mrb[0].mxu0
  %v1383 = vadd.f32 %v1308, %v1382
  %v1384 = vpop.f32.mrb[0].mxu0
  %1385 = vdwg.mxu0
  %v1386 = vld [vmem:[#allocation2 + $0x2] sm:$0xff]
  %v1387 = vld [vmem:[#allocation2 + $0xa] sm:$0xff]
  %v1388 = vld [vmem:[%s3] sm:$0xff]
  %v1389 = vld [vmem:[%s3 + $0x8] sm:$0xff]
  %v1390 = vld [vmem:[%s3 + $0x10] sm:$0xff]
  %v1391 = vld [vmem:[%s3 + $0x18] sm:$0xff]
  %v1392 = vld [vmem:[%s3 + $0x20] sm:$0xff]
  %v1393 = vld [vmem:[%s3 + $0x28] sm:$0xff]
  %v1394 = vld [vmem:[%s3 + $0x30] sm:$0xff]
  %v1395 = vld [vmem:[%s3 + $0x38] sm:$0xff]
  %v1396 = vld [vmem:[%s3 + $0x40] sm:$0xff]
  %v1397 = vld [vmem:[%s3 + $0x48] sm:$0xff]
  %v1398 = vld [vmem:[%s3 + $0x50] sm:$0xff]
  %v1399 = vld [vmem:[%s3 + $0x58] sm:$0xff]
  %v1400 = vld [vmem:[%s3 + $0x60] sm:$0xff]
  %v1401 = vld [vmem:[%s3 + $0x68] sm:$0xff]
  %v1402 = vld [vmem:[%s3 + $0x70] sm:$0xff]
  %v1403 = vld [vmem:[%s3 + $0x78] sm:$0xff]
  %1404 = vmatprep.subr.mxu0 0.0
  %1405 = vmatpush1.msra.mxu0 %v1388
  %1406 = vmatprep.subr.mxu0 0.0
  %1407 = vmatpush1.msra.mxu0 %v1389
  %1408 = vmatprep.subr.mxu0 0.0
  %1409 = vmatpush1.msra.mxu0 %v1390
  %1410 = vmatprep.subr.mxu0 0.0
  %1411 = vmatpush1.msra.mxu0 %v1391
  %1412 = vmatprep.subr.mxu0 0.0
  %1413 = vmatpush1.msra.mxu0 %v1392
  %1414 = vmatprep.subr.mxu0 0.0
  %1415 = vmatpush1.msra.mxu0 %v1393
  %1416 = vmatprep.subr.mxu0 0.0
  %1417 = vmatpush1.msra.mxu0 %v1394
  %1418 = vmatprep.subr.mxu0 0.0
  %1419 = vmatpush1.msra.mxu0 %v1395
  %1420 = vmatprep.subr.mxu0 0.0
  %1421 = vmatpush1.msra.mxu0 %v1396
  %1422 = vmatprep.subr.mxu0 0.0
  %1423 = vmatpush1.msra.mxu0 %v1397
  %1424 = vmatprep.subr.mxu0 0.0
  %1425 = vmatpush1.msra.mxu0 %v1398
  %1426 = vmatprep.subr.mxu0 0.0
  %1427 = vmatpush1.msra.mxu0 %v1399
  %1428 = vmatprep.subr.mxu0 0.0
  %1429 = vmatpush1.msra.mxu0 %v1400
  %1430 = vmatprep.subr.mxu0 0.0
  %1431 = vmatpush1.msra.mxu0 %v1401
  %1432 = vmatprep.subr.mxu0 0.0
  %1433 = vmatpush1.msra.mxu0 %v1402
  %1434 = vmatprep.subr.mxu0 0.0
  %1435 = vmatpush1.msra.mxu0 %v1403
  %1436 = vmatprep.subr.mxu0 0.0
  %1437 = vmatpush1.msra.mxu0 0.0
  %1438 = vmatprep.subr.mxu0 0.0
  %1439 = vmatpush1.msra.mxu0 0.0
  %1440 = vmatprep.subr.mxu0 0.0
  %1441 = vmatpush1.msra.mxu0 0.0
  %1442 = vmatprep.subr.mxu0 0.0
  %1443 = vmatpush1.msra.mxu0 0.0
  %1444 = vmatprep.subr.mxu0 0.0
  %1445 = vmatpush1.msra.mxu0 0.0
  %1446 = vmatprep.subr.mxu0 0.0
  %1447 = vmatpush1.msra.mxu0 0.0
  %1448 = vmatprep.subr.mxu0 0.0
  %1449 = vmatpush1.msra.mxu0 0.0
  %1450 = vmatprep.subr.mxu0 0.0
  %1451 = vmatpush1.msra.mxu0 0.0
  %1452 = vmatprep.subr.mxu0 0.0
  %1453 = vmatpush1.msra.mxu0 0.0
  %1454 = vmatprep.subr.mxu0 0.0
  %1455 = vmatpush1.msra.mxu0 0.0
  %1456 = vmatprep.subr.mxu0 0.0
  %1457 = vmatpush1.msra.mxu0 0.0
  %1458 = vmatprep.subr.mxu0 0.0
  %1459 = vmatpush1.msra.mxu0 0.0
  %1460 = vmatprep.subr.mxu0 0.0
  %1461 = vmatpush1.msra.mxu0 0.0
  %1462 = vmatprep.subr.mxu0 0.0
  %1463 = vmatpush1.msra.mxu0 0.0
  %1464 = vmatprep.subr.mxu0 0.0
  %1465 = vmatpush1.msra.mxu0 0.0
  %1466 = vmatprep.subr.mxu0 0.0
  %1467 = vmatpush1.msra.mxu0 0.0
  %1468 = vmatprep.mubr.f32.mxu0 0.0
  %1469 = vmatmul.mubr.f32.gmra.mrb[0].mxu0 %v1386
  %v1470 = vpop.f32.mrb[0].mxu0
  %v1471 = vadd.f32 0.0, %v1470
  %v1472 = vpop.f32.mrb[0].mxu0
  %1473 = vmatprep.mubr.f32.mxu0 0.0
  %1474 = vmatmul.mubr.f32.gmra.mrb[0].mxu0 %v1387
  %v1475 = vpop.f32.mrb[0].mxu0
  %v1476 = vadd.f32 0.0, %v1475
  %v1477 = vpop.f32.mrb[0].mxu0
  %1478 = vdwg.mxu0
  %v1479 = vadd.f32 %v1378, %v1471
  %v1480 = vadd.f32 %v1383, %v1476
  %v1481 = vld [vmem:[%s7] sm:$0x1]
  %v1483 = vlaneseq
  %v1484 = vshrl.u32 %v1483, 7
  %v1485 = vsub.s32 0, %v1484
  %v1486 = vrot.slane %v1481, %v1485
  %v1488 = vadd.f32 %v1479, %v1486
  %v1489 = vadd.f32 %v1480, %v1486
  %v1490 = vmax.f32 %v1488, 0.0
  %v1491 = vmax.f32 %v1489, 0.0
  %1492 = vst [vmem:[#allocation2 + $0x1] sm:$0xff] %v1490
  %1493 = vst [vmem:[#allocation2 + $0x9] sm:$0xff] %v1491
  %v1494 = vld [vmem:[#allocation2] sm:$0xff]
  %v1495 = vld [vmem:[#allocation2 + $0x8] sm:$0xff]
  %v1496 = vld [vmem:[%s4] sm:$0xff]
  %v1497 = vld [vmem:[%s4 + $0x8] sm:$0xff]
  %v1498 = vld [vmem:[%s4 + $0x10] sm:$0xff]
  %v1499 = vld [vmem:[%s4 + $0x18] sm:$0xff]
  %v1500 = vld [vmem:[%s4 + $0x20] sm:$0xff]
  %v1501 = vld [vmem:[%s4 + $0x28] sm:$0xff]
  %v1502 = vld [vmem:[%s4 + $0x30] sm:$0xff]
  %v1503 = vld [vmem:[%s4 + $0x38] sm:$0xff]
  %v1504 = vld [vmem:[%s4 + $0x40] sm:$0xff]
  %v1505 = vld [vmem:[%s4 + $0x48] sm:$0xff]
  %v1506 = vld [vmem:[%s4 + $0x50] sm:$0xff]
  %v1507 = vld [vmem:[%s4 + $0x58] sm:$0xff]
  %v1508 = vld [vmem:[%s4 + $0x60] sm:$0xff]
  %v1509 = vld [vmem:[%s4 + $0x68] sm:$0xff]
  %v1510 = vld [vmem:[%s4 + $0x70] sm:$0xff]
  %v1511 = vld [vmem:[%s4 + $0x78] sm:$0xff]
  %v1512 = vld [vmem:[#allocation2 + $0x1] sm:$0xff]
  %v1513 = vld [vmem:[#allocation2 + $0x9] sm:$0xff]
  %v1514 = vld [vmem:[%s5] sm:$0xff]
  %v1515 = vld [vmem:[%s5 + $0x8] sm:$0xff]
  %v1516 = vld [vmem:[%s5 + $0x10] sm:$0xff]
  %v1517 = vld [vmem:[%s5 + $0x18] sm:$0xff]
  %v1518 = vld [vmem:[%s5 + $0x20] sm:$0xff]
  %v1519 = vld [vmem:[%s5 + $0x28] sm:$0xff]
  %v1520 = vld [vmem:[%s5 + $0x30] sm:$0xff]
  %v1521 = vld [vmem:[%s5 + $0x38] sm:$0xff]
  %v1522 = vld [vmem:[%s5 + $0x40] sm:$0xff]
  %v1523 = vld [vmem:[%s5 + $0x48] sm:$0xff]
  %v1524 = vld [vmem:[%s5 + $0x50] sm:$0xff]
  %v1525 = vld [vmem:[%s5 + $0x58] sm:$0xff]
  %v1526 = vld [vmem:[%s5 + $0x60] sm:$0xff]
  %v1527 = vld [vmem:[%s5 + $0x68] sm:$0xff]
  %v1528 = vld [vmem:[%s5 + $0x70] sm:$0xff]
  %v1529 = vld [vmem:[%s5 + $0x78] sm:$0xff]
  %1530 = vmatprep.subr.mxu0 0.0
  %1531 = vmatpush1.msra.mxu0 %v1514
  %1532 = vmatprep.subr.mxu0 0.0
  %1533 = vmatpush1.msra.mxu0 %v1515
  %1534 = vmatprep.subr.mxu0 0.0
  %1535 = vmatpush1.msra.mxu0 %v1516
  %1536 = vmatprep.subr.mxu0 0.0
  %1537 = vmatpush1.msra.mxu0 %v1517
  %1538 = vmatprep.subr.mxu0 0.0
  %1539 = vmatpush1.msra.mxu0 %v1518
  %1540 = vmatprep.subr.mxu0 0.0
  %1541 = vmatpush1.msra.mxu0 %v1519
  %1542 = vmatprep.subr.mxu0 0.0
  %1543 = vmatpush1.msra.mxu0 %v1520
  %1544 = vmatprep.subr.mxu0 0.0
  %1545 = vmatpush1.msra.mxu0 %v1521
  %1546 = vmatprep.subr.mxu0 0.0
  %1547 = vmatpush1.msra.mxu0 %v1522
  %1548 = vmatprep.subr.mxu0 0.0
  %1549 = vmatpush1.msra.mxu0 %v1523
  %1550 = vmatprep.subr.mxu0 0.0
  %1551 = vmatpush1.msra.mxu0 %v1524
  %1552 = vmatprep.subr.mxu0 0.0
  %1553 = vmatpush1.msra.mxu0 %v1525
  %1554 = vmatprep.subr.mxu0 0.0
  %1555 = vmatpush1.msra.mxu0 %v1526
  %1556 = vmatprep.subr.mxu0 0.0
  %1557 = vmatpush1.msra.mxu0 %v1527
  %1558 = vmatprep.subr.mxu0 0.0
  %1559 = vmatpush1.msra.mxu0 %v1528
  %1560 = vmatprep.subr.mxu0 0.0
  %1561 = vmatpush1.msra.mxu0 %v1529
  %1562 = vmatprep.subr.mxu0 0.0
  %1563 = vmatpush1.msra.mxu0 0.0
  %1564 = vmatprep.subr.mxu0 0.0
  %1565 = vmatpush1.msra.mxu0 0.0
  %1566 = vmatprep.subr.mxu0 0.0
  %1567 = vmatpush1.msra.mxu0 0.0
  %1568 = vmatprep.subr.mxu0 0.0
  %1569 = vmatpush1.msra.mxu0 0.0
  %1570 = vmatprep.subr.mxu0 0.0
  %1571 = vmatpush1.msra.mxu0 0.0
  %1572 = vmatprep.subr.mxu0 0.0
  %1573 = vmatpush1.msra.mxu0 0.0
  %1574 = vmatprep.subr.mxu0 0.0
  %1575 = vmatpush1.msra.mxu0 0.0
  %1576 = vmatprep.subr.mxu0 0.0
  %1577 = vmatpush1.msra.mxu0 0.0
  %1578 = vmatprep.subr.mxu0 0.0
  %1579 = vmatpush1.msra.mxu0 0.0
  %1580 = vmatprep.subr.mxu0 0.0
  %1581 = vmatpush1.msra.mxu0 0.0
  %1582 = vmatprep.subr.mxu0 0.0
  %1583 = vmatpush1.msra.mxu0 0.0
  %1584 = vmatprep.subr.mxu0 0.0
  %1585 = vmatpush1.msra.mxu0 0.0
  %1586 = vmatprep.subr.mxu0 0.0
  %1587 = vmatpush1.msra.mxu0 0.0
  %1588 = vmatprep.subr.mxu0 0.0
  %1589 = vmatpush1.msra.mxu0 0.0
  %1590 = vmatprep.subr.mxu0 0.0
  %1591 = vmatpush1.msra.mxu0 0.0
  %1592 = vmatprep.subr.mxu0 0.0
  %1593 = vmatpush1.msra.mxu0 0.0
  %1594 = vmatprep.mubr.f32.mxu0 0.0
  %1595 = vmatmul.mubr.f32.gmra.mrb[0].mxu0 %v1512
  %v1596 = vpop.f32.mrb[0].mxu0
  %v1597 = vadd.f32 0.0, %v1596
  %v1598 = vpop.f32.mrb[0].mxu0
  %1599 = vmatprep.mubr.f32.mxu0 0.0
  %1600 = vmatmul.mubr.f32.gmra.mrb[0].mxu0 %v1513
  %v1601 = vpop.f32.mrb[0].mxu0
  %v1602 = vadd.f32 0.0, %v1601
  %v1603 = vpop.f32.mrb[0].mxu0
  %1604 = vdwg.mxu0
  %1605 = vmatprep.subr.mxu0 0.0
  %1606 = vmatpush1.msra.mxu0 %v1496
  %1607 = vmatprep.subr.mxu0 0.0
  %1608 = vmatpush1.msra.mxu0 %v1497
  %1609 = vmatprep.subr.mxu0 0.0
  %1610 = vmatpush1.msra.mxu0 %v1498
  %1611 = vmatprep.subr.mxu0 0.0
  %1612 = vmatpush1.msra.mxu0 %v1499
  %1613 = vmatprep.subr.mxu0 0.0
  %1614 = vmatpush1.msra.mxu0 %v1500
  %1615 = vmatprep.subr.mxu0 0.0
  %1616 = vmatpush1.msra.mxu0 %v1501
  %1617 = vmatprep.subr.mxu0 0.0
  %1618 = vmatpush1.msra.mxu0 %v1502
  %1619 = vmatprep.subr.mxu0 0.0
  %1620 = vmatpush1.msra.mxu0 %v1503
  %1621 = vmatprep.subr.mxu0 0.0
  %1622 = vmatpush1.msra.mxu0 %v1504
  %1623 = vmatprep.subr.mxu0 0.0
  %1624 = vmatpush1.msra.mxu0 %v1505
  %1625 = vmatprep.subr.mxu0 0.0
  %1626 = vmatpush1.msra.mxu0 %v1506
  %1627 = vmatprep.subr.mxu0 0.0
  %1628 = vmatpush1.msra.mxu0 %v1507
  %1629 = vmatprep.subr.mxu0 0.0
  %1630 = vmatpush1.msra.mxu0 %v1508
  %1631 = vmatprep.subr.mxu0 0.0
  %1632 = vmatpush1.msra.mxu0 %v1509
  %1633 = vmatprep.subr.mxu0 0.0
  %1634 = vmatpush1.msra.mxu0 %v1510
  %1635 = vmatprep.subr.mxu0 0.0
  %1636 = vmatpush1.msra.mxu0 %v1511
  %1637 = vmatprep.subr.mxu0 0.0
  %1638 = vmatpush1.msra.mxu0 0.0
  %1639 = vmatprep.subr.mxu0 0.0
  %1640 = vmatpush1.msra.mxu0 0.0
  %1641 = vmatprep.subr.mxu0 0.0
  %1642 = vmatpush1.msra.mxu0 0.0
  %1643 = vmatprep.subr.mxu0 0.0
  %1644 = vmatpush1.msra.mxu0 0.0
  %1645 = vmatprep.subr.mxu0 0.0
  %1646 = vmatpush1.msra.mxu0 0.0
  %1647 = vmatprep.subr.mxu0 0.0
  %1648 = vmatpush1.msra.mxu0 0.0
  %1649 = vmatprep.subr.mxu0 0.0
  %1650 = vmatpush1.msra.mxu0 0.0
  %1651 = vmatprep.subr.mxu0 0.0
  %1652 = vmatpush1.msra.mxu0 0.0
  %1653 = vmatprep.subr.mxu0 0.0
  %1654 = vmatpush1.msra.mxu0 0.0
  %1655 = vmatprep.subr.mxu0 0.0
  %1656 = vmatpush1.msra.mxu0 0.0
  %1657 = vmatprep.subr.mxu0 0.0
  %1658 = vmatpush1.msra.mxu0 0.0
  %1659 = vmatprep.subr.mxu0 0.0
  %1660 = vmatpush1.msra.mxu0 0.0
  %1661 = vmatprep.subr.mxu0 0.0
  %1662 = vmatpush1.msra.mxu0 0.0
  %1663 = vmatprep.subr.mxu0 0.0
  %1664 = vmatpush1.msra.mxu0 0.0
  %1665 = vmatprep.subr.mxu0 0.0
  %1666 = vmatpush1.msra.mxu0 0.0
  %1667 = vmatprep.subr.mxu0 0.0
  %1668 = vmatpush1.msra.mxu0 0.0
  %1669 = vmatprep.mubr.f32.mxu0 0.0
  %1670 = vmatmul.mubr.f32.gmra.mrb[0].mxu0 %v1494
  %v1671 = vpop.f32.mrb[0].mxu0
  %v1672 = vadd.f32 %v1597, %v1671
  %v1673 = vpop.f32.mrb[0].mxu0
  %1674 = vmatprep.mubr.f32.mxu0 0.0
  %1675 = vmatmul.mubr.f32.gmra.mrb[0].mxu0 %v1495
  %v1676 = vpop.f32.mrb[0].mxu0
  %v1677 = vadd.f32 %v1602, %v1676
  %v1678 = vpop.f32.mrb[0].mxu0
  %1679 = vdwg.mxu0
  %v1680 = vld [vmem:[#allocation2 + $0x2] sm:$0xff]
  %v1681 = vld [vmem:[#allocation2 + $0xa] sm:$0xff]
  %v1682 = vld [vmem:[%s6] sm:$0xff]
  %v1683 = vld [vmem:[%s6 + $0x8] sm:$0xff]
  %v1684 = vld [vmem:[%s6 + $0x10] sm:$0xff]
  %v1685 = vld [vmem:[%s6 + $0x18] sm:$0xff]
  %v1686 = vld [vmem:[%s6 + $0x20] sm:$0xff]
  %v1687 = vld [vmem:[%s6 + $0x28] sm:$0xff]
  %v1688 = vld [vmem:[%s6 + $0x30] sm:$0xff]
  %v1689 = vld [vmem:[%s6 + $0x38] sm:$0xff]
  %v1690 = vld [vmem:[%s6 + $0x40] sm:$0xff]
  %v1691 = vld [vmem:[%s6 + $0x48] sm:$0xff]
  %v1692 = vld [vmem:[%s6 + $0x50] sm:$0xff]
  %v1693 = vld [vmem:[%s6 + $0x58] sm:$0xff]
  %v1694 = vld [vmem:[%s6 + $0x60] sm:$0xff]
  %v1695 = vld [vmem:[%s6 + $0x68] sm:$0xff]
  %v1696 = vld [vmem:[%s6 + $0x70] sm:$0xff]
  %v1697 = vld [vmem:[%s6 + $0x78] sm:$0xff]
  %1698 = vmatprep.subr.mxu0 0.0
  %1699 = vmatpush1.msra.mxu0 %v1682
  %1700 = vmatprep.subr.mxu0 0.0
  %1701 = vmatpush1.msra.mxu0 %v1683
  %1702 = vmatprep.subr.mxu0 0.0
  %1703 = vmatpush1.msra.mxu0 %v1684
  %1704 = vmatprep.subr.mxu0 0.0
  %1705 = vmatpush1.msra.mxu0 %v1685
  %1706 = vmatprep.subr.mxu0 0.0
  %1707 = vmatpush1.msra.mxu0 %v1686
  %1708 = vmatprep.subr.mxu0 0.0
  %1709 = vmatpush1.msra.mxu0 %v1687
  %1710 = vmatprep.subr.mxu0 0.0
  %1711 = vmatpush1.msra.mxu0 %v1688
  %1712 = vmatprep.subr.mxu0 0.0
  %1713 = vmatpush1.msra.mxu0 %v1689
  %1714 = vmatprep.subr.mxu0 0.0
  %1715 = vmatpush1.msra.mxu0 %v1690
  %1716 = vmatprep.subr.mxu0 0.0
  %1717 = vmatpush1.msra.mxu0 %v1691
  %1718 = vmatprep.subr.mxu0 0.0
  %1719 = vmatpush1.msra.mxu0 %v1692
  %1720 = vmatprep.subr.mxu0 0.0
  %1721 = vmatpush1.msra.mxu0 %v1693
  %1722 = vmatprep.subr.mxu0 0.0
  %1723 = vmatpush1.msra.mxu0 %v1694
  %1724 = vmatprep.subr.mxu0 0.0
  %1725 = vmatpush1.msra.mxu0 %v1695
  %1726 = vmatprep.subr.mxu0 0.0
  %1727 = vmatpush1.msra.mxu0 %v1696
  %1728 = vmatprep.subr.mxu0 0.0
  %1729 = vmatpush1.msra.mxu0 %v1697
  %1730 = vmatprep.subr.mxu0 0.0
  %1731 = vmatpush1.msra.mxu0 0.0
  %1732 = vmatprep.subr.mxu0 0.0
  %1733 = vmatpush1.msra.mxu0 0.0
  %1734 = vmatprep.subr.mxu0 0.0
  %1735 = vmatpush1.msra.mxu0 0.0
  %1736 = vmatprep.subr.mxu0 0.0
  %1737 = vmatpush1.msra.mxu0 0.0
  %1738 = vmatprep.subr.mxu0 0.0
  %1739 = vmatpush1.msra.mxu0 0.0
  %1740 = vmatprep.subr.mxu0 0.0
  %1741 = vmatpush1.msra.mxu0 0.0
  %1742 = vmatprep.subr.mxu0 0.0
  %1743 = vmatpush1.msra.mxu0 0.0
  %1744 = vmatprep.subr.mxu0 0.0
  %1745 = vmatpush1.msra.mxu0 0.0
  %1746 = vmatprep.subr.mxu0 0.0
  %1747 = vmatpush1.msra.mxu0 0.0
  %1748 = vmatprep.subr.mxu0 0.0
  %1749 = vmatpush1.msra.mxu0 0.0
  %1750 = vmatprep.subr.mxu0 0.0
  %1751 = vmatpush1.msra.mxu0 0.0
  %1752 = vmatprep.subr.mxu0 0.0
  %1753 = vmatpush1.msra.mxu0 0.0
  %1754 = vmatprep.subr.mxu0 0.0
  %1755 = vmatpush1.msra.mxu0 0.0
  %1756 = vmatprep.subr.mxu0 0.0
  %1757 = vmatpush1.msra.mxu0 0.0
  %1758 = vmatprep.subr.mxu0 0.0
  %1759 = vmatpush1.msra.mxu0 0.0
  %1760 = vmatprep.subr.mxu0 0.0
  %1761 = vmatpush1.msra.mxu0 0.0
  %1762 = vmatprep.mubr.f32.mxu0 0.0
  %1763 = vmatmul.mubr.f32.gmra.mrb[0].mxu0 %v1680
  %v1764 = vpop.f32.mrb[0].mxu0
  %v1765 = vadd.f32 0.0, %v1764
  %v1766 = vpop.f32.mrb[0].mxu0
  %1767 = vmatprep.mubr.f32.mxu0 0.0
  %1768 = vmatmul.mubr.f32.gmra.mrb[0].mxu0 %v1681
  %v1769 = vpop.f32.mrb[0].mxu0
  %v1770 = vadd.f32 0.0, %v1769
  %v1771 = vpop.f32.mrb[0].mxu0
  %1772 = vdwg.mxu0
  %v1773 = vadd.f32 %v1672, %v1765
  %v1774 = vadd.f32 %v1677, %v1770
  %v1775 = vld [vmem:[%s8] sm:$0x1]
  %v1777 = vlaneseq
  %v1778 = vshrl.u32 %v1777, 7
  %v1779 = vsub.s32 0, %v1778
  %v1780 = vrot.slane %v1775, %v1779
  %v1782 = vadd.f32 %v1773, %v1780
  %v1783 = vadd.f32 %v1774, %v1780
  %v1784 = vmul.f32 %v1782, %v1782
  %v1785 = vmul.f32 %v1783, %v1783
  %v1786 = vadd.f32 %v1782, %v1783
  %v1787 = vrot.slane %v1786, 4
  %v1788 = vadd.f32 %v1786, %v1787
  %v1789 = vrot.slane %v1788, 2
  %v1790 = vadd.f32 %v1788, %v1789
  %v1791 = vrot.slane %v1790, 1
  %v1792 = vadd.f32 %v1790, %v1791
  %v1793 = vadd.f32 %v1784, %v1785
  %v1794 = vrot.slane %v1793, 4
  %v1795 = vadd.f32 %v1793, %v1794
  %v1796 = vrot.slane %v1795, 2
  %v1797 = vadd.f32 %v1795, %v1796
  %v1798 = vrot.slane %v1797, 1
  %v1799 = vadd.f32 %v1797, %v1798
  %v1800 = vsel %vm647, %v1792, %v1799
  %1802 = vrot.lane.b32.xlu0 %v1800, 120
  %v1803 = vpop.permute.xlu0 %1802
  %1805 = vrot.lane.b32.xlu0 %v1800, 112
  %v1806 = vpop.permute.xlu0 %1805
  %1808 = vrot.lane.b32.xlu0 %v1800, 104
  %v1809 = vpop.permute.xlu0 %1808
  %1811 = vrot.lane.b32.xlu0 %v1800, 96
  %v1812 = vpop.permute.xlu0 %1811
  %1814 = vrot.lane.b32.xlu0 %v1800, 88
  %v1815 = vpop.permute.xlu0 %1814
  %1817 = vrot.lane.b32.xlu0 %v1800, 80
  %v1818 = vpop.permute.xlu0 %1817
  %1820 = vrot.lane.b32.xlu0 %v1800, 72
  %v1821 = vpop.permute.xlu0 %1820
  %1823 = vrot.lane.b32.xlu0 %v1800, 64
  %v1824 = vpop.permute.xlu0 %1823
  %1826 = vrot.lane.b32.xlu0 %v1800, 56
  %v1827 = vpop.permute.xlu0 %1826
  %1829 = vrot.lane.b32.xlu0 %v1800, 48
  %v1830 = vpop.permute.xlu0 %1829
  %1832 = vrot.lane.b32.xlu0 %v1800, 40
  %v1833 = vpop.permute.xlu0 %1832
  %1835 = vrot.lane.b32.xlu0 %v1800, 32
  %v1836 = vpop.permute.xlu0 %1835
  %1838 = vrot.lane.b32.xlu0 %v1800, 24
  %v1839 = vpop.permute.xlu0 %1838
  %1841 = vrot.lane.b32.xlu0 %v1800, 16
  %v1842 = vpop.permute.xlu0 %1841
  %1844 = vrot.lane.b32.xlu0 %v1800, 8
  %v1845 = vpop.permute.xlu0 %1844
  %v1847 = vcombine.low %v1800, %v1806
  %v1849 = vunpack.c.l.s4 1983009808
  %v1850 = vunpack.c.0.s8 %v1849
  %v1851 = vlaneseq
  %v1852 = vshrl.u32 %v1851, 7
  %v1853 = vsub.s32 %v1850, %v1852
  %v1854 = vrot.slane %v1847, %v1853
  %v1855 = vcombine.low %v1803, %v1809
  %v1857 = vunpack.c.l.s4 1983009808
  %v1858 = vunpack.c.0.s8 %v1857
  %v1859 = vlaneseq
  %v1860 = vshrl.u32 %v1859, 7
  %v1861 = vsub.s32 %v1858, %v1860
  %v1862 = vrot.slane %v1855, %v1861
  %v1863 = vcombine.low %v1812, %v1818
  %v1865 = vunpack.c.l.s4 1983009808
  %v1866 = vunpack.c.0.s8 %v1865
  %v1867 = vlaneseq
  %v1868 = vshrl.u32 %v1867, 7
  %v1869 = vsub.s32 %v1866, %v1868
  %v1870 = vrot.slane %v1863, %v1869
  %v1871 = vcombine.low %v1815, %v1821
  %v1873 = vunpack.c.l.s4 1983009808
  %v1874 = vunpack.c.0.s8 %v1873
  %v1875 = vlaneseq
  %v1876 = vshrl.u32 %v1875, 7
  %v1877 = vsub.s32 %v1874, %v1876
  %v1878 = vrot.slane %v1871, %v1877
  %v1879 = vcombine.low %v1854, %v1862
  %v1881 = vunpack.c.l.s4 1934713408
  %v1882 = vunpack.c.0.s8 %v1881
  %v1883 = vlaneseq
  %v1884 = vshrl.u32 %v1883, 7
  %v1885 = vsub.s32 %v1882, %v1884
  %v1886 = vrot.slane %v1879, %v1885
  %v1887 = vcombine.low %v1870, %v1878
  %v1889 = vunpack.c.l.s4 1934713408
  %v1890 = vunpack.c.0.s8 %v1889
  %v1891 = vlaneseq
  %v1892 = vshrl.u32 %v1891, 7
  %v1893 = vsub.s32 %v1890, %v1892
  %v1894 = vrot.slane %v1887, %v1893
  %v1895 = vcombine.low %v1886, %v1894
  %v1896 = vcombine.high %v1886, %v1894
  %v1897 = vcombine.low %v1824, %v1830
  %v1899 = vunpack.c.l.s4 1983009808
  %v1900 = vunpack.c.0.s8 %v1899
  %v1901 = vlaneseq
  %v1902 = vshrl.u32 %v1901, 7
  %v1903 = vsub.s32 %v1900, %v1902
  %v1904 = vrot.slane %v1897, %v1903
  %v1905 = vcombine.low %v1827, %v1833
  %v1907 = vunpack.c.l.s4 1983009808
  %v1908 = vunpack.c.0.s8 %v1907
  %v1909 = vlaneseq
  %v1910 = vshrl.u32 %v1909, 7
  %v1911 = vsub.s32 %v1908, %v1910
  %v1912 = vrot.slane %v1905, %v1911
  %v1913 = vcombine.low %v1836, %v1842
  %v1915 = vunpack.c.l.s4 1983009808
  %v1916 = vunpack.c.0.s8 %v1915
  %v1917 = vlaneseq
  %v1918 = vshrl.u32 %v1917, 7
  %v1919 = vsub.s32 %v1916, %v1918
  %v1920 = vrot.slane %v1913, %v1919
  %v1921 = vcombine.low %v1839, %v1845
  %v1923 = vunpack.c.l.s4 1983009808
  %v1924 = vunpack.c.0.s8 %v1923
  %v1925 = vlaneseq
  %v1926 = vshrl.u32 %v1925, 7
  %v1927 = vsub.s32 %v1924, %v1926
  %v1928 = vrot.slane %v1921, %v1927
  %v1929 = vcombine.low %v1904, %v1912
  %v1931 = vunpack.c.l.s4 1934713408
  %v1932 = vunpack.c.0.s8 %v1931
  %v1933 = vlaneseq
  %v1934 = vshrl.u32 %v1933, 7
  %v1935 = vsub.s32 %v1932, %v1934
  %v1936 = vrot.slane %v1929, %v1935
  %v1937 = vcombine.low %v1920, %v1928
  %v1939 = vunpack.c.l.s4 1934713408
  %v1940 = vunpack.c.0.s8 %v1939
  %v1941 = vlaneseq
  %v1942 = vshrl.u32 %v1941, 7
  %v1943 = vsub.s32 %v1940, %v1942
  %v1944 = vrot.slane %v1937, %v1943
  %v1945 = vcombine.low %v1936, %v1944
  %v1946 = vcombine.high %v1936, %v1944
  %v1947 = vsel %vm795, %v1895, 0.0
  %v1948 = vsel %vm795, %v1945, 0.0
  %v1949 = vadd.f32 %v1947, %v1948
  %v1950 = vrot.slane %v1949, 4
  %v1951 = vadd.f32 %v1949, %v1950
  %v1952 = vrot.slane %v1951, 2
  %v1953 = vadd.f32 %v1951, %v1952
  %v1954 = vrot.slane %v1953, 1
  %v1955 = vadd.f32 %v1953, %v1954
  %v1956 = vsel %vm795, %v1896, 0.0
  %v1957 = vsel %vm795, %v1946, 0.0
  %v1958 = vadd.f32 %v1956, %v1957
  %v1959 = vrot.slane %v1958, 4
  %v1960 = vadd.f32 %v1958, %v1959
  %v1961 = vrot.slane %v1960, 2
  %v1962 = vadd.f32 %v1960, %v1961
  %v1963 = vrot.slane %v1962, 1
  %v1964 = vadd.f32 %v1962, %v1963
  %1965 = vadd.xlane.f32.xlu0 %v1947
  %v1966 = vpop.xlane.xlu0 %1965
  %1967 = vadd.xlane.f32.xlu0 %v1948
  %v1968 = vpop.xlane.xlu0 %1967
  %1969 = vadd.xlane.f32.xlu0 %v1956
  %v1970 = vpop.xlane.xlu0 %1969
  %1971 = vadd.xlane.f32.xlu0 %v1957
  %v1972 = vpop.xlane.xlu0 %1971
  %v1973 = vmul.f32 %v1955, 0.00390625
  %v1974 = vmul.f32 %v1955, %v1973
  %v1975 = vsub.f32 %v1964, %v1974
  %v1976 = vmul.f32 %v1975, 0.003921569
  %v1977 = vmul.f32 %v1966, 0.0078125
  %v1978 = vmul.f32 %v1968, 0.0078125
  %v1979 = vmul.f32 %v1966, %v1977
  %v1980 = vmul.f32 %v1968, %v1978
  %v1981 = vsub.f32 %v1970, %v1979
  %v1982 = vsub.f32 %v1972, %v1980
  %v1983 = vmul.f32 %v1981, 0.007874016
  %v1984 = vmul.f32 %v1982, 0.007874016
  %v1987 = vlaneseq
  %v1988 = vshrl.u32 %v1987, 7
  %v1989 = vsub.s32 %v838, %v1988
  %v1990 = vrot.slane %v1977, %v1989
  %v1991 = vlaneseq
  %v1992 = vshrl.u32 %v1991, 7
  %v1993 = vsub.s32 %v843, %v1992
  %v1994 = vrot.slane %v1978, %v1993
  %v1995 = vsel %vm848, %v1994, %v1990
  %v1997 = vsel %vm795, %v1973, %v1995
  %v2000 = vlaneseq
  %v2001 = vshrl.u32 %v2000, 7
  %v2002 = vsub.s32 %v838, %v2001
  %v2003 = vrot.slane %v1983, %v2002
  %v2004 = vlaneseq
  %v2005 = vshrl.u32 %v2004, 7
  %v2006 = vsub.s32 %v843, %v2005
  %v2007 = vrot.slane %v1984, %v2006
  %v2008 = vsel %vm848, %v2007, %v2003
  %v2010 = vsel %vm795, %v1976, %v2008
  %v2011 = vmax.f32 %v2010, 0.0
  %v2012 = vrsqrt.pop %v2011
  %v2013 = vmul.f32 %v2011, %v2012
  %vm2014 = vcmp.eq.f32.partialorder %v2011, inf
  %v2015 = vsel %vm2014, %v2011, %v2013
  %vm2016 = vcmp.eq.f32.partialorder %v2011, 0.0
  %v2017 = vand.u32 %v2011, 2147483648
  %v2018 = vsel %vm2016, %v2017, %v2015
  %2019 = vadd.xlane.f32.xlu0 %v1782
  %v2020 = vpop.xlane.xlu0 %2019
  %2021 = vadd.xlane.f32.xlu0 %v1783
  %v2022 = vpop.xlane.xlu0 %2021
  %2023 = vadd.xlane.f32.xlu0 %v1784
  %v2024 = vpop.xlane.xlu0 %2023
  %2025 = vadd.xlane.f32.xlu0 %v1785
  %v2026 = vpop.xlane.xlu0 %2025
  %v2027 = vmul.f32 %v2020, 0.0078125
  %v2028 = vmul.f32 %v2022, 0.0078125
  %v2029 = vmul.f32 %v2020, %v2027
  %v2030 = vmul.f32 %v2022, %v2028
  %v2031 = vsub.f32 %v2024, %v2029
  %v2032 = vsub.f32 %v2026, %v2030
  %v2033 = vmul.f32 %v2031, 0.007874016
  %v2034 = vmul.f32 %v2032, 0.007874016
  %v2035 = vmax.f32 %v2033, 0.0
  %v2036 = vmax.f32 %v2034, 0.0
  %v2037 = vrsqrt.pop %v2035
  %v2038 = vmul.f32 %v2035, %v2037
  %vm2039 = vcmp.eq.f32.partialorder %v2035, inf
  %v2040 = vsel %vm2039, %v2035, %v2038
  %vm2041 = vcmp.eq.f32.partialorder %v2035, 0.0
  %v2042 = vand.u32 %v2035, 2147483648
  %v2043 = vsel %vm2041, %v2042, %v2040
  %v2044 = vrsqrt.pop %v2036
  %v2045 = vmul.f32 %v2036, %v2044
  %vm2046 = vcmp.eq.f32.partialorder %v2036, inf
  %v2047 = vsel %vm2046, %v2036, %v2045
  %vm2048 = vcmp.eq.f32.partialorder %v2036, 0.0
  %v2049 = vand.u32 %v2036, 2147483648
  %v2050 = vsel %vm2048, %v2049, %v2047
  %2052 = vrot.lane.b32.xlu0 %v2018, 24
  %v2053 = vpop.permute.xlu0 %2052
  %v2055 = vsel %vm909, %v1997, %v2053
  %v2056 = vld [vmem:[%s9] sm:$0xff]
  %v2057 = vld [vmem:[%s9 + $0x8] sm:$0xff]
  %v2058 = vld [vmem:[%s9 + $0x10] sm:$0xff]
  %v2059 = vld [vmem:[%s9 + $0x18] sm:$0xff]
  %v2060 = vld [vmem:[%s9 + $0x20] sm:$0xff]
  %v2061 = vld [vmem:[%s9 + $0x28] sm:$0xff]
  %v2063 = vsel %vm917, %v2055, 0
  %2065 = vmatprep.subr.mxu0 0.0
  %2066 = vmatpush1.msra.mxu0 %v2056
  %2067 = vmatprep.subr.mxu0 0.0
  %2068 = vmatpush1.msra.mxu0 %v2057
  %2069 = vmatprep.subr.mxu0 0.0
  %2070 = vmatpush1.msra.mxu0 %v2058
  %2071 = vmatprep.subr.mxu0 0.0
  %2072 = vmatpush1.msra.mxu0 %v2059
  %2073 = vmatprep.subr.mxu0 0.0
  %2074 = vmatpush1.msra.mxu0 %v2060
  %2075 = vmatprep.subr.mxu0 0.0
  %2076 = vmatpush1.msra.mxu0 %v2061
  %2077 = vmatprep.subr.mxu0 0.0
  %2078 = vmatpush1.msra.mxu0 0.0
  %2079 = vmatprep.subr.mxu0 0.0
  %2080 = vmatpush1.msra.mxu0 0.0
  %2081 = vmatprep.subr.mxu0 0.0
  %2082 = vmatpush1.msra.mxu0 0.0
  %2083 = vmatprep.subr.mxu0 0.0
  %2084 = vmatpush1.msra.mxu0 0.0
  %2085 = vmatprep.subr.mxu0 0.0
  %2086 = vmatpush1.msra.mxu0 0.0
  %2087 = vmatprep.subr.mxu0 0.0
  %2088 = vmatpush1.msra.mxu0 0.0
  %2089 = vmatprep.subr.mxu0 0.0
  %2090 = vmatpush1.msra.mxu0 0.0
  %2091 = vmatprep.subr.mxu0 0.0
  %2092 = vmatpush1.msra.mxu0 0.0
  %2093 = vmatprep.subr.mxu0 0.0
  %2094 = vmatpush1.msra.mxu0 0.0
  %2095 = vmatprep.subr.mxu0 0.0
  %2096 = vmatpush1.msra.mxu0 0.0
  %2097 = vmatprep.subr.mxu0 0.0
  %2098 = vmatpush1.msra.mxu0 0.0
  %2099 = vmatprep.subr.mxu0 0.0
  %2100 = vmatpush1.msra.mxu0 0.0
  %2101 = vmatprep.subr.mxu0 0.0
  %2102 = vmatpush1.msra.mxu0 0.0
  %2103 = vmatprep.subr.mxu0 0.0
  %2104 = vmatpush1.msra.mxu0 0.0
  %2105 = vmatprep.subr.mxu0 0.0
  %2106 = vmatpush1.msra.mxu0 0.0
  %2107 = vmatprep.subr.mxu0 0.0
  %2108 = vmatpush1.msra.mxu0 0.0
  %2109 = vmatprep.subr.mxu0 0.0
  %2110 = vmatpush1.msra.mxu0 0.0
  %2111 = vmatprep.subr.mxu0 0.0
  %2112 = vmatpush1.msra.mxu0 0.0
  %2113 = vmatprep.subr.mxu0 0.0
  %2114 = vmatpush1.msra.mxu0 0.0
  %2115 = vmatprep.subr.mxu0 0.0
  %2116 = vmatpush1.msra.mxu0 0.0
  %2117 = vmatprep.subr.mxu0 0.0
  %2118 = vmatpush1.msra.mxu0 0.0
  %2119 = vmatprep.subr.mxu0 0.0
  %2120 = vmatpush1.msra.mxu0 0.0
  %2121 = vmatprep.subr.mxu0 0.0
  %2122 = vmatpush1.msra.mxu0 0.0
  %2123 = vmatprep.subr.mxu0 0.0
  %2124 = vmatpush1.msra.mxu0 0.0
  %2125 = vmatprep.subr.mxu0 0.0
  %2126 = vmatpush1.msra.mxu0 0.0
  %2127 = vmatprep.subr.mxu0 0.0
  %2128 = vmatpush1.msra.mxu0 0.0
  %2129 = vmatprep.mubr.f32.mxu0 0.0
  %2130 = vmatmul.mubr.f32.gmra.mrb[0].mxu0 %v2063
  %v2131 = vpop.f32.mrb[0].mxu0
  %v2132 = vadd.f32 0.0, %v2131
  %v2133 = vpop.f32.mrb[0].mxu0
  %2134 = vdwg.mxu0
  %v2135 = vsub.f32 0.0, %v2132
  %v2136 = vmul.f32 %v2135, 1.442695
  %v2137 = vpow.pop %v2136
  %v2138 = vadd.f32 %v2137, 1.0
  %v2139 = vrcp.pop %v2138
  %v2140 = vmul.f32 1.0, %v2139
  %v2141 = vld [vmem:[%s10] sm:$0xff]
  %v2142 = vld [vmem:[%s10 + $0x8] sm:$0xff]
  %v2143 = vld [vmem:[%s10 + $0x10] sm:$0xff]
  %v2145 = vsel %vm909, %v2140, 0
  %2147 = vmatprep.subr.mxu0 0.0
  %2148 = vmatpush1.msra.mxu0 %v2141
  %2149 = vmatprep.subr.mxu0 0.0
  %2150 = vmatpush1.msra.mxu0 %v2142
  %2151 = vmatprep.subr.mxu0 0.0
  %2152 = vmatpush1.msra.mxu0 %v2143
  %2153 = vmatprep.subr.mxu0 0.0
  %2154 = vmatpush1.msra.mxu0 0.0
  %2155 = vmatprep.subr.mxu0 0.0
  %2156 = vmatpush1.msra.mxu0 0.0
  %2157 = vmatprep.subr.mxu0 0.0
  %2158 = vmatpush1.msra.mxu0 0.0
  %2159 = vmatprep.subr.mxu0 0.0
  %2160 = vmatpush1.msra.mxu0 0.0
  %2161 = vmatprep.subr.mxu0 0.0
  %2162 = vmatpush1.msra.mxu0 0.0
  %2163 = vmatprep.subr.mxu0 0.0
  %2164 = vmatpush1.msra.mxu0 0.0
  %2165 = vmatprep.subr.mxu0 0.0
  %2166 = vmatpush1.msra.mxu0 0.0
  %2167 = vmatprep.subr.mxu0 0.0
  %2168 = vmatpush1.msra.mxu0 0.0
  %2169 = vmatprep.subr.mxu0 0.0
  %2170 = vmatpush1.msra.mxu0 0.0
  %2171 = vmatprep.subr.mxu0 0.0
  %2172 = vmatpush1.msra.mxu0 0.0
  %2173 = vmatprep.subr.mxu0 0.0
  %2174 = vmatpush1.msra.mxu0 0.0
  %2175 = vmatprep.subr.mxu0 0.0
  %2176 = vmatpush1.msra.mxu0 0.0
  %2177 = vmatprep.subr.mxu0 0.0
  %2178 = vmatpush1.msra.mxu0 0.0
  %2179 = vmatprep.subr.mxu0 0.0
  %2180 = vmatpush1.msra.mxu0 0.0
  %2181 = vmatprep.subr.mxu0 0.0
  %2182 = vmatpush1.msra.mxu0 0.0
  %2183 = vmatprep.subr.mxu0 0.0
  %2184 = vmatpush1.msra.mxu0 0.0
  %2185 = vmatprep.subr.mxu0 0.0
  %2186 = vmatpush1.msra.mxu0 0.0
  %2187 = vmatprep.subr.mxu0 0.0
  %2188 = vmatpush1.msra.mxu0 0.0
  %2189 = vmatprep.subr.mxu0 0.0
  %2190 = vmatpush1.msra.mxu0 0.0
  %2191 = vmatprep.subr.mxu0 0.0
  %2192 = vmatpush1.msra.mxu0 0.0
  %2193 = vmatprep.subr.mxu0 0.0
  %2194 = vmatpush1.msra.mxu0 0.0
  %2195 = vmatprep.subr.mxu0 0.0
  %2196 = vmatpush1.msra.mxu0 0.0
  %2197 = vmatprep.subr.mxu0 0.0
  %2198 = vmatpush1.msra.mxu0 0.0
  %2199 = vmatprep.subr.mxu0 0.0
  %2200 = vmatpush1.msra.mxu0 0.0
  %2201 = vmatprep.subr.mxu0 0.0
  %2202 = vmatpush1.msra.mxu0 0.0
  %2203 = vmatprep.subr.mxu0 0.0
  %2204 = vmatpush1.msra.mxu0 0.0
  %2205 = vmatprep.subr.mxu0 0.0
  %2206 = vmatpush1.msra.mxu0 0.0
  %2207 = vmatprep.subr.mxu0 0.0
  %2208 = vmatpush1.msra.mxu0 0.0
  %2209 = vmatprep.subr.mxu0 0.0
  %2210 = vmatpush1.msra.mxu0 0.0
  %2211 = vmatprep.mubr.f32.mxu0 0.0
  %2212 = vmatmul.mubr.f32.gmra.mrb[0].mxu0 %v2145
  %v2213 = vpop.f32.mrb[0].mxu0
  %v2214 = vadd.f32 0.0, %v2213
  %v2215 = vpop.f32.mrb[0].mxu0
  %2216 = vdwg.mxu0
  %v2217 = vld [vmem:[%s11] sm:$0xff]
  %v2218 = vld [vmem:[%s11 + $0x8] sm:$0xff]
  %v2220 = vsel %vm1075, %v2217, 0
  %v2223 = vsel %vm1075, %v2218, 0
  %2225 = vmatprep.subr.mxu0 0.0
  %2226 = vmatpush1.msra.mxu0 %v2027
  %2227 = vmatprep.subr.mxu0 0.0
  %2228 = vmatpush1.msra.mxu0 %v2028
  %2229 = vmatprep.subr.mxu0 0.0
  %2230 = vmatpush1.msra.mxu0 %v2043
  %2231 = vmatprep.subr.mxu0 0.0
  %2232 = vmatpush1.msra.mxu0 %v2050
  %2233 = vmatprep.subr.mxu0 0.0
  %2234 = vmatpush1.msra.mxu0 0.0
  %2235 = vmatprep.subr.mxu0 0.0
  %2236 = vmatpush1.msra.mxu0 0.0
  %2237 = vmatprep.subr.mxu0 0.0
  %2238 = vmatpush1.msra.mxu0 0.0
  %2239 = vmatprep.subr.mxu0 0.0
  %2240 = vmatpush1.msra.mxu0 0.0
  %2241 = vmatprep.subr.mxu0 0.0
  %2242 = vmatpush1.msra.mxu0 0.0
  %2243 = vmatprep.subr.mxu0 0.0
  %2244 = vmatpush1.msra.mxu0 0.0
  %2245 = vmatprep.subr.mxu0 0.0
  %2246 = vmatpush1.msra.mxu0 0.0
  %2247 = vmatprep.subr.mxu0 0.0
  %2248 = vmatpush1.msra.mxu0 0.0
  %2249 = vmatprep.subr.mxu0 0.0
  %2250 = vmatpush1.msra.mxu0 0.0
  %2251 = vmatprep.subr.mxu0 0.0
  %2252 = vmatpush1.msra.mxu0 0.0
  %2253 = vmatprep.subr.mxu0 0.0
  %2254 = vmatpush1.msra.mxu0 0.0
  %2255 = vmatprep.subr.mxu0 0.0
  %2256 = vmatpush1.msra.mxu0 0.0
  %2257 = vmatprep.subr.mxu0 0.0
  %2258 = vmatpush1.msra.mxu0 0.0
  %2259 = vmatprep.subr.mxu0 0.0
  %2260 = vmatpush1.msra.mxu0 0.0
  %2261 = vmatprep.subr.mxu0 0.0
  %2262 = vmatpush1.msra.mxu0 0.0
  %2263 = vmatprep.subr.mxu0 0.0
  %2264 = vmatpush1.msra.mxu0 0.0
  %2265 = vmatprep.subr.mxu0 0.0
  %2266 = vmatpush1.msra.mxu0 0.0
  %2267 = vmatprep.subr.mxu0 0.0
  %2268 = vmatpush1.msra.mxu0 0.0
  %2269 = vmatprep.subr.mxu0 0.0
  %2270 = vmatpush1.msra.mxu0 0.0
  %2271 = vmatprep.subr.mxu0 0.0
  %2272 = vmatpush1.msra.mxu0 0.0
  %2273 = vmatprep.subr.mxu0 0.0
  %2274 = vmatpush1.msra.mxu0 0.0
  %2275 = vmatprep.subr.mxu0 0.0
  %2276 = vmatpush1.msra.mxu0 0.0
  %2277 = vmatprep.subr.mxu0 0.0
  %2278 = vmatpush1.msra.mxu0 0.0
  %2279 = vmatprep.subr.mxu0 0.0
  %2280 = vmatpush1.msra.mxu0 0.0
  %2281 = vmatprep.subr.mxu0 0.0
  %2282 = vmatpush1.msra.mxu0 0.0
  %2283 = vmatprep.subr.mxu0 0.0
  %2284 = vmatpush1.msra.mxu0 0.0
  %2285 = vmatprep.subr.mxu0 0.0
  %2286 = vmatpush1.msra.mxu0 0.0
  %2287 = vmatprep.subr.mxu0 0.0
  %2288 = vmatpush1.msra.mxu0 0.0
  %2289 = vmatprep.mubr.f32.mxu0 0.0
  %2290 = vmatmul.mubr.f32.gmra.mrb[0].mxu0 %v2220
  %v2291 = vpop.f32.mrb[0].mxu0
  %v2292 = vadd.f32 0.0, %v2291
  %v2293 = vpop.f32.mrb[0].mxu0
  %2294 = vmatprep.mubr.f32.mxu0 0.0
  %2295 = vmatmul.mubr.f32.gmra.mrb[0].mxu0 %v2223
  %v2296 = vpop.f32.mrb[0].mxu0
  %v2297 = vadd.f32 0.0, %v2296
  %v2298 = vpop.f32.mrb[0].mxu0
  %2299 = vdwg.mxu0
  %v2300 = vsub.f32 0.0, %v2292
  %v2301 = vsub.f32 0.0, %v2297
  %v2302 = vmul.f32 %v2300, 1.442695
  %v2303 = vpow.pop %v2302
  %v2304 = vmul.f32 %v2301, 1.442695
  %v2305 = vpow.pop %v2304
  %v2306 = vadd.f32 %v2303, 1.0
  %v2307 = vadd.f32 %v2305, 1.0
  %v2308 = vrcp.pop %v2306
  %v2309 = vmul.f32 1.0, %v2308
  %v2310 = vrcp.pop %v2307
  %v2311 = vmul.f32 1.0, %v2310
  %v2312 = vlaneseq
  %v2313 = vshrl.u32 %v2312, 7
  %v2314 = vsub.s32 0, %v2313
  %v2315 = vrot.slane %v2214, %v2314
  %2317 = vset.pattern.permute.xlu0 0
  %2318 = vperm.xlu0 %2317, %v2309
  %v2319 = vpop.permute.xlu0 %2318
  %2322 = vset.pattern.permute.xlu0 0
  %2323 = vperm.xlu0 %2322, %v2311
  %v2324 = vpop.permute.xlu0 %2323
  %v2326 = vadd.f32 %v2315, %v2319
  %v2327 = vadd.f32 %v2315, %v2324
  %v2328 = vmul.f32 %v2326, 0.33333334
  %v2329 = vmul.f32 %v2327, 0.33333334
  %v2330 = vmul.f32 %v1782, %v2328
  %v2331 = vmul.f32 %v1783, %v2329
  %v2332 = vadd.f32 %v2330, %v1196
  %v2333 = vadd.f32 %v2331, %v1197
  %v2334 = vmax.f32 %v2332, 0.0
  %v2335 = vmax.f32 %v2333, 0.0
  %s2336 = scalar_lea.vmem %s12, 16
  %2337 = vst [vmem:[%s2336] sm:$0xff] %v2334
  %2338 = vst [vmem:[%s2336 + $0x8] sm:$0xff] %v2335
  // Predicated region
  $region50: #{basic_block_forward.1} parent=0 // pred_check
    _
  $region51: #{basic_block_forward.1} parent=0 // pred_check_branch
    %2340 = sbr.rel (0) target = $region53
  $region52: #{basic_block_forward.1} parent=0 // pred_region
    _
  $region53: #{basic_block_forward.1} parent=0 // pred_fallthru
    _
  // Predicated region
  $region54: #{basic_block_forward.1} parent=0 // pred_check
    _
  $region55: #{basic_block_forward.1} parent=0 // pred_check_branch
    %2342 = sbr.rel (0) target = $region57
  $region56: #{basic_block_forward.1} parent=0 // pred_region
    _
  $region57: #{basic_block_forward.1} parent=0 // pred_fallthru
    _

</llo_original>
